<compile_context>
chip_gen: v7x
topology: tpu7x:2x2x1
jax: 0.10.0
libtpu: 0.0.40
codegen_flags: <defaults>
</compile_context>

<pallas_src>
import jax
import jax.numpy as jnp
from jax.experimental import pallas as pl
from jax.experimental.pallas import tpu as pltpu

NEG_SLOPE = 0.01        # PyTorch LeakyReLU default
N_RES = 4               # 4 residual blocks
IN_PAD = 8              # padded input feature width (raw is 5)
OUT_PAD = 128           # padded output head width (raw is 1)


def _leaky(x):
    return jnp.where(x > 0, x, NEG_SLOPE * x)


def _net_kernel(x_ref,
                we1_ref, be1_ref, we2_ref, be2_ref,
                wr_ref, br_ref,
                wp1_ref, bp1_ref, wp2_ref, bp2_ref,
                o_ref):
    # x tile: (tb, 8) f32 -> bf16 for the MXU
    x = x_ref[...].astype(jnp.bfloat16)

    # Fused encoders (block-diagonal bf16 weights), f32 accumulate + bias + leaky
    h = _leaky(jnp.dot(x, we1_ref[...], preferred_element_type=jnp.float32)
               + be1_ref[...])
    out1 = _leaky(jnp.dot(h.astype(jnp.bfloat16), we2_ref[...],
                          preferred_element_type=jnp.float32)
                  + be2_ref[...])

    # 4 x ResBlock128: y = leaky_relu(y + Linear(y)); static unroll keeps the
    # MXU pipeline full (each dot is (tb,128)x(128,128)).
    y = out1
    for i in range(N_RES):
        y = _leaky(y
                   + jnp.dot(y.astype(jnp.bfloat16), wr_ref[i],
                             preferred_element_type=jnp.float32)
                   + br_ref[i])

    # post_block on (out1 + res_out): Linear(128,64)->leaky->Linear(64,128pad)->leaky
    z = out1 + y
    h2 = _leaky(jnp.dot(z.astype(jnp.bfloat16), wp1_ref[...],
                        preferred_element_type=jnp.float32)
                + bp1_ref[...])
    out = _leaky(jnp.dot(h2.astype(jnp.bfloat16), wp2_ref[...],
                         preferred_element_type=jnp.float32)
                 + bp2_ref[...])
    o_ref[...] = out.astype(o_ref.dtype)


def neural_vis_forward(x, kernel_params, *, tb=256):
    """x: [B, 5] float32 -> [B, 1] float32."""
    B = x.shape[0]
    B_pad = ((B + tb - 1) // tb) * tb
    # pad batch to a tile multiple and features 5 -> IN_PAD
    x = jnp.pad(x, ((0, B_pad - B), (0, IN_PAD - x.shape[1])))

    (we1, be1, we2, be2, wr, br, wp1, bp1, wp2, bp2) = kernel_params

    def const_spec(arr):
        nd = arr.ndim
        return pl.BlockSpec(arr.shape, lambda i, _nd=nd: (0,) * _nd)

    grid = (B_pad // tb,)

    # advisory cost estimate (per padded row FLOPs of the fused network)
    flops_per_row = 2 * (IN_PAD * 64 + 64 * 128 + N_RES * 128 * 128
                         + 128 * 64 + 64 * OUT_PAD)
    weight_bytes = sum(int(a.size) * a.dtype.itemsize for a in kernel_params)
    cost = pl.CostEstimate(
        flops=int(B_pad) * flops_per_row,
        transcendentals=0,
        bytes_accessed=int(B_pad) * (IN_PAD * 4 + OUT_PAD * 4) + weight_bytes,
    )

    out = pl.pallas_call(
        _net_kernel,
        out_shape=jax.ShapeDtypeStruct((B_pad, OUT_PAD), jnp.float32),
        grid_spec=pltpu.PrefetchScalarGridSpec(
            num_scalar_prefetch=0,
            grid=grid,
            in_specs=[
                pl.BlockSpec((tb, IN_PAD), lambda i: (i, 0)),   # x tile
                const_spec(we1), const_spec(be1),
                const_spec(we2), const_spec(be2),
                const_spec(wr), const_spec(br),
                const_spec(wp1), const_spec(bp1),
                const_spec(wp2), const_spec(bp2),
            ],
            out_specs=pl.BlockSpec((tb, OUT_PAD), lambda i: (i, 0)),
        ),
        compiler_params=pltpu.CompilerParams(
            dimension_semantics=("parallel",)),
        cost_estimate=cost,
    )(x, we1, be1, we2, be2, wr, br, wp1, bp1, wp2, bp2)
    return out[:B, :1]


# ---------------------------------------------------------------------------
# Deterministic parameters (PyTorch-style uniform(-1/sqrt(fan_in))), raw layout
# ---------------------------------------------------------------------------
def _linear_init(key, fan_in, fan_out):
    kw, kb = jax.random.split(key)
    bound = 1.0 / jnp.sqrt(jnp.float32(fan_in))
    # weight stored [in, out] (transposed vs. PyTorch [out, in])
    w = jax.random.uniform(kw, (fan_in, fan_out), jnp.float32, -bound, bound)
    b = jax.random.uniform(kb, (fan_out,), jnp.float32, -bound, bound)
    return w, b


def make_params(seed=0):
    key = jax.random.PRNGKey(seed)
    keys = jax.random.split(key, 10)
    params = {
        "enc3_1": _linear_init(keys[0], 3, 32),
        "enc3_2": _linear_init(keys[1], 32, 64),
        "enc2_1": _linear_init(keys[2], 2, 32),
        "enc2_2": _linear_init(keys[3], 32, 64),
        "res": [_linear_init(keys[4 + i], 128, 128) for i in range(N_RES)],
        "post1": _linear_init(keys[8], 128, 64),
        "post2": _linear_init(keys[9], 64, 1),
    }
    return params


def pack_params(p):
    """Fuse encoders block-diagonally, pad the head, cast weights to bf16."""
    (w31, b31), (w32, b32) = p["enc3_1"], p["enc3_2"]
    (w21, b21), (w22, b22) = p["enc2_1"], p["enc2_2"]

    we1 = jnp.zeros((IN_PAD, 64), jnp.float32)
    we1 = we1.at[0:3, 0:32].set(w31).at[3:5, 32:64].set(w21)
    be1 = jnp.concatenate([b31, b21]).reshape(1, 64)

    we2 = jnp.zeros((64, 128), jnp.float32)
    we2 = we2.at[0:32, 0:64].set(w32).at[32:64, 64:128].set(w22)
    be2 = jnp.concatenate([b32, b22]).reshape(1, 128)

    wr = jnp.stack([w for (w, _) in p["res"]])                  # (4, 128, 128)
    br = jnp.stack([b.reshape(1, 128) for (_, b) in p["res"]])  # (4, 1, 128)

    wp1, bp1 = p["post1"]
    bp1 = bp1.reshape(1, 64)

    w2, b2 = p["post2"]
    wp2 = jnp.zeros((64, OUT_PAD), jnp.float32).at[:, 0:1].set(w2)
    bp2 = jnp.zeros((1, OUT_PAD), jnp.float32).at[:, 0:1].set(b2.reshape(1, 1))

    bf = jnp.bfloat16
    return (we1.astype(bf), be1, we2.astype(bf), be2,
            wr.astype(bf), br, wp1.astype(bf), bp1, wp2.astype(bf), bp2)


# ---------------------------------------------------------------------------
# Pure-JAX f32 reference mirroring the PyTorch forward exactly
# ---------------------------------------------------------------------------
def reference_forward(x, p):
    origin = x[:, 0:3]
    direction = x[:, 3:5]

    (w31, b31), (w32, b32) = p["enc3_1"], p["enc3_2"]
    (w21, b21), (w22, b22) = p["enc2_1"], p["enc2_2"]

    output1 = _leaky(_leaky(origin @ w31 + b31) @ w32 + b32)
    output2 = _leaky(_leaky(direction @ w21 + b21) @ w22 + b22)
    out1 = jnp.concatenate([output1, output2], axis=1)

    y = out1
    for (w, b) in p["res"]:
        y = _leaky(y + (y @ w + b))

    z = out1 + y
    (wp1, bp1), (wp2, bp2) = p["post1"], p["post2"]
    h2 = _leaky(z @ wp1 + bp1)
    return _leaky(h2 @ wp2 + bp2)


if __name__ == "__main__":
    raw_params = make_params(seed=0)
    kernel_params = pack_params(raw_params)

    # B not a multiple of tb -> exercises batch padding and a multi-step grid
    B = 600
    x = jax.random.normal(jax.random.PRNGKey(0), (B, 5), jnp.float32)

    out = neural_vis_forward(x, kernel_params, tb=256)
    out = jax.block_until_ready(out)

    ref = reference_forward(x, raw_params)
    assert out.shape == (B, 1), out.shape
    max_err = jnp.max(jnp.abs(out - ref))
    # bf16 matmul operands with f32 accumulation -> loosened tolerance
    assert jnp.allclose(out, ref, atol=3e-2, rtol=3e-2), f"max err {max_err}"

    print("KERNEL_OK")
</pallas_src>

<mosaic_0001>
module attributes {stable_mosaic.version = 11 : i64} {
  func.func @_net_kernel(%arg0: i32, %arg1: memref<256x8xf32, #tpu.memory_space<vmem>>, %arg2: memref<8x64xbf16, #tpu.memory_space<vmem>>, %arg3: memref<1x64xf32, #tpu.memory_space<vmem>>, %arg4: memref<64x128xbf16, #tpu.memory_space<vmem>>, %arg5: memref<1x128xf32, #tpu.memory_space<vmem>>, %arg6: memref<4x128x128xbf16, #tpu.memory_space<vmem>>, %arg7: memref<4x1x128xf32, #tpu.memory_space<vmem>>, %arg8: memref<128x64xbf16, #tpu.memory_space<vmem>>, %arg9: memref<1x64xf32, #tpu.memory_space<vmem>>, %arg10: memref<64x128xbf16, #tpu.memory_space<vmem>>, %arg11: memref<1x128xf32, #tpu.memory_space<vmem>>, %arg12: memref<256x128xf32, #tpu.memory_space<vmem>>) attributes {dimension_semantics = [#tpu.dimension_semantics<parallel>], iteration_bounds = array<i64: 3>, scalar_prefetch = 0 : i64, scratch_operands = 0 : i64, tpu.core_type = #tpu.core_type<tc>, window_params = [{transform_indices = @transform_0, window_bounds = array<i64: 256, 8>}, {pipeline_mode = #tpu.pipeline_mode<synchronous>, transform_indices = @transform_1, window_bounds = array<i64: 8, 64>}, {pipeline_mode = #tpu.pipeline_mode<synchronous>, transform_indices = @transform_2, window_bounds = array<i64: 1, 64>}, {pipeline_mode = #tpu.pipeline_mode<synchronous>, transform_indices = @transform_3, window_bounds = array<i64: 64, 128>}, {pipeline_mode = #tpu.pipeline_mode<synchronous>, transform_indices = @transform_4, window_bounds = array<i64: 1, 128>}, {pipeline_mode = #tpu.pipeline_mode<synchronous>, transform_indices = @transform_5, window_bounds = array<i64: 4, 128, 128>}, {pipeline_mode = #tpu.pipeline_mode<synchronous>, transform_indices = @transform_6, window_bounds = array<i64: 4, 1, 128>}, {pipeline_mode = #tpu.pipeline_mode<synchronous>, transform_indices = @transform_7, window_bounds = array<i64: 128, 64>}, {pipeline_mode = #tpu.pipeline_mode<synchronous>, transform_indices = @transform_8, window_bounds = array<i64: 1, 64>}, {pipeline_mode = #tpu.pipeline_mode<synchronous>, transform_indices = @transform_9, window_bounds = array<i64: 64, 128>}, {pipeline_mode = #tpu.pipeline_mode<synchronous>, transform_indices = @transform_10, window_bounds = array<i64: 1, 128>}, {transform_indices = @transform_11, window_bounds = array<i64: 256, 128>}]} {
    %c0 = arith.constant 0 : index
    %c0_0 = arith.constant 0 : index
    %0 = vector.load %arg1[%c0, %c0_0] : memref<256x8xf32, #tpu.memory_space<vmem>>, vector<256x8xf32>
    %1 = arith.truncf %0 : vector<256x8xf32> to vector<256x8xbf16>
    %c0_1 = arith.constant 0 : index
    %c0_2 = arith.constant 0 : index
    %2 = vector.load %arg2[%c0_1, %c0_2] : memref<8x64xbf16, #tpu.memory_space<vmem>>, vector<8x64xbf16>
    %cst = arith.constant dense<0.000000e+00> : vector<256x64xf32>
    %3 = tpu.matmul %1, %2, %cst {dimension_numbers = #tpu.dot_dimension_numbers<[1], [0], [0], [1], [0, 0, 1, 1], [], []>} : vector<256x8xbf16>, vector<8x64xbf16>, vector<256x64xf32> -> vector<256x64xf32>
    %c0_3 = arith.constant 0 : index
    %c0_4 = arith.constant 0 : index
    %4 = vector.load %arg3[%c0_3, %c0_4] : memref<1x64xf32, #tpu.memory_space<vmem>>, vector<1x64xf32>
    %5 = vector.broadcast %4 : vector<1x64xf32> to vector<256x64xf32>
    %6 = arith.addf %3, %5 : vector<256x64xf32>
    %cst_5 = arith.constant 0.000000e+00 : f32
    %7 = vector.broadcast %cst_5 : f32 to vector<256x64xf32>
    %8 = arith.cmpf ogt, %6, %7 : vector<256x64xf32>
    %cst_6 = arith.constant 0.00999999977 : f32
    %9 = vector.broadcast %cst_6 : f32 to vector<256x64xf32>
    %10 = arith.mulf %9, %6 : vector<256x64xf32>
    %11 = arith.select %8, %6, %10 : vector<256x64xi1>, vector<256x64xf32>
    %12 = arith.truncf %11 : vector<256x64xf32> to vector<256x64xbf16>
    %c0_7 = arith.constant 0 : index
    %c0_8 = arith.constant 0 : index
    %13 = vector.load %arg4[%c0_7, %c0_8] : memref<64x128xbf16, #tpu.memory_space<vmem>>, vector<64x128xbf16>
    %cst_9 = arith.constant dense<0.000000e+00> : vector<256x128xf32>
    %14 = tpu.matmul %12, %13, %cst_9 {dimension_numbers = #tpu.dot_dimension_numbers<[1], [0], [0], [1], [0, 0, 1, 1], [], []>} : vector<256x64xbf16>, vector<64x128xbf16>, vector<256x128xf32> -> vector<256x128xf32>
    %c0_10 = arith.constant 0 : index
    %c0_11 = arith.constant 0 : index
    %15 = vector.load %arg5[%c0_10, %c0_11] : memref<1x128xf32, #tpu.memory_space<vmem>>, vector<1x128xf32>
    %16 = vector.broadcast %15 : vector<1x128xf32> to vector<256x128xf32>
    %17 = arith.addf %14, %16 : vector<256x128xf32>
    %cst_12 = arith.constant 0.000000e+00 : f32
    %18 = vector.broadcast %cst_12 : f32 to vector<256x128xf32>
    %19 = arith.cmpf ogt, %17, %18 : vector<256x128xf32>
    %cst_13 = arith.constant 0.00999999977 : f32
    %20 = vector.broadcast %cst_13 : f32 to vector<256x128xf32>
    %21 = arith.mulf %20, %17 : vector<256x128xf32>
    %22 = arith.select %19, %17, %21 : vector<256x128xi1>, vector<256x128xf32>
    %23 = arith.truncf %22 : vector<256x128xf32> to vector<256x128xbf16>
    %c0_14 = arith.constant 0 : index
    %c0_15 = arith.constant 0 : index
    %c0_16 = arith.constant 0 : index
    %24 = vector.load %arg6[%c0_14, %c0_15, %c0_16] : memref<4x128x128xbf16, #tpu.memory_space<vmem>>, vector<1x128x128xbf16>
    %25 = vector.shape_cast %24 : vector<1x128x128xbf16> to vector<128x128xbf16>
    %cst_17 = arith.constant dense<0.000000e+00> : vector<256x128xf32>
    %26 = tpu.matmul %23, %25, %cst_17 {dimension_numbers = #tpu.dot_dimension_numbers<[1], [0], [0], [1], [0, 0, 1, 1], [], []>} : vector<256x128xbf16>, vector<128x128xbf16>, vector<256x128xf32> -> vector<256x128xf32>
    %27 = arith.addf %22, %26 : vector<256x128xf32>
    %c0_18 = arith.constant 0 : index
    %c0_19 = arith.constant 0 : index
    %c0_20 = arith.constant 0 : index
    %28 = vector.load %arg7[%c0_18, %c0_19, %c0_20] : memref<4x1x128xf32, #tpu.memory_space<vmem>>, vector<1x1x128xf32>
    %29 = vector.shape_cast %28 : vector<1x1x128xf32> to vector<1x128xf32>
    %30 = vector.broadcast %29 : vector<1x128xf32> to vector<256x128xf32>
    %31 = arith.addf %27, %30 : vector<256x128xf32>
    %cst_21 = arith.constant 0.000000e+00 : f32
    %32 = vector.broadcast %cst_21 : f32 to vector<256x128xf32>
    %33 = arith.cmpf ogt, %31, %32 : vector<256x128xf32>
    %cst_22 = arith.constant 0.00999999977 : f32
    %34 = vector.broadcast %cst_22 : f32 to vector<256x128xf32>
    %35 = arith.mulf %34, %31 : vector<256x128xf32>
    %36 = arith.select %33, %31, %35 : vector<256x128xi1>, vector<256x128xf32>
    %37 = arith.truncf %36 : vector<256x128xf32> to vector<256x128xbf16>
    %c1 = arith.constant 1 : index
    %c0_23 = arith.constant 0 : index
    %c0_24 = arith.constant 0 : index
    %38 = vector.load %arg6[%c1, %c0_23, %c0_24] : memref<4x128x128xbf16, #tpu.memory_space<vmem>>, vector<1x128x128xbf16>
    %39 = vector.shape_cast %38 : vector<1x128x128xbf16> to vector<128x128xbf16>
    %cst_25 = arith.constant dense<0.000000e+00> : vector<256x128xf32>
    %40 = tpu.matmul %37, %39, %cst_25 {dimension_numbers = #tpu.dot_dimension_numbers<[1], [0], [0], [1], [0, 0, 1, 1], [], []>} : vector<256x128xbf16>, vector<128x128xbf16>, vector<256x128xf32> -> vector<256x128xf32>
    %41 = arith.addf %36, %40 : vector<256x128xf32>
    %c1_26 = arith.constant 1 : index
    %c0_27 = arith.constant 0 : index
    %c0_28 = arith.constant 0 : index
    %42 = vector.load %arg7[%c1_26, %c0_27, %c0_28] : memref<4x1x128xf32, #tpu.memory_space<vmem>>, vector<1x1x128xf32>
    %43 = vector.shape_cast %42 : vector<1x1x128xf32> to vector<1x128xf32>
    %44 = vector.broadcast %43 : vector<1x128xf32> to vector<256x128xf32>
    %45 = arith.addf %41, %44 : vector<256x128xf32>
    %cst_29 = arith.constant 0.000000e+00 : f32
    %46 = vector.broadcast %cst_29 : f32 to vector<256x128xf32>
    %47 = arith.cmpf ogt, %45, %46 : vector<256x128xf32>
    %cst_30 = arith.constant 0.00999999977 : f32
    %48 = vector.broadcast %cst_30 : f32 to vector<256x128xf32>
    %49 = arith.mulf %48, %45 : vector<256x128xf32>
    %50 = arith.select %47, %45, %49 : vector<256x128xi1>, vector<256x128xf32>
    %51 = arith.truncf %50 : vector<256x128xf32> to vector<256x128xbf16>
    %c2 = arith.constant 2 : index
    %c0_31 = arith.constant 0 : index
    %c0_32 = arith.constant 0 : index
    %52 = vector.load %arg6[%c2, %c0_31, %c0_32] : memref<4x128x128xbf16, #tpu.memory_space<vmem>>, vector<1x128x128xbf16>
    %53 = vector.shape_cast %52 : vector<1x128x128xbf16> to vector<128x128xbf16>
    %cst_33 = arith.constant dense<0.000000e+00> : vector<256x128xf32>
    %54 = tpu.matmul %51, %53, %cst_33 {dimension_numbers = #tpu.dot_dimension_numbers<[1], [0], [0], [1], [0, 0, 1, 1], [], []>} : vector<256x128xbf16>, vector<128x128xbf16>, vector<256x128xf32> -> vector<256x128xf32>
    %55 = arith.addf %50, %54 : vector<256x128xf32>
    %c2_34 = arith.constant 2 : index
    %c0_35 = arith.constant 0 : index
    %c0_36 = arith.constant 0 : index
    %56 = vector.load %arg7[%c2_34, %c0_35, %c0_36] : memref<4x1x128xf32, #tpu.memory_space<vmem>>, vector<1x1x128xf32>
    %57 = vector.shape_cast %56 : vector<1x1x128xf32> to vector<1x128xf32>
    %58 = vector.broadcast %57 : vector<1x128xf32> to vector<256x128xf32>
    %59 = arith.addf %55, %58 : vector<256x128xf32>
    %cst_37 = arith.constant 0.000000e+00 : f32
    %60 = vector.broadcast %cst_37 : f32 to vector<256x128xf32>
    %61 = arith.cmpf ogt, %59, %60 : vector<256x128xf32>
    %cst_38 = arith.constant 0.00999999977 : f32
    %62 = vector.broadcast %cst_38 : f32 to vector<256x128xf32>
    %63 = arith.mulf %62, %59 : vector<256x128xf32>
    %64 = arith.select %61, %59, %63 : vector<256x128xi1>, vector<256x128xf32>
    %65 = arith.truncf %64 : vector<256x128xf32> to vector<256x128xbf16>
    %c3 = arith.constant 3 : index
    %c0_39 = arith.constant 0 : index
    %c0_40 = arith.constant 0 : index
    %66 = vector.load %arg6[%c3, %c0_39, %c0_40] : memref<4x128x128xbf16, #tpu.memory_space<vmem>>, vector<1x128x128xbf16>
    %67 = vector.shape_cast %66 : vector<1x128x128xbf16> to vector<128x128xbf16>
    %cst_41 = arith.constant dense<0.000000e+00> : vector<256x128xf32>
    %68 = tpu.matmul %65, %67, %cst_41 {dimension_numbers = #tpu.dot_dimension_numbers<[1], [0], [0], [1], [0, 0, 1, 1], [], []>} : vector<256x128xbf16>, vector<128x128xbf16>, vector<256x128xf32> -> vector<256x128xf32>
    %69 = arith.addf %64, %68 : vector<256x128xf32>
    %c3_42 = arith.constant 3 : index
    %c0_43 = arith.constant 0 : index
    %c0_44 = arith.constant 0 : index
    %70 = vector.load %arg7[%c3_42, %c0_43, %c0_44] : memref<4x1x128xf32, #tpu.memory_space<vmem>>, vector<1x1x128xf32>
    %71 = vector.shape_cast %70 : vector<1x1x128xf32> to vector<1x128xf32>
    %72 = vector.broadcast %71 : vector<1x128xf32> to vector<256x128xf32>
    %73 = arith.addf %69, %72 : vector<256x128xf32>
    %cst_45 = arith.constant 0.000000e+00 : f32
    %74 = vector.broadcast %cst_45 : f32 to vector<256x128xf32>
    %75 = arith.cmpf ogt, %73, %74 : vector<256x128xf32>
    %cst_46 = arith.constant 0.00999999977 : f32
    %76 = vector.broadcast %cst_46 : f32 to vector<256x128xf32>
    %77 = arith.mulf %76, %73 : vector<256x128xf32>
    %78 = arith.select %75, %73, %77 : vector<256x128xi1>, vector<256x128xf32>
    %79 = arith.addf %22, %78 : vector<256x128xf32>
    %80 = arith.truncf %79 : vector<256x128xf32> to vector<256x128xbf16>
    %c0_47 = arith.constant 0 : index
    %c0_48 = arith.constant 0 : index
    %81 = vector.load %arg8[%c0_47, %c0_48] : memref<128x64xbf16, #tpu.memory_space<vmem>>, vector<128x64xbf16>
    %cst_49 = arith.constant dense<0.000000e+00> : vector<256x64xf32>
    %82 = tpu.matmul %80, %81, %cst_49 {dimension_numbers = #tpu.dot_dimension_numbers<[1], [0], [0], [1], [0, 0, 1, 1], [], []>} : vector<256x128xbf16>, vector<128x64xbf16>, vector<256x64xf32> -> vector<256x64xf32>
    %c0_50 = arith.constant 0 : index
    %c0_51 = arith.constant 0 : index
    %83 = vector.load %arg9[%c0_50, %c0_51] : memref<1x64xf32, #tpu.memory_space<vmem>>, vector<1x64xf32>
    %84 = vector.broadcast %83 : vector<1x64xf32> to vector<256x64xf32>
    %85 = arith.addf %82, %84 : vector<256x64xf32>
    %cst_52 = arith.constant 0.000000e+00 : f32
    %86 = vector.broadcast %cst_52 : f32 to vector<256x64xf32>
    %87 = arith.cmpf ogt, %85, %86 : vector<256x64xf32>
    %cst_53 = arith.constant 0.00999999977 : f32
    %88 = vector.broadcast %cst_53 : f32 to vector<256x64xf32>
    %89 = arith.mulf %88, %85 : vector<256x64xf32>
    %90 = arith.select %87, %85, %89 : vector<256x64xi1>, vector<256x64xf32>
    %91 = arith.truncf %90 : vector<256x64xf32> to vector<256x64xbf16>
    %c0_54 = arith.constant 0 : index
    %c0_55 = arith.constant 0 : index
    %92 = vector.load %arg10[%c0_54, %c0_55] : memref<64x128xbf16, #tpu.memory_space<vmem>>, vector<64x128xbf16>
    %cst_56 = arith.constant dense<0.000000e+00> : vector<256x128xf32>
    %93 = tpu.matmul %91, %92, %cst_56 {dimension_numbers = #tpu.dot_dimension_numbers<[1], [0], [0], [1], [0, 0, 1, 1], [], []>} : vector<256x64xbf16>, vector<64x128xbf16>, vector<256x128xf32> -> vector<256x128xf32>
    %c0_57 = arith.constant 0 : index
    %c0_58 = arith.constant 0 : index
    %94 = vector.load %arg11[%c0_57, %c0_58] : memref<1x128xf32, #tpu.memory_space<vmem>>, vector<1x128xf32>
    %95 = vector.broadcast %94 : vector<1x128xf32> to vector<256x128xf32>
    %96 = arith.addf %93, %95 : vector<256x128xf32>
    %cst_59 = arith.constant 0.000000e+00 : f32
    %97 = vector.broadcast %cst_59 : f32 to vector<256x128xf32>
    %98 = arith.cmpf ogt, %96, %97 : vector<256x128xf32>
    %cst_60 = arith.constant 0.00999999977 : f32
    %99 = vector.broadcast %cst_60 : f32 to vector<256x128xf32>
    %100 = arith.mulf %99, %96 : vector<256x128xf32>
    %101 = arith.select %98, %96, %100 : vector<256x128xi1>, vector<256x128xf32>
    %c0_61 = arith.constant 0 : index
    %c0_62 = arith.constant 0 : index
    %102 = vector.load %arg12[%c0_61, %c0_62] : memref<256x128xf32, #tpu.memory_space<vmem>>, vector<256x128xf32>
    tpu.vector_store %arg12[%c0_61, %c0_62], %101 {strides = array<i32>} : memref<256x128xf32, #tpu.memory_space<vmem>>, vector<256x128xf32>,
    return
  }
  func.func @transform_0(%arg0: i32) -> (i32, i32) {
    %c0_i32 = arith.constant 0 : i32
    %c0_i32_0 = arith.constant 0 : i32
    return %arg0, %c0_i32 : i32, i32
  }
  func.func @transform_1(%arg0: i32) -> (i32, i32) {
    %c0_i32 = arith.constant 0 : i32
    %c0_i32_0 = arith.constant 0 : i32
    %c0_i32_1 = arith.constant 0 : i32
    return %c0_i32, %c0_i32_0 : i32, i32
  }
  func.func @transform_2(%arg0: i32) -> (i32, i32) {
    %c0_i32 = arith.constant 0 : i32
    %c0_i32_0 = arith.constant 0 : i32
    %c0_i32_1 = arith.constant 0 : i32
    return %c0_i32, %c0_i32_0 : i32, i32
  }
  func.func @transform_3(%arg0: i32) -> (i32, i32) {
    %c0_i32 = arith.constant 0 : i32
    %c0_i32_0 = arith.constant 0 : i32
    %c0_i32_1 = arith.constant 0 : i32
    return %c0_i32, %c0_i32_0 : i32, i32
  }
  func.func @transform_4(%arg0: i32) -> (i32, i32) {
    %c0_i32 = arith.constant 0 : i32
    %c0_i32_0 = arith.constant 0 : i32
    %c0_i32_1 = arith.constant 0 : i32
    return %c0_i32, %c0_i32_0 : i32, i32
  }
  func.func @transform_5(%arg0: i32) -> (i32, i32, i32) {
    %c0_i32 = arith.constant 0 : i32
    %c0_i32_0 = arith.constant 0 : i32
    %c0_i32_1 = arith.constant 0 : i32
    %c0_i32_2 = arith.constant 0 : i32
    return %c0_i32, %c0_i32_0, %c0_i32_1 : i32, i32, i32
  }
  func.func @transform_6(%arg0: i32) -> (i32, i32, i32) {
    %c0_i32 = arith.constant 0 : i32
    %c0_i32_0 = arith.constant 0 : i32
    %c0_i32_1 = arith.constant 0 : i32
    %c0_i32_2 = arith.constant 0 : i32
    return %c0_i32, %c0_i32_0, %c0_i32_1 : i32, i32, i32
  }
  func.func @transform_7(%arg0: i32) -> (i32, i32) {
    %c0_i32 = arith.constant 0 : i32
    %c0_i32_0 = arith.constant 0 : i32
    %c0_i32_1 = arith.constant 0 : i32
    return %c0_i32, %c0_i32_0 : i32, i32
  }
  func.func @transform_8(%arg0: i32) -> (i32, i32) {
    %c0_i32 = arith.constant 0 : i32
    %c0_i32_0 = arith.constant 0 : i32
    %c0_i32_1 = arith.constant 0 : i32
    return %c0_i32, %c0_i32_0 : i32, i32
  }
  func.func @transform_9(%arg0: i32) -> (i32, i32) {
    %c0_i32 = arith.constant 0 : i32
    %c0_i32_0 = arith.constant 0 : i32
    %c0_i32_1 = arith.constant 0 : i32
    return %c0_i32, %c0_i32_0 : i32, i32
  }
  func.func @transform_10(%arg0: i32) -> (i32, i32) {
    %c0_i32 = arith.constant 0 : i32
    %c0_i32_0 = arith.constant 0 : i32
    %c0_i32_1 = arith.constant 0 : i32
    return %c0_i32, %c0_i32_0 : i32, i32
  }
  func.func @transform_11(%arg0: i32) -> (i32, i32) {
    %c0_i32 = arith.constant 0 : i32
    %c0_i32_0 = arith.constant 0 : i32
    return %arg0, %c0_i32 : i32, i32
  }
}

</mosaic_0001>

<llo_original>
// kernel: tpu_custom_call.1
$region0: #{tpu_custom_call.1}
  #allocation0 [shape = 'u32[]', space=smem, size = 0x4, offset = 0x4, fixed_abs, tag = 'smem constant byte address 0x4 - core index']
  #allocation1 [shape = 'u32[144,128]{1,0:T(1,128)}', space=vmem, size = 0x12000, scoped, tag = 'internal scratch']
  %s0 = inlined_call_operand.vmem [shape: f32[768,8], index: 0, kind: input, shape index: {}]
  %s1 = inlined_call_operand.vmem [shape: bf16[8,64], index: 1, kind: input, shape index: {}]
  %s2 = inlined_call_operand.vmem [shape: f32[1,64], index: 2, kind: input, shape index: {}]
  %s3 = inlined_call_operand.vmem [shape: bf16[64,128], index: 3, kind: input, shape index: {}]
  %s4 = inlined_call_operand.vmem [shape: f32[1,128], index: 4, kind: input, shape index: {}]
  %s5 = inlined_call_operand.vmem [shape: bf16[4,128,128], index: 5, kind: input, shape index: {}]
  %s6 = inlined_call_operand.vmem [shape: f32[4,1,128], index: 6, kind: input, shape index: {}]
  %s7 = inlined_call_operand.vmem [shape: bf16[128,64], index: 7, kind: input, shape index: {}]
  %s8 = inlined_call_operand.vmem [shape: f32[1,64], index: 8, kind: input, shape index: {}]
  %s9 = inlined_call_operand.vmem [shape: bf16[64,128], index: 9, kind: input, shape index: {}]
  %s10 = inlined_call_operand.vmem [shape: f32[1,128], index: 10, kind: input, shape index: {}]
  %s11 = inlined_call_operand.hbm [shape: f32[768,128], index: 11, kind: output, shape index: {}]
  %s12 = sld [smem:[#allocation0]]
  $region77: #{tpu_custom_call.1} parent=0
    _
  %s14 = ssub.s32 1, %s12
  %s15 = scalar_select 0, %s14, %s12
  $region1: #{tpu_custom_call.1} parent=0
    #allocation2 [shape = 'u8[262144]{0}', space=vmem, size = 0x40000, scoped, tag = 'output window, operand 0']
    #allocation3 [shape = 's32[2]{0}', space=sflag, size = 0x8, scoped, tag = 'scoped memory for tpu_custom_call.1']
    %16 = vsyncpa [#allocation3], 0
    %s17 = scalar_lea.sflag [#allocation3], 1
    %18 = vsyncpa %s17, 0
    loop: start=0, step=1, limit=5
    $region2: #{tpu_custom_call.1} parent=1 // loop_pre_header
      _
    $region3: #{tpu_custom_call.1} parent=1 // loop_header
      %s20 = sphi 0, %s24
      %p21 = scmp.ge.s32.totalorder %s20, 5
      %s30 = sphi 0, %s32
      %s33 = sphi 0, %s30
      %s34 = sphi 0, %s33
      %s50 = sphi 0, %s34
      %s54 = sphi 0, %s54
      %s56 = sphi 0, %s54
      %s57 = sphi 0, %s56
      %s71 = sphi 0, %s57
      %s75 = sphi 0, %s75
      %s77 = sphi 0, %s75
      %s78 = sphi 0, %s77
      %s92 = sphi 0, %s78
      %s96 = sphi 0, %s96
      %s98 = sphi 0, %s96
      %s99 = sphi 0, %s98
      %s113 = sphi 0, %s99
      %s117 = sphi 0, %s117
      %s119 = sphi 0, %s117
      %s120 = sphi 0, %s119
      %s134 = sphi 0, %s120
      %s138 = sphi 0, %s138
      %s140 = sphi 0, %s138
      %s141 = sphi 0, %s140
      %s155 = sphi 0, %s141
      %s159 = sphi 0, %s159
      %s161 = sphi 0, %s159
      %s162 = sphi 0, %s161
      %s176 = sphi 0, %s162
      %s180 = sphi 0, %s180
      %s182 = sphi 0, %s180
      %s183 = sphi 0, %s182
      %s197 = sphi 0, %s183
      %s201 = sphi 0, %s201
      %s203 = sphi 0, %s201
      %s204 = sphi 0, %s203
      %s218 = sphi 0, %s204
      %s222 = sphi 0, %s222
      %s224 = sphi 0, %s222
      %s225 = sphi 0, %s224
      %s239 = sphi 0, %s225
      %s243 = sphi 0, %s243
      %s245 = sphi 0, %s243
      %s246 = sphi 0, %s245
      %s260 = sphi 0, %s246
      %s266 = sphi 0, %s268
      %s269 = sphi 0, %s266
      %s270 = sphi 0, %s269
      %s286 = sphi 0, %s270
    $region4: #{tpu_custom_call.1} parent=1 // loop_header_branch
      %23 = sbr.rel (%p21) target = $region8
    $region5: #{tpu_custom_call.1} parent=1 // loop_body
      %s25 = ssub.s32 %s20, 1
      %s26 = ssub.s32 %s20, 2
      %s27 = sadd.s32 %s20, 1
      %s28 = ssub.s32 %s20, %s27
      %p29 = scmp.eq.s32.totalorder %s28, 0
      %s31 = sadd.s32 %s30, 1
      %s32 = scalar_select %p29, %s30, %s31
      %p35 = pneg %p29
      %p36 = scmp.eq.s32.totalorder %s20, 2
      %p37 = por %p35, %p36
      %p38 = scmp.ne.s32.totalorder %s30, %s33
      %p39 = scmp.eq.s32.totalorder %s20, 0
      %p40 = por %p38, %p39
      %p41 = scmp.ne.s32.totalorder %s30, %s33
      %p42 = scmp.eq.s32.totalorder %s25, 2
      %p43 = por %p41, %p42
      %p44 = scmp.ne.s32.totalorder %s33, %s34
      %p45 = scmp.eq.s32.totalorder %s25, 0
      %p46 = por %p44, %p45
      %p47 = scmp.ne.s32.totalorder %s33, %s34
      %p48 = scmp.eq.s32.totalorder %s26, 2
      %p49 = por %p47, %p48
      %p51 = scmp.ne.s32.totalorder %s34, %s50
      %p52 = scmp.eq.s32.totalorder %s26, 0
      %p53 = por %p51, %p52
      %s55 = sadd.s32 %s54, 1
      %p58 = scmp.eq.s32.totalorder %s20, 2
      %p59 = scmp.ne.s32.totalorder %s54, %s56
      %p60 = scmp.eq.s32.totalorder %s20, 0
      %p61 = por %p59, %p60
      %p62 = scmp.ne.s32.totalorder %s54, %s56
      %p63 = scmp.eq.s32.totalorder %s25, 2
      %p64 = por %p62, %p63
      %p65 = scmp.ne.s32.totalorder %s56, %s57
      %p66 = scmp.eq.s32.totalorder %s25, 0
      %p67 = por %p65, %p66
      %p68 = scmp.ne.s32.totalorder %s56, %s57
      %p69 = scmp.eq.s32.totalorder %s26, 2
      %p70 = por %p68, %p69
      %p72 = scmp.ne.s32.totalorder %s57, %s71
      %p73 = scmp.eq.s32.totalorder %s26, 0
      %p74 = por %p72, %p73
      %s76 = sadd.s32 %s75, 1
      %p79 = scmp.eq.s32.totalorder %s20, 2
      %p80 = scmp.ne.s32.totalorder %s75, %s77
      %p81 = scmp.eq.s32.totalorder %s20, 0
      %p82 = por %p80, %p81
      %p83 = scmp.ne.s32.totalorder %s75, %s77
      %p84 = scmp.eq.s32.totalorder %s25, 2
      %p85 = por %p83, %p84
      %p86 = scmp.ne.s32.totalorder %s77, %s78
      %p87 = scmp.eq.s32.totalorder %s25, 0
      %p88 = por %p86, %p87
      %p89 = scmp.ne.s32.totalorder %s77, %s78
      %p90 = scmp.eq.s32.totalorder %s26, 2
      %p91 = por %p89, %p90
      %p93 = scmp.ne.s32.totalorder %s78, %s92
      %p94 = scmp.eq.s32.totalorder %s26, 0
      %p95 = por %p93, %p94
      %s97 = sadd.s32 %s96, 1
      %p100 = scmp.eq.s32.totalorder %s20, 2
      %p101 = scmp.ne.s32.totalorder %s96, %s98
      %p102 = scmp.eq.s32.totalorder %s20, 0
      %p103 = por %p101, %p102
      %p104 = scmp.ne.s32.totalorder %s96, %s98
      %p105 = scmp.eq.s32.totalorder %s25, 2
      %p106 = por %p104, %p105
      %p107 = scmp.ne.s32.totalorder %s98, %s99
      %p108 = scmp.eq.s32.totalorder %s25, 0
      %p109 = por %p107, %p108
      %p110 = scmp.ne.s32.totalorder %s98, %s99
      %p111 = scmp.eq.s32.totalorder %s26, 2
      %p112 = por %p110, %p111
      %p114 = scmp.ne.s32.totalorder %s99, %s113
      %p115 = scmp.eq.s32.totalorder %s26, 0
      %p116 = por %p114, %p115
      %s118 = sadd.s32 %s117, 1
      %p121 = scmp.eq.s32.totalorder %s20, 2
      %p122 = scmp.ne.s32.totalorder %s117, %s119
      %p123 = scmp.eq.s32.totalorder %s20, 0
      %p124 = por %p122, %p123
      %p125 = scmp.ne.s32.totalorder %s117, %s119
      %p126 = scmp.eq.s32.totalorder %s25, 2
      %p127 = por %p125, %p126
      %p128 = scmp.ne.s32.totalorder %s119, %s120
      %p129 = scmp.eq.s32.totalorder %s25, 0
      %p130 = por %p128, %p129
      %p131 = scmp.ne.s32.totalorder %s119, %s120
      %p132 = scmp.eq.s32.totalorder %s26, 2
      %p133 = por %p131, %p132
      %p135 = scmp.ne.s32.totalorder %s120, %s134
      %p136 = scmp.eq.s32.totalorder %s26, 0
      %p137 = por %p135, %p136
      %s139 = sadd.s32 %s138, 1
      %p142 = scmp.eq.s32.totalorder %s20, 2
      %p143 = scmp.ne.s32.totalorder %s138, %s140
      %p144 = scmp.eq.s32.totalorder %s20, 0
      %p145 = por %p143, %p144
      %p146 = scmp.ne.s32.totalorder %s138, %s140
      %p147 = scmp.eq.s32.totalorder %s25, 2
      %p148 = por %p146, %p147
      %p149 = scmp.ne.s32.totalorder %s140, %s141
      %p150 = scmp.eq.s32.totalorder %s25, 0
      %p151 = por %p149, %p150
      %p152 = scmp.ne.s32.totalorder %s140, %s141
      %p153 = scmp.eq.s32.totalorder %s26, 2
      %p154 = por %p152, %p153
      %p156 = scmp.ne.s32.totalorder %s141, %s155
      %p157 = scmp.eq.s32.totalorder %s26, 0
      %p158 = por %p156, %p157
      %s160 = sadd.s32 %s159, 1
      %p163 = scmp.eq.s32.totalorder %s20, 2
      %p164 = scmp.ne.s32.totalorder %s159, %s161
      %p165 = scmp.eq.s32.totalorder %s20, 0
      %p166 = por %p164, %p165
      %p167 = scmp.ne.s32.totalorder %s159, %s161
      %p168 = scmp.eq.s32.totalorder %s25, 2
      %p169 = por %p167, %p168
      %p170 = scmp.ne.s32.totalorder %s161, %s162
      %p171 = scmp.eq.s32.totalorder %s25, 0
      %p172 = por %p170, %p171
      %p173 = scmp.ne.s32.totalorder %s161, %s162
      %p174 = scmp.eq.s32.totalorder %s26, 2
      %p175 = por %p173, %p174
      %p177 = scmp.ne.s32.totalorder %s162, %s176
      %p178 = scmp.eq.s32.totalorder %s26, 0
      %p179 = por %p177, %p178
      %s181 = sadd.s32 %s180, 1
      %p184 = scmp.eq.s32.totalorder %s20, 2
      %p185 = scmp.ne.s32.totalorder %s180, %s182
      %p186 = scmp.eq.s32.totalorder %s20, 0
      %p187 = por %p185, %p186
      %p188 = scmp.ne.s32.totalorder %s180, %s182
      %p189 = scmp.eq.s32.totalorder %s25, 2
      %p190 = por %p188, %p189
      %p191 = scmp.ne.s32.totalorder %s182, %s183
      %p192 = scmp.eq.s32.totalorder %s25, 0
      %p193 = por %p191, %p192
      %p194 = scmp.ne.s32.totalorder %s182, %s183
      %p195 = scmp.eq.s32.totalorder %s26, 2
      %p196 = por %p194, %p195
      %p198 = scmp.ne.s32.totalorder %s183, %s197
      %p199 = scmp.eq.s32.totalorder %s26, 0
      %p200 = por %p198, %p199
      %s202 = sadd.s32 %s201, 1
      %p205 = scmp.eq.s32.totalorder %s20, 2
      %p206 = scmp.ne.s32.totalorder %s201, %s203
      %p207 = scmp.eq.s32.totalorder %s20, 0
      %p208 = por %p206, %p207
      %p209 = scmp.ne.s32.totalorder %s201, %s203
      %p210 = scmp.eq.s32.totalorder %s25, 2
      %p211 = por %p209, %p210
      %p212 = scmp.ne.s32.totalorder %s203, %s204
      %p213 = scmp.eq.s32.totalorder %s25, 0
      %p214 = por %p212, %p213
      %p215 = scmp.ne.s32.totalorder %s203, %s204
      %p216 = scmp.eq.s32.totalorder %s26, 2
      %p217 = por %p215, %p216
      %p219 = scmp.ne.s32.totalorder %s204, %s218
      %p220 = scmp.eq.s32.totalorder %s26, 0
      %p221 = por %p219, %p220
      %s223 = sadd.s32 %s222, 1
      %p226 = scmp.eq.s32.totalorder %s20, 2
      %p227 = scmp.ne.s32.totalorder %s222, %s224
      %p228 = scmp.eq.s32.totalorder %s20, 0
      %p229 = por %p227, %p228
      %p230 = scmp.ne.s32.totalorder %s222, %s224
      %p231 = scmp.eq.s32.totalorder %s25, 2
      %p232 = por %p230, %p231
      %p233 = scmp.ne.s32.totalorder %s224, %s225
      %p234 = scmp.eq.s32.totalorder %s25, 0
      %p235 = por %p233, %p234
      %p236 = scmp.ne.s32.totalorder %s224, %s225
      %p237 = scmp.eq.s32.totalorder %s26, 2
      %p238 = por %p236, %p237
      %p240 = scmp.ne.s32.totalorder %s225, %s239
      %p241 = scmp.eq.s32.totalorder %s26, 0
      %p242 = por %p240, %p241
      %s244 = sadd.s32 %s243, 1
      %p247 = scmp.eq.s32.totalorder %s20, 2
      %p248 = scmp.ne.s32.totalorder %s243, %s245
      %p249 = scmp.eq.s32.totalorder %s20, 0
      %p250 = por %p248, %p249
      %p251 = scmp.ne.s32.totalorder %s243, %s245
      %p252 = scmp.eq.s32.totalorder %s25, 2
      %p253 = por %p251, %p252
      %p254 = scmp.ne.s32.totalorder %s245, %s246
      %p255 = scmp.eq.s32.totalorder %s25, 0
      %p256 = por %p254, %p255
      %p257 = scmp.ne.s32.totalorder %s245, %s246
      %p258 = scmp.eq.s32.totalorder %s26, 2
      %p259 = por %p257, %p258
      %p261 = scmp.ne.s32.totalorder %s246, %s260
      %p262 = scmp.eq.s32.totalorder %s26, 0
      %p263 = por %p261, %p262
      %s264 = ssub.s32 %s20, %s27
      %p265 = scmp.eq.s32.totalorder %s264, 0
      %s267 = sadd.s32 %s266, 1
      %s268 = scalar_select %p265, %s266, %s267
      %p271 = pneg %p265
      %p272 = scmp.eq.s32.totalorder %s20, 2
      %p273 = por %p271, %p272
      %p274 = scmp.ne.s32.totalorder %s266, %s269
      %p275 = scmp.eq.s32.totalorder %s20, 0
      %p276 = por %p274, %p275
      %p277 = scmp.ne.s32.totalorder %s266, %s269
      %p278 = scmp.eq.s32.totalorder %s25, 2
      %p279 = por %p277, %p278
      %p280 = scmp.ne.s32.totalorder %s269, %s270
      %p281 = scmp.eq.s32.totalorder %s25, 0
      %p282 = por %p280, %p281
      %p283 = scmp.ne.s32.totalorder %s269, %s270
      %p284 = scmp.eq.s32.totalorder %s26, 2
      %p285 = por %p283, %p284
      %p287 = scmp.ne.s32.totalorder %s270, %s286
      %p288 = scmp.eq.s32.totalorder %s26, 0
      %p289 = por %p287, %p288
      %p290 = scmp.le.s32.totalorder 1, %s20
      %p291 = scmp.lt.s32.totalorder %s20, 4
      %p292 = pnand %p290, %p291
      %p293 = pneg %p292
      // Predicated region
      $region9: #{tpu_custom_call.1} parent=5 // pred_check
        _
      $region10: #{tpu_custom_call.1} parent=5 // pred_check_branch
        %295 = sbr.rel (%p292) target = $region12
      $region11: #{tpu_custom_call.1} parent=5 // pred_region
        %s296 = ssub.s32 %s20, 1
        // Predicated region
        $region13: #{tpu_custom_call.1} parent=11 // pred_check
          %p297 = pneg %p67
        $region14: #{tpu_custom_call.1} parent=11 // pred_check_branch
          %299 = sbr.rel (%p297) target = $region16
        $region15: #{tpu_custom_call.1} parent=11 // pred_region
          _
        $region16: #{tpu_custom_call.1} parent=11 // pred_fallthru
          _
        // Predicated region
        $region17: #{tpu_custom_call.1} parent=11 // pred_check
          %p300 = pneg %p88
        $region18: #{tpu_custom_call.1} parent=11 // pred_check_branch
          %302 = sbr.rel (%p300) target = $region20
        $region19: #{tpu_custom_call.1} parent=11 // pred_region
          _
        $region20: #{tpu_custom_call.1} parent=11 // pred_fallthru
          _
        // Predicated region
        $region21: #{tpu_custom_call.1} parent=11 // pred_check
          %p303 = pneg %p109
        $region22: #{tpu_custom_call.1} parent=11 // pred_check_branch
          %305 = sbr.rel (%p303) target = $region24
        $region23: #{tpu_custom_call.1} parent=11 // pred_region
          _
        $region24: #{tpu_custom_call.1} parent=11 // pred_fallthru
          _
        // Predicated region
        $region25: #{tpu_custom_call.1} parent=11 // pred_check
          %p306 = pneg %p130
        $region26: #{tpu_custom_call.1} parent=11 // pred_check_branch
          %308 = sbr.rel (%p306) target = $region28
        $region27: #{tpu_custom_call.1} parent=11 // pred_region
          _
        $region28: #{tpu_custom_call.1} parent=11 // pred_fallthru
          _
        // Predicated region
        $region29: #{tpu_custom_call.1} parent=11 // pred_check
          %p309 = pneg %p151
        $region30: #{tpu_custom_call.1} parent=11 // pred_check_branch
          %311 = sbr.rel (%p309) target = $region32
        $region31: #{tpu_custom_call.1} parent=11 // pred_region
          _
        $region32: #{tpu_custom_call.1} parent=11 // pred_fallthru
          _
        // Predicated region
        $region33: #{tpu_custom_call.1} parent=11 // pred_check
          %p312 = pneg %p172
        $region34: #{tpu_custom_call.1} parent=11 // pred_check_branch
          %314 = sbr.rel (%p312) target = $region36
        $region35: #{tpu_custom_call.1} parent=11 // pred_region
          _
        $region36: #{tpu_custom_call.1} parent=11 // pred_fallthru
          _
        // Predicated region
        $region37: #{tpu_custom_call.1} parent=11 // pred_check
          %p315 = pneg %p193
        $region38: #{tpu_custom_call.1} parent=11 // pred_check_branch
          %317 = sbr.rel (%p315) target = $region40
        $region39: #{tpu_custom_call.1} parent=11 // pred_region
          _
        $region40: #{tpu_custom_call.1} parent=11 // pred_fallthru
          _
        // Predicated region
        $region41: #{tpu_custom_call.1} parent=11 // pred_check
          %p318 = pneg %p214
        $region42: #{tpu_custom_call.1} parent=11 // pred_check_branch
          %320 = sbr.rel (%p318) target = $region44
        $region43: #{tpu_custom_call.1} parent=11 // pred_region
          _
        $region44: #{tpu_custom_call.1} parent=11 // pred_fallthru
          _
        // Predicated region
        $region45: #{tpu_custom_call.1} parent=11 // pred_check
          %p321 = pneg %p235
        $region46: #{tpu_custom_call.1} parent=11 // pred_check_branch
          %323 = sbr.rel (%p321) target = $region48
        $region47: #{tpu_custom_call.1} parent=11 // pred_region
          _
        $region48: #{tpu_custom_call.1} parent=11 // pred_fallthru
          _
        // Predicated region
        $region49: #{tpu_custom_call.1} parent=11 // pred_check
          %p324 = pneg %p256
        $region50: #{tpu_custom_call.1} parent=11 // pred_check_branch
          %326 = sbr.rel (%p324) target = $region52
        $region51: #{tpu_custom_call.1} parent=11 // pred_region
          _
        $region52: #{tpu_custom_call.1} parent=11 // pred_fallthru
          _
      $region12: #{tpu_custom_call.1} parent=5 // pred_fallthru
        _
      %p327 = scmp.lt.s32.totalorder %s20, 3
      // Predicated region
      $region53: #{tpu_custom_call.1} parent=5 // pred_check
        %p328 = pneg %p327
      $region54: #{tpu_custom_call.1} parent=5 // pred_check_branch
        %330 = sbr.rel (%p328) target = $region56
      $region55: #{tpu_custom_call.1} parent=5 // pred_region
        // Predicated region
        $region57: #{tpu_custom_call.1} parent=55 // pred_check
          %p331 = pneg %p40
        $region58: #{tpu_custom_call.1} parent=55 // pred_check_branch
          %333 = sbr.rel (%p331) target = $region60
        $region59: #{tpu_custom_call.1} parent=55 // pred_region
          %s334 = smul.u32 32, %s20
          %p335 = scmp.lt.s32.totalorder %s334, 95
          %s336 = scalar_select %p335, %s334, 95
          %s337 = smul.addr %s336, 8
          %s338 = scalar_lea.vmem %s0, %s337
          %s339 = smul.u32 32, %s20
        $region60: #{tpu_custom_call.1} parent=55 // pred_fallthru
          _
      $region56: #{tpu_custom_call.1} parent=5 // pred_fallthru
        _
      %p340 = scmp.le.s32.totalorder 1, %s20
      %p341 = scmp.lt.s32.totalorder %s20, 4
      %p342 = pnand %p340, %p341
      %p343 = pneg %p342
      // Predicated region
      $region61: #{tpu_custom_call.1} parent=5 // pred_check
        _
      $region62: #{tpu_custom_call.1} parent=5 // pred_check_branch
        %345 = sbr.rel (%p342) target = $region64
      $region63: #{tpu_custom_call.1} parent=5 // pred_region
        %s346 = ssub.s32 %s20, 1
        %s347 = smul.u32 32, %s25
        %p348 = scmp.lt.s32.totalorder %s347, 95
        %s349 = scalar_select %p348, %s347, 95
        %s350 = smul.addr %s349, 8
        %s351 = scalar_lea.vmem %s0, %s350
        %p352 = pneg %p46
        %p353 = pneg %p43
        %p354 = pneg %p67
        %p355 = pneg %p64
        %p356 = pneg %p88
        %p357 = pneg %p85
        %p358 = pneg %p109
        %p359 = pneg %p106
        %p360 = pneg %p130
        %p361 = pneg %p127
        %p362 = pneg %p151
        %p363 = pneg %p148
        %p364 = pneg %p172
        %p365 = pneg %p169
        %p366 = pneg %p193
        %p367 = pneg %p190
        %p368 = pneg %p214
        %p369 = pneg %p211
        %p370 = pneg %p235
        %p371 = pneg %p232
        %p372 = pneg %p256
        %p373 = pneg %p253
        %p374 = pneg %p282
        %p375 = pneg %p279
        %s376 = sand.u32 %s269, 1
        %s377 = scalar_lea.sflag [#allocation3], %s376
        %s378 = sand.u32 %s269, 1
        %s379 = smul.addr %s378, 256
        %s380 = scalar_lea.vmem [#allocation2], %s379
        %s381 = smul.u32 32, %s25
        %p382 = scmp.lt.s32.totalorder %s381, 95
        %s383 = scalar_select %p382, %s381, 95
        %s384 = smul.addr %s383, 8
        %s385 = scalar_lea.vmem %s0, %s384
        %s386 = smul.u32 32, %s25
        %s387 = smul.u32 32, %s25
        %v389 = vld [vmem:[%s385] sm:$0xff]
        %v390 = vld [vmem:[%s385 + $0x8] sm:$0xff]
        %v391 = vld [vmem:[%s385 + $0x10] sm:$0xff]
        %v392 = vld [vmem:[%s385 + $0x18] sm:$0xff]
        %v393 = vld [vmem:[%s385 + $0x20] sm:$0xff]
        %v394 = vld [vmem:[%s385 + $0x28] sm:$0xff]
        %v395 = vld [vmem:[%s385 + $0x30] sm:$0xff]
        %v396 = vld [vmem:[%s385 + $0x38] sm:$0xff]
        %v397 = vld [vmem:[%s385 + $0x40] sm:$0xff]
        %v398 = vld [vmem:[%s385 + $0x48] sm:$0xff]
        %v399 = vld [vmem:[%s385 + $0x50] sm:$0xff]
        %v400 = vld [vmem:[%s385 + $0x58] sm:$0xff]
        %v401 = vld [vmem:[%s385 + $0x60] sm:$0xff]
        %v402 = vld [vmem:[%s385 + $0x68] sm:$0xff]
        %v403 = vld [vmem:[%s385 + $0x70] sm:$0xff]
        %v404 = vld [vmem:[%s385 + $0x78] sm:$0xff]
        %v405 = vld [vmem:[%s385 + $0x80] sm:$0xff]
        %v406 = vld [vmem:[%s385 + $0x88] sm:$0xff]
        %v407 = vld [vmem:[%s385 + $0x90] sm:$0xff]
        %v408 = vld [vmem:[%s385 + $0x98] sm:$0xff]
        %v409 = vld [vmem:[%s385 + $0xa0] sm:$0xff]
        %v410 = vld [vmem:[%s385 + $0xa8] sm:$0xff]
        %v411 = vld [vmem:[%s385 + $0xb0] sm:$0xff]
        %v412 = vld [vmem:[%s385 + $0xb8] sm:$0xff]
        %v413 = vld [vmem:[%s385 + $0xc0] sm:$0xff]
        %v414 = vld [vmem:[%s385 + $0xc8] sm:$0xff]
        %v415 = vld [vmem:[%s385 + $0xd0] sm:$0xff]
        %v416 = vld [vmem:[%s385 + $0xd8] sm:$0xff]
        %v417 = vld [vmem:[%s385 + $0xe0] sm:$0xff]
        %v418 = vld [vmem:[%s385 + $0xe8] sm:$0xff]
        %v419 = vld [vmem:[%s385 + $0xf0] sm:$0xff]
        %v420 = vld [vmem:[%s385 + $0xf8] sm:$0xff]
        %v421 = vpack.c.bf16 %v390, %v389
        %v422 = vpack.c.bf16 %v392, %v391
        %v423 = vpack.c.bf16 %v394, %v393
        %v424 = vpack.c.bf16 %v396, %v395
        %v425 = vpack.c.bf16 %v398, %v397
        %v426 = vpack.c.bf16 %v400, %v399
        %v427 = vpack.c.bf16 %v402, %v401
        %v428 = vpack.c.bf16 %v404, %v403
        %v429 = vpack.c.bf16 %v406, %v405
        %v430 = vpack.c.bf16 %v408, %v407
        %v431 = vpack.c.bf16 %v410, %v409
        %v432 = vpack.c.bf16 %v412, %v411
        %v433 = vpack.c.bf16 %v414, %v413
        %v434 = vpack.c.bf16 %v416, %v415
        %v435 = vpack.c.bf16 %v418, %v417
        %v436 = vpack.c.bf16 %v420, %v419
        %v437 = vld [vmem:[%s1] sm:$0xf]
        %v438 = vld [vmem:[%s2] sm:$0x1]
        %v440 = vlaneseq
        %v441 = vshrl.u32 %v440, 7
        %v442 = vsub.s32 0, %v441
        %v443 = vrot.slane %v438, %v442
        %vm445 = vcmask 64512
        %v447 = vsel %vm445, %v421, 0
        %v450 = vsel %vm445, %v422, 0
        %v453 = vsel %vm445, %v423, 0
        %v456 = vsel %vm445, %v424, 0
        %v459 = vsel %vm445, %v425, 0
        %v462 = vsel %vm445, %v426, 0
        %v465 = vsel %vm445, %v427, 0
        %v468 = vsel %vm445, %v428, 0
        %v471 = vsel %vm445, %v429, 0
        %v474 = vsel %vm445, %v430, 0
        %v477 = vsel %vm445, %v431, 0
        %v480 = vsel %vm445, %v432, 0
        %v483 = vsel %vm445, %v433, 0
        %v486 = vsel %vm445, %v434, 0
        %v489 = vsel %vm445, %v435, 0
        %v492 = vsel %vm445, %v436, 0
        %vm494 = vcmask 1043456
        %v496 = vsel %vm494, %v437, 0
        %498 = vmatprep.subr.bf16.mxu0 0
        %499 = vmatpush1.bf16.msra.mxu0 %v496
        %500 = vmatprep.subr.bf16.mxu0 0
        %501 = vmatpush1.bf16.msra.mxu0 0
        %502 = vmatprep.subr.bf16.mxu0 0
        %503 = vmatpush1.bf16.msra.mxu0 0
        %504 = vmatprep.subr.bf16.mxu0 0
        %505 = vmatpush1.bf16.msra.mxu0 0
        %506 = vmatprep.subr.bf16.mxu0 0
        %507 = vmatpush1.bf16.msra.mxu0 0
        %508 = vmatprep.subr.bf16.mxu0 0
        %509 = vmatpush1.bf16.msra.mxu0 0
        %510 = vmatprep.subr.bf16.mxu0 0
        %511 = vmatpush1.bf16.msra.mxu0 0
        %512 = vmatprep.subr.bf16.mxu0 0
        %513 = vmatpush1.bf16.msra.mxu0 0
        %514 = vmatprep.subr.bf16.mxu0 0
        %515 = vmatpush1.bf16.msra.mxu0 0
        %516 = vmatprep.subr.bf16.mxu0 0
        %517 = vmatpush1.bf16.msra.mxu0 0
        %518 = vmatprep.subr.bf16.mxu0 0
        %519 = vmatpush1.bf16.msra.mxu0 0
        %520 = vmatprep.subr.bf16.mxu0 0
        %521 = vmatpush1.bf16.msra.mxu0 0
        %522 = vmatprep.subr.bf16.mxu0 0
        %523 = vmatpush1.bf16.msra.mxu0 0
        %524 = vmatprep.subr.bf16.mxu0 0
        %525 = vmatpush1.bf16.msra.mxu0 0
        %526 = vmatprep.subr.bf16.mxu0 0
        %527 = vmatpush1.bf16.msra.mxu0 0
        %528 = vmatprep.subr.bf16.mxu0 0
        %529 = vmatpush1.bf16.msra.mxu0 0
        %530 = vmatprep.mubr.bf16.mxu0 0
        %531 = vmatmul.mubr.bf16.gmra.mrb[0].mxu0 %v447
        %v532 = vpop.f32.mrb[0].mxu0
        %v533 = vadd.f32 %v443, %v532
        %v534 = vpop.f32.mrb[0].mxu0
        %v535 = vpop.f32.mrb[0].mxu0
        %v536 = vadd.f32 %v443, %v535
        %v537 = vpop.f32.mrb[0].mxu0
        %538 = vmatprep.mubr.bf16.mxu0 0
        %539 = vmatmul.mubr.bf16.gmra.mrb[0].mxu0 %v450
        %v540 = vpop.f32.mrb[0].mxu0
        %v541 = vadd.f32 %v443, %v540
        %v542 = vpop.f32.mrb[0].mxu0
        %v543 = vpop.f32.mrb[0].mxu0
        %v544 = vadd.f32 %v443, %v543
        %v545 = vpop.f32.mrb[0].mxu0
        %546 = vmatprep.mubr.bf16.mxu0 0
        %547 = vmatmul.mubr.bf16.gmra.mrb[0].mxu0 %v453
        %v548 = vpop.f32.mrb[0].mxu0
        %v549 = vadd.f32 %v443, %v548
        %v550 = vpop.f32.mrb[0].mxu0
        %v551 = vpop.f32.mrb[0].mxu0
        %v552 = vadd.f32 %v443, %v551
        %v553 = vpop.f32.mrb[0].mxu0
        %554 = vmatprep.mubr.bf16.mxu0 0
        %555 = vmatmul.mubr.bf16.gmra.mrb[0].mxu0 %v456
        %v556 = vpop.f32.mrb[0].mxu0
        %v557 = vadd.f32 %v443, %v556
        %v558 = vpop.f32.mrb[0].mxu0
        %v559 = vpop.f32.mrb[0].mxu0
        %v560 = vadd.f32 %v443, %v559
        %v561 = vpop.f32.mrb[0].mxu0
        %562 = vmatprep.mubr.bf16.mxu0 0
        %563 = vmatmul.mubr.bf16.gmra.mrb[0].mxu0 %v459
        %v564 = vpop.f32.mrb[0].mxu0
        %v565 = vadd.f32 %v443, %v564
        %v566 = vpop.f32.mrb[0].mxu0
        %v567 = vpop.f32.mrb[0].mxu0
        %v568 = vadd.f32 %v443, %v567
        %v569 = vpop.f32.mrb[0].mxu0
        %570 = vmatprep.mubr.bf16.mxu0 0
        %571 = vmatmul.mubr.bf16.gmra.mrb[0].mxu0 %v462
        %v572 = vpop.f32.mrb[0].mxu0
        %v573 = vadd.f32 %v443, %v572
        %v574 = vpop.f32.mrb[0].mxu0
        %v575 = vpop.f32.mrb[0].mxu0
        %v576 = vadd.f32 %v443, %v575
        %v577 = vpop.f32.mrb[0].mxu0
        %578 = vmatprep.mubr.bf16.mxu0 0
        %579 = vmatmul.mubr.bf16.gmra.mrb[0].mxu0 %v465
        %v580 = vpop.f32.mrb[0].mxu0
        %v581 = vadd.f32 %v443, %v580
        %v582 = vpop.f32.mrb[0].mxu0
        %v583 = vpop.f32.mrb[0].mxu0
        %v584 = vadd.f32 %v443, %v583
        %v585 = vpop.f32.mrb[0].mxu0
        %586 = vmatprep.mubr.bf16.mxu0 0
        %587 = vmatmul.mubr.bf16.gmra.mrb[0].mxu0 %v468
        %v588 = vpop.f32.mrb[0].mxu0
        %v589 = vadd.f32 %v443, %v588
        %v590 = vpop.f32.mrb[0].mxu0
        %v591 = vpop.f32.mrb[0].mxu0
        %v592 = vadd.f32 %v443, %v591
        %v593 = vpop.f32.mrb[0].mxu0
        %594 = vmatprep.mubr.bf16.mxu0 0
        %595 = vmatmul.mubr.bf16.gmra.mrb[0].mxu0 %v471
        %v596 = vpop.f32.mrb[0].mxu0
        %v597 = vadd.f32 %v443, %v596
        %v598 = vpop.f32.mrb[0].mxu0
        %v599 = vpop.f32.mrb[0].mxu0
        %v600 = vadd.f32 %v443, %v599
        %v601 = vpop.f32.mrb[0].mxu0
        %602 = vmatprep.mubr.bf16.mxu0 0
        %603 = vmatmul.mubr.bf16.gmra.mrb[0].mxu0 %v474
        %v604 = vpop.f32.mrb[0].mxu0
        %v605 = vadd.f32 %v443, %v604
        %v606 = vpop.f32.mrb[0].mxu0
        %v607 = vpop.f32.mrb[0].mxu0
        %v608 = vadd.f32 %v443, %v607
        %v609 = vpop.f32.mrb[0].mxu0
        %610 = vmatprep.mubr.bf16.mxu0 0
        %611 = vmatmul.mubr.bf16.gmra.mrb[0].mxu0 %v477
        %v612 = vpop.f32.mrb[0].mxu0
        %v613 = vadd.f32 %v443, %v612
        %v614 = vpop.f32.mrb[0].mxu0
        %v615 = vpop.f32.mrb[0].mxu0
        %v616 = vadd.f32 %v443, %v615
        %v617 = vpop.f32.mrb[0].mxu0
        %618 = vmatprep.mubr.bf16.mxu0 0
        %619 = vmatmul.mubr.bf16.gmra.mrb[0].mxu0 %v480
        %v620 = vpop.f32.mrb[0].mxu0
        %v621 = vadd.f32 %v443, %v620
        %v622 = vpop.f32.mrb[0].mxu0
        %v623 = vpop.f32.mrb[0].mxu0
        %v624 = vadd.f32 %v443, %v623
        %v625 = vpop.f32.mrb[0].mxu0
        %626 = vmatprep.mubr.bf16.mxu0 0
        %627 = vmatmul.mubr.bf16.gmra.mrb[0].mxu0 %v483
        %v628 = vpop.f32.mrb[0].mxu0
        %v629 = vadd.f32 %v443, %v628
        %v630 = vpop.f32.mrb[0].mxu0
        %v631 = vpop.f32.mrb[0].mxu0
        %v632 = vadd.f32 %v443, %v631
        %v633 = vpop.f32.mrb[0].mxu0
        %634 = vmatprep.mubr.bf16.mxu0 0
        %635 = vmatmul.mubr.bf16.gmra.mrb[0].mxu0 %v486
        %v636 = vpop.f32.mrb[0].mxu0
        %v637 = vadd.f32 %v443, %v636
        %v638 = vpop.f32.mrb[0].mxu0
        %v639 = vpop.f32.mrb[0].mxu0
        %v640 = vadd.f32 %v443, %v639
        %v641 = vpop.f32.mrb[0].mxu0
        %642 = vmatprep.mubr.bf16.mxu0 0
        %643 = vmatmul.mubr.bf16.gmra.mrb[0].mxu0 %v489
        %v644 = vpop.f32.mrb[0].mxu0
        %v645 = vadd.f32 %v443, %v644
        %v646 = vpop.f32.mrb[0].mxu0
        %v647 = vpop.f32.mrb[0].mxu0
        %v648 = vadd.f32 %v443, %v647
        %v649 = vpop.f32.mrb[0].mxu0
        %650 = vmatprep.mubr.bf16.mxu0 0
        %651 = vmatmul.mubr.bf16.gmra.mrb[0].mxu0 %v492
        %v652 = vpop.f32.mrb[0].mxu0
        %v653 = vadd.f32 %v443, %v652
        %v654 = vpop.f32.mrb[0].mxu0
        %v655 = vpop.f32.mrb[0].mxu0
        %v656 = vadd.f32 %v443, %v655
        %v657 = vpop.f32.mrb[0].mxu0
        %658 = vdwg.mxu0
        %vm659 = vcmp.gt.f32.partialorder %v533, 0.0
        %vm660 = vcmp.gt.f32.partialorder %v536, 0.0
        %vm661 = vcmp.gt.f32.partialorder %v541, 0.0
        %vm662 = vcmp.gt.f32.partialorder %v544, 0.0
        %vm663 = vcmp.gt.f32.partialorder %v549, 0.0
        %vm664 = vcmp.gt.f32.partialorder %v552, 0.0
        %vm665 = vcmp.gt.f32.partialorder %v557, 0.0
        %vm666 = vcmp.gt.f32.partialorder %v560, 0.0
        %vm667 = vcmp.gt.f32.partialorder %v565, 0.0
        %vm668 = vcmp.gt.f32.partialorder %v568, 0.0
        %vm669 = vcmp.gt.f32.partialorder %v573, 0.0
        %vm670 = vcmp.gt.f32.partialorder %v576, 0.0
        %vm671 = vcmp.gt.f32.partialorder %v581, 0.0
        %vm672 = vcmp.gt.f32.partialorder %v584, 0.0
        %vm673 = vcmp.gt.f32.partialorder %v589, 0.0
        %vm674 = vcmp.gt.f32.partialorder %v592, 0.0
        %vm675 = vcmp.gt.f32.partialorder %v597, 0.0
        %vm676 = vcmp.gt.f32.partialorder %v600, 0.0
        %vm677 = vcmp.gt.f32.partialorder %v605, 0.0
        %vm678 = vcmp.gt.f32.partialorder %v608, 0.0
        %vm679 = vcmp.gt.f32.partialorder %v613, 0.0
        %vm680 = vcmp.gt.f32.partialorder %v616, 0.0
        %vm681 = vcmp.gt.f32.partialorder %v621, 0.0
        %vm682 = vcmp.gt.f32.partialorder %v624, 0.0
        %vm683 = vcmp.gt.f32.partialorder %v629, 0.0
        %vm684 = vcmp.gt.f32.partialorder %v632, 0.0
        %vm685 = vcmp.gt.f32.partialorder %v637, 0.0
        %vm686 = vcmp.gt.f32.partialorder %v640, 0.0
        %vm687 = vcmp.gt.f32.partialorder %v645, 0.0
        %vm688 = vcmp.gt.f32.partialorder %v648, 0.0
        %vm689 = vcmp.gt.f32.partialorder %v653, 0.0
        %vm690 = vcmp.gt.f32.partialorder %v656, 0.0
        %v691 = vmul.f32 %v533, 0.01
        %v692 = vmul.f32 %v536, 0.01
        %v693 = vmul.f32 %v541, 0.01
        %v694 = vmul.f32 %v544, 0.01
        %v695 = vmul.f32 %v549, 0.01
        %v696 = vmul.f32 %v552, 0.01
        %v697 = vmul.f32 %v557, 0.01
        %v698 = vmul.f32 %v560, 0.01
        %v699 = vmul.f32 %v565, 0.01
        %v700 = vmul.f32 %v568, 0.01
        %v701 = vmul.f32 %v573, 0.01
        %v702 = vmul.f32 %v576, 0.01
        %v703 = vmul.f32 %v581, 0.01
        %v704 = vmul.f32 %v584, 0.01
        %v705 = vmul.f32 %v589, 0.01
        %v706 = vmul.f32 %v592, 0.01
        %v707 = vmul.f32 %v597, 0.01
        %v708 = vmul.f32 %v600, 0.01
        %v709 = vmul.f32 %v605, 0.01
        %v710 = vmul.f32 %v608, 0.01
        %v711 = vmul.f32 %v613, 0.01
        %v712 = vmul.f32 %v616, 0.01
        %v713 = vmul.f32 %v621, 0.01
        %v714 = vmul.f32 %v624, 0.01
        %v715 = vmul.f32 %v629, 0.01
        %v716 = vmul.f32 %v632, 0.01
        %v717 = vmul.f32 %v637, 0.01
        %v718 = vmul.f32 %v640, 0.01
        %v719 = vmul.f32 %v645, 0.01
        %v720 = vmul.f32 %v648, 0.01
        %v721 = vmul.f32 %v653, 0.01
        %v722 = vmul.f32 %v656, 0.01
        %v723 = vsel %vm659, %v533, %v691
        %v724 = vsel %vm660, %v536, %v692
        %v725 = vsel %vm661, %v541, %v693
        %v726 = vsel %vm662, %v544, %v694
        %v727 = vsel %vm663, %v549, %v695
        %v728 = vsel %vm664, %v552, %v696
        %v729 = vsel %vm665, %v557, %v697
        %v730 = vsel %vm666, %v560, %v698
        %v731 = vsel %vm667, %v565, %v699
        %v732 = vsel %vm668, %v568, %v700
        %v733 = vsel %vm669, %v573, %v701
        %v734 = vsel %vm670, %v576, %v702
        %v735 = vsel %vm671, %v581, %v703
        %v736 = vsel %vm672, %v584, %v704
        %v737 = vsel %vm673, %v589, %v705
        %v738 = vsel %vm674, %v592, %v706
        %v739 = vsel %vm675, %v597, %v707
        %v740 = vsel %vm676, %v600, %v708
        %v741 = vsel %vm677, %v605, %v709
        %v742 = vsel %vm678, %v608, %v710
        %v743 = vsel %vm679, %v613, %v711
        %v744 = vsel %vm680, %v616, %v712
        %v745 = vsel %vm681, %v621, %v713
        %v746 = vsel %vm682, %v624, %v714
        %v747 = vsel %vm683, %v629, %v715
        %v748 = vsel %vm684, %v632, %v716
        %v749 = vsel %vm685, %v637, %v717
        %v750 = vsel %vm686, %v640, %v718
        %v751 = vsel %vm687, %v645, %v719
        %v752 = vsel %vm688, %v648, %v720
        %v753 = vsel %vm689, %v653, %v721
        %v754 = vsel %vm690, %v656, %v722
        %v755 = vpack.c.bf16 %v724, %v723
        %v756 = vpack.c.bf16 %v726, %v725
        %v757 = vpack.c.bf16 %v728, %v727
        %v758 = vpack.c.bf16 %v730, %v729
        %v759 = vpack.c.bf16 %v732, %v731
        %v760 = vpack.c.bf16 %v734, %v733
        %v761 = vpack.c.bf16 %v736, %v735
        %v762 = vpack.c.bf16 %v738, %v737
        %v763 = vpack.c.bf16 %v740, %v739
        %v764 = vpack.c.bf16 %v742, %v741
        %v765 = vpack.c.bf16 %v744, %v743
        %v766 = vpack.c.bf16 %v746, %v745
        %v767 = vpack.c.bf16 %v748, %v747
        %v768 = vpack.c.bf16 %v750, %v749
        %v769 = vpack.c.bf16 %v752, %v751
        %v770 = vpack.c.bf16 %v754, %v753
        %v771 = vld [vmem:[%s3] sm:$0xf]
        %v772 = vld [vmem:[%s3 + $0x4] sm:$0xf]
        %v773 = vld [vmem:[%s3 + $0x8] sm:$0xf]
        %v774 = vld [vmem:[%s3 + $0xc] sm:$0xf]
        %v775 = vld [vmem:[%s3 + $0x10] sm:$0xf]
        %v776 = vld [vmem:[%s3 + $0x14] sm:$0xf]
        %v777 = vld [vmem:[%s3 + $0x18] sm:$0xf]
        %v778 = vld [vmem:[%s3 + $0x1c] sm:$0xf]
        %v779 = vld [vmem:[%s4] sm:$0x1]
        %v781 = vlaneseq
        %v782 = vshrl.u32 %v781, 7
        %v783 = vsub.s32 0, %v782
        %v784 = vrot.slane %v779, %v783
        %v794 = vunpack.c.l.b16 %v771
        %v795 = vunpack.c.l.b16 %v772
        %v796 = vunpack.c.l.b16 %v773
        %v797 = vunpack.c.l.b16 %v774
        %v798 = vunpack.c.l.b16 %v775
        %v799 = vunpack.c.l.b16 %v776
        %v800 = vunpack.c.l.b16 %v777
        %v801 = vunpack.c.l.b16 %v778
        %v802 = vpack.c.b16 %v795, %v794
        %v803 = vpack.c.b16 %v797, %v796
        %v804 = vpack.c.b16 %v799, %v798
        %v805 = vpack.c.b16 %v801, %v800
        %vm810 = vcmask 523264
        %v812 = vsel %vm810, %v755, 0
        %v815 = vsel %vm810, %v756, 0
        %v818 = vsel %vm810, %v757, 0
        %v821 = vsel %vm810, %v758, 0
        %v824 = vsel %vm810, %v759, 0
        %v827 = vsel %vm810, %v760, 0
        %v830 = vsel %vm810, %v761, 0
        %v833 = vsel %vm810, %v762, 0
        %v836 = vsel %vm810, %v763, 0
        %v839 = vsel %vm810, %v764, 0
        %v842 = vsel %vm810, %v765, 0
        %v845 = vsel %vm810, %v766, 0
        %v848 = vsel %vm810, %v767, 0
        %v851 = vsel %vm810, %v768, 0
        %v854 = vsel %vm810, %v769, 0
        %v857 = vsel %vm810, %v770, 0
        %859 = vmatprep.subr.bf16.mxu0 0
        %860 = vmatpush1.bf16.msra.mxu0 %v802
        %861 = vmatprep.subr.bf16.mxu0 0
        %862 = vmatpush1.bf16.msra.mxu0 %v803
        %863 = vmatprep.subr.bf16.mxu0 0
        %864 = vmatpush1.bf16.msra.mxu0 %v804
        %865 = vmatprep.subr.bf16.mxu0 0
        %866 = vmatpush1.bf16.msra.mxu0 %v805
        %867 = vmatprep.subr.bf16.mxu0 0
        %868 = vmatpush1.bf16.msra.mxu0 0
        %869 = vmatprep.subr.bf16.mxu0 0
        %870 = vmatpush1.bf16.msra.mxu0 0
        %871 = vmatprep.subr.bf16.mxu0 0
        %872 = vmatpush1.bf16.msra.mxu0 0
        %873 = vmatprep.subr.bf16.mxu0 0
        %874 = vmatpush1.bf16.msra.mxu0 0
        %875 = vmatprep.subr.bf16.mxu0 0
        %876 = vmatpush1.bf16.msra.mxu0 0
        %877 = vmatprep.subr.bf16.mxu0 0
        %878 = vmatpush1.bf16.msra.mxu0 0
        %879 = vmatprep.subr.bf16.mxu0 0
        %880 = vmatpush1.bf16.msra.mxu0 0
        %881 = vmatprep.subr.bf16.mxu0 0
        %882 = vmatpush1.bf16.msra.mxu0 0
        %883 = vmatprep.subr.bf16.mxu0 0
        %884 = vmatpush1.bf16.msra.mxu0 0
        %885 = vmatprep.subr.bf16.mxu0 0
        %886 = vmatpush1.bf16.msra.mxu0 0
        %887 = vmatprep.subr.bf16.mxu0 0
        %888 = vmatpush1.bf16.msra.mxu0 0
        %889 = vmatprep.subr.bf16.mxu0 0
        %890 = vmatpush1.bf16.msra.mxu0 0
        %891 = vmatprep.mubr.bf16.mxu0 0
        %892 = vmatmul.mubr.bf16.gmra.mrb[0].mxu0 %v812
        %v893 = vpop.f32.mrb[0].mxu0
        %v894 = vadd.f32 %v784, %v893
        %v895 = vpop.f32.mrb[0].mxu0
        %v896 = vpop.f32.mrb[0].mxu0
        %v897 = vadd.f32 %v784, %v896
        %v898 = vpop.f32.mrb[0].mxu0
        %899 = vmatprep.mubr.bf16.mxu0 0
        %900 = vmatmul.mubr.bf16.gmra.mrb[0].mxu0 %v815
        %v901 = vpop.f32.mrb[0].mxu0
        %v902 = vadd.f32 %v784, %v901
        %v903 = vpop.f32.mrb[0].mxu0
        %v904 = vpop.f32.mrb[0].mxu0
        %v905 = vadd.f32 %v784, %v904
        %v906 = vpop.f32.mrb[0].mxu0
        %907 = vmatprep.mubr.bf16.mxu0 0
        %908 = vmatmul.mubr.bf16.gmra.mrb[0].mxu0 %v818
        %v909 = vpop.f32.mrb[0].mxu0
        %v910 = vadd.f32 %v784, %v909
        %v911 = vpop.f32.mrb[0].mxu0
        %v912 = vpop.f32.mrb[0].mxu0
        %v913 = vadd.f32 %v784, %v912
        %v914 = vpop.f32.mrb[0].mxu0
        %915 = vmatprep.mubr.bf16.mxu0 0
        %916 = vmatmul.mubr.bf16.gmra.mrb[0].mxu0 %v821
        %v917 = vpop.f32.mrb[0].mxu0
        %v918 = vadd.f32 %v784, %v917
        %v919 = vpop.f32.mrb[0].mxu0
        %v920 = vpop.f32.mrb[0].mxu0
        %v921 = vadd.f32 %v784, %v920
        %v922 = vpop.f32.mrb[0].mxu0
        %923 = vmatprep.mubr.bf16.mxu0 0
        %924 = vmatmul.mubr.bf16.gmra.mrb[0].mxu0 %v824
        %v925 = vpop.f32.mrb[0].mxu0
        %v926 = vadd.f32 %v784, %v925
        %v927 = vpop.f32.mrb[0].mxu0
        %v928 = vpop.f32.mrb[0].mxu0
        %v929 = vadd.f32 %v784, %v928
        %v930 = vpop.f32.mrb[0].mxu0
        %931 = vmatprep.mubr.bf16.mxu0 0
        %932 = vmatmul.mubr.bf16.gmra.mrb[0].mxu0 %v827
        %v933 = vpop.f32.mrb[0].mxu0
        %v934 = vadd.f32 %v784, %v933
        %v935 = vpop.f32.mrb[0].mxu0
        %v936 = vpop.f32.mrb[0].mxu0
        %v937 = vadd.f32 %v784, %v936
        %v938 = vpop.f32.mrb[0].mxu0
        %939 = vmatprep.mubr.bf16.mxu0 0
        %940 = vmatmul.mubr.bf16.gmra.mrb[0].mxu0 %v830
        %v941 = vpop.f32.mrb[0].mxu0
        %v942 = vadd.f32 %v784, %v941
        %v943 = vpop.f32.mrb[0].mxu0
        %v944 = vpop.f32.mrb[0].mxu0
        %v945 = vadd.f32 %v784, %v944
        %v946 = vpop.f32.mrb[0].mxu0
        %947 = vmatprep.mubr.bf16.mxu0 0
        %948 = vmatmul.mubr.bf16.gmra.mrb[0].mxu0 %v833
        %v949 = vpop.f32.mrb[0].mxu0
        %v950 = vadd.f32 %v784, %v949
        %v951 = vpop.f32.mrb[0].mxu0
        %v952 = vpop.f32.mrb[0].mxu0
        %v953 = vadd.f32 %v784, %v952
        %v954 = vpop.f32.mrb[0].mxu0
        %955 = vmatprep.mubr.bf16.mxu0 0
        %956 = vmatmul.mubr.bf16.gmra.mrb[0].mxu0 %v836
        %v957 = vpop.f32.mrb[0].mxu0
        %v958 = vadd.f32 %v784, %v957
        %v959 = vpop.f32.mrb[0].mxu0
        %v960 = vpop.f32.mrb[0].mxu0
        %v961 = vadd.f32 %v784, %v960
        %v962 = vpop.f32.mrb[0].mxu0
        %963 = vmatprep.mubr.bf16.mxu0 0
        %964 = vmatmul.mubr.bf16.gmra.mrb[0].mxu0 %v839
        %v965 = vpop.f32.mrb[0].mxu0
        %v966 = vadd.f32 %v784, %v965
        %v967 = vpop.f32.mrb[0].mxu0
        %v968 = vpop.f32.mrb[0].mxu0
        %v969 = vadd.f32 %v784, %v968
        %v970 = vpop.f32.mrb[0].mxu0
        %971 = vmatprep.mubr.bf16.mxu0 0
        %972 = vmatmul.mubr.bf16.gmra.mrb[0].mxu0 %v842
        %v973 = vpop.f32.mrb[0].mxu0
        %v974 = vadd.f32 %v784, %v973
        %v975 = vpop.f32.mrb[0].mxu0
        %v976 = vpop.f32.mrb[0].mxu0
        %v977 = vadd.f32 %v784, %v976
        %v978 = vpop.f32.mrb[0].mxu0
        %979 = vmatprep.mubr.bf16.mxu0 0
        %980 = vmatmul.mubr.bf16.gmra.mrb[0].mxu0 %v845
        %v981 = vpop.f32.mrb[0].mxu0
        %v982 = vadd.f32 %v784, %v981
        %v983 = vpop.f32.mrb[0].mxu0
        %v984 = vpop.f32.mrb[0].mxu0
        %v985 = vadd.f32 %v784, %v984
        %v986 = vpop.f32.mrb[0].mxu0
        %987 = vmatprep.mubr.bf16.mxu0 0
        %988 = vmatmul.mubr.bf16.gmra.mrb[0].mxu0 %v848
        %v989 = vpop.f32.mrb[0].mxu0
        %v990 = vadd.f32 %v784, %v989
        %v991 = vpop.f32.mrb[0].mxu0
        %v992 = vpop.f32.mrb[0].mxu0
        %v993 = vadd.f32 %v784, %v992
        %v994 = vpop.f32.mrb[0].mxu0
        %995 = vmatprep.mubr.bf16.mxu0 0
        %996 = vmatmul.mubr.bf16.gmra.mrb[0].mxu0 %v851
        %v997 = vpop.f32.mrb[0].mxu0
        %v998 = vadd.f32 %v784, %v997
        %v999 = vpop.f32.mrb[0].mxu0
        %v1000 = vpop.f32.mrb[0].mxu0
        %v1001 = vadd.f32 %v784, %v1000
        %v1002 = vpop.f32.mrb[0].mxu0
        %1003 = vmatprep.mubr.bf16.mxu0 0
        %1004 = vmatmul.mubr.bf16.gmra.mrb[0].mxu0 %v854
        %v1005 = vpop.f32.mrb[0].mxu0
        %v1006 = vadd.f32 %v784, %v1005
        %v1007 = vpop.f32.mrb[0].mxu0
        %v1008 = vpop.f32.mrb[0].mxu0
        %v1009 = vadd.f32 %v784, %v1008
        %v1010 = vpop.f32.mrb[0].mxu0
        %1011 = vmatprep.mubr.bf16.mxu0 0
        %1012 = vmatmul.mubr.bf16.gmra.mrb[0].mxu0 %v857
        %v1013 = vpop.f32.mrb[0].mxu0
        %v1014 = vadd.f32 %v784, %v1013
        %v1015 = vpop.f32.mrb[0].mxu0
        %v1016 = vpop.f32.mrb[0].mxu0
        %v1017 = vadd.f32 %v784, %v1016
        %v1018 = vpop.f32.mrb[0].mxu0
        %1019 = vdwg.mxu0
        %vm1020 = vcmp.gt.f32.partialorder %v894, 0.0
        %vm1021 = vcmp.gt.f32.partialorder %v897, 0.0
        %vm1022 = vcmp.gt.f32.partialorder %v902, 0.0
        %vm1023 = vcmp.gt.f32.partialorder %v905, 0.0
        %vm1024 = vcmp.gt.f32.partialorder %v910, 0.0
        %vm1025 = vcmp.gt.f32.partialorder %v913, 0.0
        %vm1026 = vcmp.gt.f32.partialorder %v918, 0.0
        %vm1027 = vcmp.gt.f32.partialorder %v921, 0.0
        %vm1028 = vcmp.gt.f32.partialorder %v926, 0.0
        %vm1029 = vcmp.gt.f32.partialorder %v929, 0.0
        %vm1030 = vcmp.gt.f32.partialorder %v934, 0.0
        %vm1031 = vcmp.gt.f32.partialorder %v937, 0.0
        %vm1032 = vcmp.gt.f32.partialorder %v942, 0.0
        %vm1033 = vcmp.gt.f32.partialorder %v945, 0.0
        %vm1034 = vcmp.gt.f32.partialorder %v950, 0.0
        %vm1035 = vcmp.gt.f32.partialorder %v953, 0.0
        %vm1036 = vcmp.gt.f32.partialorder %v958, 0.0
        %vm1037 = vcmp.gt.f32.partialorder %v961, 0.0
        %vm1038 = vcmp.gt.f32.partialorder %v966, 0.0
        %vm1039 = vcmp.gt.f32.partialorder %v969, 0.0
        %vm1040 = vcmp.gt.f32.partialorder %v974, 0.0
        %vm1041 = vcmp.gt.f32.partialorder %v977, 0.0
        %vm1042 = vcmp.gt.f32.partialorder %v982, 0.0
        %vm1043 = vcmp.gt.f32.partialorder %v985, 0.0
        %vm1044 = vcmp.gt.f32.partialorder %v990, 0.0
        %vm1045 = vcmp.gt.f32.partialorder %v993, 0.0
        %vm1046 = vcmp.gt.f32.partialorder %v998, 0.0
        %vm1047 = vcmp.gt.f32.partialorder %v1001, 0.0
        %vm1048 = vcmp.gt.f32.partialorder %v1006, 0.0
        %vm1049 = vcmp.gt.f32.partialorder %v1009, 0.0
        %vm1050 = vcmp.gt.f32.partialorder %v1014, 0.0
        %vm1051 = vcmp.gt.f32.partialorder %v1017, 0.0
        %v1052 = vmul.f32 %v894, 0.01
        %v1053 = vmul.f32 %v897, 0.01
        %v1054 = vmul.f32 %v902, 0.01
        %v1055 = vmul.f32 %v905, 0.01
        %v1056 = vmul.f32 %v910, 0.01
        %v1057 = vmul.f32 %v913, 0.01
        %v1058 = vmul.f32 %v918, 0.01
        %v1059 = vmul.f32 %v921, 0.01
        %v1060 = vmul.f32 %v926, 0.01
        %v1061 = vmul.f32 %v929, 0.01
        %v1062 = vmul.f32 %v934, 0.01
        %v1063 = vmul.f32 %v937, 0.01
        %v1064 = vmul.f32 %v942, 0.01
        %v1065 = vmul.f32 %v945, 0.01
        %v1066 = vmul.f32 %v950, 0.01
        %v1067 = vmul.f32 %v953, 0.01
        %v1068 = vmul.f32 %v958, 0.01
        %v1069 = vmul.f32 %v961, 0.01
        %v1070 = vmul.f32 %v966, 0.01
        %v1071 = vmul.f32 %v969, 0.01
        %v1072 = vmul.f32 %v974, 0.01
        %v1073 = vmul.f32 %v977, 0.01
        %v1074 = vmul.f32 %v982, 0.01
        %v1075 = vmul.f32 %v985, 0.01
        %v1076 = vmul.f32 %v990, 0.01
        %v1077 = vmul.f32 %v993, 0.01
        %v1078 = vmul.f32 %v998, 0.01
        %v1079 = vmul.f32 %v1001, 0.01
        %v1080 = vmul.f32 %v1006, 0.01
        %v1081 = vmul.f32 %v1009, 0.01
        %v1082 = vmul.f32 %v1014, 0.01
        %v1083 = vmul.f32 %v1017, 0.01
        %v1084 = vsel %vm1020, %v894, %v1052
        %v1085 = vsel %vm1021, %v897, %v1053
        %v1086 = vsel %vm1022, %v902, %v1054
        %v1087 = vsel %vm1023, %v905, %v1055
        %v1088 = vsel %vm1024, %v910, %v1056
        %v1089 = vsel %vm1025, %v913, %v1057
        %v1090 = vsel %vm1026, %v918, %v1058
        %v1091 = vsel %vm1027, %v921, %v1059
        %v1092 = vsel %vm1028, %v926, %v1060
        %v1093 = vsel %vm1029, %v929, %v1061
        %v1094 = vsel %vm1030, %v934, %v1062
        %v1095 = vsel %vm1031, %v937, %v1063
        %v1096 = vsel %vm1032, %v942, %v1064
        %v1097 = vsel %vm1033, %v945, %v1065
        %v1098 = vsel %vm1034, %v950, %v1066
        %v1099 = vsel %vm1035, %v953, %v1067
        %v1100 = vsel %vm1036, %v958, %v1068
        %v1101 = vsel %vm1037, %v961, %v1069
        %v1102 = vsel %vm1038, %v966, %v1070
        %v1103 = vsel %vm1039, %v969, %v1071
        %v1104 = vsel %vm1040, %v974, %v1072
        %v1105 = vsel %vm1041, %v977, %v1073
        %v1106 = vsel %vm1042, %v982, %v1074
        %v1107 = vsel %vm1043, %v985, %v1075
        %v1108 = vsel %vm1044, %v990, %v1076
        %v1109 = vsel %vm1045, %v993, %v1077
        %v1110 = vsel %vm1046, %v998, %v1078
        %v1111 = vsel %vm1047, %v1001, %v1079
        %v1112 = vsel %vm1048, %v1006, %v1080
        %v1113 = vsel %vm1049, %v1009, %v1081
        %v1114 = vsel %vm1050, %v1014, %v1082
        %v1115 = vsel %vm1051, %v1017, %v1083
        %v1116 = vpack.c.bf16 %v1085, %v1084
        %v1117 = vpack.c.bf16 %v1087, %v1086
        %v1118 = vpack.c.bf16 %v1089, %v1088
        %v1119 = vpack.c.bf16 %v1091, %v1090
        %v1120 = vpack.c.bf16 %v1093, %v1092
        %v1121 = vpack.c.bf16 %v1095, %v1094
        %v1122 = vpack.c.bf16 %v1097, %v1096
        %v1123 = vpack.c.bf16 %v1099, %v1098
        %v1124 = vpack.c.bf16 %v1101, %v1100
        %v1125 = vpack.c.bf16 %v1103, %v1102
        %v1126 = vpack.c.bf16 %v1105, %v1104
        %v1127 = vpack.c.bf16 %v1107, %v1106
        %v1128 = vpack.c.bf16 %v1109, %v1108
        %v1129 = vpack.c.bf16 %v1111, %v1110
        %v1130 = vpack.c.bf16 %v1113, %v1112
        %v1131 = vpack.c.bf16 %v1115, %v1114
        %v1132 = vld [vmem:[%s5] sm:$0xf]
        %v1133 = vld [vmem:[%s5 + $0x4] sm:$0xf]
        %v1134 = vld [vmem:[%s5 + $0x8] sm:$0xf]
        %v1135 = vld [vmem:[%s5 + $0xc] sm:$0xf]
        %v1136 = vld [vmem:[%s5 + $0x10] sm:$0xf]
        %v1137 = vld [vmem:[%s5 + $0x14] sm:$0xf]
        %v1138 = vld [vmem:[%s5 + $0x18] sm:$0xf]
        %v1139 = vld [vmem:[%s5 + $0x1c] sm:$0xf]
        %v1140 = vld [vmem:[%s5 + $0x20] sm:$0xf]
        %v1141 = vld [vmem:[%s5 + $0x24] sm:$0xf]
        %v1142 = vld [vmem:[%s5 + $0x28] sm:$0xf]
        %v1143 = vld [vmem:[%s5 + $0x2c] sm:$0xf]
        %v1144 = vld [vmem:[%s5 + $0x30] sm:$0xf]
        %v1145 = vld [vmem:[%s5 + $0x34] sm:$0xf]
        %v1146 = vld [vmem:[%s5 + $0x38] sm:$0xf]
        %v1147 = vld [vmem:[%s5 + $0x3c] sm:$0xf]
        %v1164 = vunpack.c.l.b16 %v1132
        %v1165 = vunpack.c.l.b16 %v1133
        %v1166 = vunpack.c.l.b16 %v1134
        %v1167 = vunpack.c.l.b16 %v1135
        %v1168 = vunpack.c.l.b16 %v1136
        %v1169 = vunpack.c.l.b16 %v1137
        %v1170 = vunpack.c.l.b16 %v1138
        %v1171 = vunpack.c.l.b16 %v1139
        %v1172 = vunpack.c.l.b16 %v1140
        %v1173 = vunpack.c.l.b16 %v1141
        %v1174 = vunpack.c.l.b16 %v1142
        %v1175 = vunpack.c.l.b16 %v1143
        %v1176 = vunpack.c.l.b16 %v1144
        %v1177 = vunpack.c.l.b16 %v1145
        %v1178 = vunpack.c.l.b16 %v1146
        %v1179 = vunpack.c.l.b16 %v1147
        %v1180 = vpack.c.b16 %v1165, %v1164
        %v1181 = vpack.c.b16 %v1167, %v1166
        %v1182 = vpack.c.b16 %v1169, %v1168
        %v1183 = vpack.c.b16 %v1171, %v1170
        %v1184 = vpack.c.b16 %v1173, %v1172
        %v1185 = vpack.c.b16 %v1175, %v1174
        %v1186 = vpack.c.b16 %v1177, %v1176
        %v1187 = vpack.c.b16 %v1179, %v1178
        %1196 = vmatprep.subr.bf16.mxu0 0
        %1197 = vmatpush1.bf16.msra.mxu0 %v1180
        %1198 = vmatprep.subr.bf16.mxu0 0
        %1199 = vmatpush1.bf16.msra.mxu0 %v1181
        %1200 = vmatprep.subr.bf16.mxu0 0
        %1201 = vmatpush1.bf16.msra.mxu0 %v1182
        %1202 = vmatprep.subr.bf16.mxu0 0
        %1203 = vmatpush1.bf16.msra.mxu0 %v1183
        %1204 = vmatprep.subr.bf16.mxu0 0
        %1205 = vmatpush1.bf16.msra.mxu0 %v1184
        %1206 = vmatprep.subr.bf16.mxu0 0
        %1207 = vmatpush1.bf16.msra.mxu0 %v1185
        %1208 = vmatprep.subr.bf16.mxu0 0
        %1209 = vmatpush1.bf16.msra.mxu0 %v1186
        %1210 = vmatprep.subr.bf16.mxu0 0
        %1211 = vmatpush1.bf16.msra.mxu0 %v1187
        %1212 = vmatprep.subr.bf16.mxu0 0
        %1213 = vmatpush1.bf16.msra.mxu0 0
        %1214 = vmatprep.subr.bf16.mxu0 0
        %1215 = vmatpush1.bf16.msra.mxu0 0
        %1216 = vmatprep.subr.bf16.mxu0 0
        %1217 = vmatpush1.bf16.msra.mxu0 0
        %1218 = vmatprep.subr.bf16.mxu0 0
        %1219 = vmatpush1.bf16.msra.mxu0 0
        %1220 = vmatprep.subr.bf16.mxu0 0
        %1221 = vmatpush1.bf16.msra.mxu0 0
        %1222 = vmatprep.subr.bf16.mxu0 0
        %1223 = vmatpush1.bf16.msra.mxu0 0
        %1224 = vmatprep.subr.bf16.mxu0 0
        %1225 = vmatpush1.bf16.msra.mxu0 0
        %1226 = vmatprep.subr.bf16.mxu0 0
        %1227 = vmatpush1.bf16.msra.mxu0 0
        %1228 = vmatprep.mubr.bf16.mxu0 0
        %1229 = vmatmul.mubr.bf16.gmra.mrb[0].mxu0 %v1116
        %v1230 = vpop.f32.mrb[0].mxu0
        %v1231 = vadd.f32 0.0, %v1230
        %v1232 = vpop.f32.mrb[0].mxu0
        %v1233 = vpop.f32.mrb[0].mxu0
        %v1234 = vadd.f32 0.0, %v1233
        %v1235 = vpop.f32.mrb[0].mxu0
        %1236 = vmatprep.mubr.bf16.mxu0 0
        %1237 = vmatmul.mubr.bf16.gmra.mrb[0].mxu0 %v1117
        %v1238 = vpop.f32.mrb[0].mxu0
        %v1239 = vadd.f32 0.0, %v1238
        %v1240 = vpop.f32.mrb[0].mxu0
        %v1241 = vpop.f32.mrb[0].mxu0
        %v1242 = vadd.f32 0.0, %v1241
        %v1243 = vpop.f32.mrb[0].mxu0
        %1244 = vmatprep.mubr.bf16.mxu0 0
        %1245 = vmatmul.mubr.bf16.gmra.mrb[0].mxu0 %v1118
        %v1246 = vpop.f32.mrb[0].mxu0
        %v1247 = vadd.f32 0.0, %v1246
        %v1248 = vpop.f32.mrb[0].mxu0
        %v1249 = vpop.f32.mrb[0].mxu0
        %v1250 = vadd.f32 0.0, %v1249
        %v1251 = vpop.f32.mrb[0].mxu0
        %1252 = vmatprep.mubr.bf16.mxu0 0
        %1253 = vmatmul.mubr.bf16.gmra.mrb[0].mxu0 %v1119
        %v1254 = vpop.f32.mrb[0].mxu0
        %v1255 = vadd.f32 0.0, %v1254
        %v1256 = vpop.f32.mrb[0].mxu0
        %v1257 = vpop.f32.mrb[0].mxu0
        %v1258 = vadd.f32 0.0, %v1257
        %v1259 = vpop.f32.mrb[0].mxu0
        %1260 = vmatprep.mubr.bf16.mxu0 0
        %1261 = vmatmul.mubr.bf16.gmra.mrb[0].mxu0 %v1120
        %v1262 = vpop.f32.mrb[0].mxu0
        %v1263 = vadd.f32 0.0, %v1262
        %v1264 = vpop.f32.mrb[0].mxu0
        %v1265 = vpop.f32.mrb[0].mxu0
        %v1266 = vadd.f32 0.0, %v1265
        %v1267 = vpop.f32.mrb[0].mxu0
        %1268 = vmatprep.mubr.bf16.mxu0 0
        %1269 = vmatmul.mubr.bf16.gmra.mrb[0].mxu0 %v1121
        %v1270 = vpop.f32.mrb[0].mxu0
        %v1271 = vadd.f32 0.0, %v1270
        %v1272 = vpop.f32.mrb[0].mxu0
        %v1273 = vpop.f32.mrb[0].mxu0
        %v1274 = vadd.f32 0.0, %v1273
        %v1275 = vpop.f32.mrb[0].mxu0
        %1276 = vmatprep.mubr.bf16.mxu0 0
        %1277 = vmatmul.mubr.bf16.gmra.mrb[0].mxu0 %v1122
        %v1278 = vpop.f32.mrb[0].mxu0
        %v1279 = vadd.f32 0.0, %v1278
        %v1280 = vpop.f32.mrb[0].mxu0
        %v1281 = vpop.f32.mrb[0].mxu0
        %v1282 = vadd.f32 0.0, %v1281
        %v1283 = vpop.f32.mrb[0].mxu0
        %1284 = vmatprep.mubr.bf16.mxu0 0
        %1285 = vmatmul.mubr.bf16.gmra.mrb[0].mxu0 %v1123
        %v1286 = vpop.f32.mrb[0].mxu0
        %v1287 = vadd.f32 0.0, %v1286
        %v1288 = vpop.f32.mrb[0].mxu0
        %v1289 = vpop.f32.mrb[0].mxu0
        %v1290 = vadd.f32 0.0, %v1289
        %v1291 = vpop.f32.mrb[0].mxu0
        %1292 = vmatprep.mubr.bf16.mxu0 0
        %1293 = vmatmul.mubr.bf16.gmra.mrb[0].mxu0 %v1124
        %v1294 = vpop.f32.mrb[0].mxu0
        %v1295 = vadd.f32 0.0, %v1294
        %v1296 = vpop.f32.mrb[0].mxu0
        %v1297 = vpop.f32.mrb[0].mxu0
        %v1298 = vadd.f32 0.0, %v1297
        %v1299 = vpop.f32.mrb[0].mxu0
        %1300 = vmatprep.mubr.bf16.mxu0 0
        %1301 = vmatmul.mubr.bf16.gmra.mrb[0].mxu0 %v1125
        %v1302 = vpop.f32.mrb[0].mxu0
        %v1303 = vadd.f32 0.0, %v1302
        %v1304 = vpop.f32.mrb[0].mxu0
        %v1305 = vpop.f32.mrb[0].mxu0
        %v1306 = vadd.f32 0.0, %v1305
        %v1307 = vpop.f32.mrb[0].mxu0
        %1308 = vmatprep.mubr.bf16.mxu0 0
        %1309 = vmatmul.mubr.bf16.gmra.mrb[0].mxu0 %v1126
        %v1310 = vpop.f32.mrb[0].mxu0
        %v1311 = vadd.f32 0.0, %v1310
        %v1312 = vpop.f32.mrb[0].mxu0
        %v1313 = vpop.f32.mrb[0].mxu0
        %v1314 = vadd.f32 0.0, %v1313
        %v1315 = vpop.f32.mrb[0].mxu0
        %1316 = vmatprep.mubr.bf16.mxu0 0
        %1317 = vmatmul.mubr.bf16.gmra.mrb[0].mxu0 %v1127
        %v1318 = vpop.f32.mrb[0].mxu0
        %v1319 = vadd.f32 0.0, %v1318
        %v1320 = vpop.f32.mrb[0].mxu0
        %v1321 = vpop.f32.mrb[0].mxu0
        %v1322 = vadd.f32 0.0, %v1321
        %v1323 = vpop.f32.mrb[0].mxu0
        %1324 = vmatprep.mubr.bf16.mxu0 0
        %1325 = vmatmul.mubr.bf16.gmra.mrb[0].mxu0 %v1128
        %v1326 = vpop.f32.mrb[0].mxu0
        %v1327 = vadd.f32 0.0, %v1326
        %v1328 = vpop.f32.mrb[0].mxu0
        %v1329 = vpop.f32.mrb[0].mxu0
        %v1330 = vadd.f32 0.0, %v1329
        %v1331 = vpop.f32.mrb[0].mxu0
        %1332 = vmatprep.mubr.bf16.mxu0 0
        %1333 = vmatmul.mubr.bf16.gmra.mrb[0].mxu0 %v1129
        %v1334 = vpop.f32.mrb[0].mxu0
        %v1335 = vadd.f32 0.0, %v1334
        %v1336 = vpop.f32.mrb[0].mxu0
        %v1337 = vpop.f32.mrb[0].mxu0
        %v1338 = vadd.f32 0.0, %v1337
        %v1339 = vpop.f32.mrb[0].mxu0
        %1340 = vmatprep.mubr.bf16.mxu0 0
        %1341 = vmatmul.mubr.bf16.gmra.mrb[0].mxu0 %v1130
        %v1342 = vpop.f32.mrb[0].mxu0
        %v1343 = vadd.f32 0.0, %v1342
        %v1344 = vpop.f32.mrb[0].mxu0
        %v1345 = vpop.f32.mrb[0].mxu0
        %v1346 = vadd.f32 0.0, %v1345
        %v1347 = vpop.f32.mrb[0].mxu0
        %1348 = vmatprep.mubr.bf16.mxu0 0
        %1349 = vmatmul.mubr.bf16.gmra.mrb[0].mxu0 %v1131
        %v1350 = vpop.f32.mrb[0].mxu0
        %v1351 = vadd.f32 0.0, %v1350
        %v1352 = vpop.f32.mrb[0].mxu0
        %v1353 = vpop.f32.mrb[0].mxu0
        %v1354 = vadd.f32 0.0, %v1353
        %v1355 = vpop.f32.mrb[0].mxu0
        %1356 = vdwg.mxu0
        %v1357 = vadd.f32 %v1084, %v1231
        %v1358 = vadd.f32 %v1085, %v1234
        %v1359 = vadd.f32 %v1086, %v1239
        %v1360 = vadd.f32 %v1087, %v1242
        %v1361 = vadd.f32 %v1088, %v1247
        %v1362 = vadd.f32 %v1089, %v1250
        %v1363 = vadd.f32 %v1090, %v1255
        %v1364 = vadd.f32 %v1091, %v1258
        %v1365 = vadd.f32 %v1092, %v1263
        %v1366 = vadd.f32 %v1093, %v1266
        %v1367 = vadd.f32 %v1094, %v1271
        %v1368 = vadd.f32 %v1095, %v1274
        %v1369 = vadd.f32 %v1096, %v1279
        %v1370 = vadd.f32 %v1097, %v1282
        %v1371 = vadd.f32 %v1098, %v1287
        %v1372 = vadd.f32 %v1099, %v1290
        %v1373 = vadd.f32 %v1100, %v1295
        %v1374 = vadd.f32 %v1101, %v1298
        %v1375 = vadd.f32 %v1102, %v1303
        %v1376 = vadd.f32 %v1103, %v1306
        %v1377 = vadd.f32 %v1104, %v1311
        %v1378 = vadd.f32 %v1105, %v1314
        %v1379 = vadd.f32 %v1106, %v1319
        %v1380 = vadd.f32 %v1107, %v1322
        %v1381 = vadd.f32 %v1108, %v1327
        %v1382 = vadd.f32 %v1109, %v1330
        %v1383 = vadd.f32 %v1110, %v1335
        %v1384 = vadd.f32 %v1111, %v1338
        %v1385 = vadd.f32 %v1112, %v1343
        %v1386 = vadd.f32 %v1113, %v1346
        %v1387 = vadd.f32 %v1114, %v1351
        %v1388 = vadd.f32 %v1115, %v1354
        %v1389 = vld [vmem:[%s6] sm:$0x1]
        %v1391 = vlaneseq
        %v1392 = vshrl.u32 %v1391, 7
        %v1393 = vsub.s32 0, %v1392
        %v1394 = vrot.slane %v1389, %v1393
        %v1396 = vadd.f32 %v1357, %v1394
        %v1397 = vadd.f32 %v1358, %v1394
        %v1398 = vadd.f32 %v1359, %v1394
        %v1399 = vadd.f32 %v1360, %v1394
        %v1400 = vadd.f32 %v1361, %v1394
        %v1401 = vadd.f32 %v1362, %v1394
        %v1402 = vadd.f32 %v1363, %v1394
        %v1403 = vadd.f32 %v1364, %v1394
        %v1404 = vadd.f32 %v1365, %v1394
        %v1405 = vadd.f32 %v1366, %v1394
        %v1406 = vadd.f32 %v1367, %v1394
        %v1407 = vadd.f32 %v1368, %v1394
        %v1408 = vadd.f32 %v1369, %v1394
        %v1409 = vadd.f32 %v1370, %v1394
        %v1410 = vadd.f32 %v1371, %v1394
        %v1411 = vadd.f32 %v1372, %v1394
        %v1412 = vadd.f32 %v1373, %v1394
        %v1413 = vadd.f32 %v1374, %v1394
        %v1414 = vadd.f32 %v1375, %v1394
        %v1415 = vadd.f32 %v1376, %v1394
        %v1416 = vadd.f32 %v1377, %v1394
        %v1417 = vadd.f32 %v1378, %v1394
        %v1418 = vadd.f32 %v1379, %v1394
        %v1419 = vadd.f32 %v1380, %v1394
        %v1420 = vadd.f32 %v1381, %v1394
        %v1421 = vadd.f32 %v1382, %v1394
        %v1422 = vadd.f32 %v1383, %v1394
        %v1423 = vadd.f32 %v1384, %v1394
        %v1424 = vadd.f32 %v1385, %v1394
        %v1425 = vadd.f32 %v1386, %v1394
        %v1426 = vadd.f32 %v1387, %v1394
        %v1427 = vadd.f32 %v1388, %v1394
        %vm1428 = vcmp.gt.f32.partialorder %v1396, 0.0
        %vm1429 = vcmp.gt.f32.partialorder %v1397, 0.0
        %vm1430 = vcmp.gt.f32.partialorder %v1398, 0.0
        %vm1431 = vcmp.gt.f32.partialorder %v1399, 0.0
        %vm1432 = vcmp.gt.f32.partialorder %v1400, 0.0
        %vm1433 = vcmp.gt.f32.partialorder %v1401, 0.0
        %vm1434 = vcmp.gt.f32.partialorder %v1402, 0.0
        %vm1435 = vcmp.gt.f32.partialorder %v1403, 0.0
        %vm1436 = vcmp.gt.f32.partialorder %v1404, 0.0
        %vm1437 = vcmp.gt.f32.partialorder %v1405, 0.0
        %vm1438 = vcmp.gt.f32.partialorder %v1406, 0.0
        %vm1439 = vcmp.gt.f32.partialorder %v1407, 0.0
        %vm1440 = vcmp.gt.f32.partialorder %v1408, 0.0
        %vm1441 = vcmp.gt.f32.partialorder %v1409, 0.0
        %vm1442 = vcmp.gt.f32.partialorder %v1410, 0.0
        %vm1443 = vcmp.gt.f32.partialorder %v1411, 0.0
        %vm1444 = vcmp.gt.f32.partialorder %v1412, 0.0
        %vm1445 = vcmp.gt.f32.partialorder %v1413, 0.0
        %vm1446 = vcmp.gt.f32.partialorder %v1414, 0.0
        %vm1447 = vcmp.gt.f32.partialorder %v1415, 0.0
        %vm1448 = vcmp.gt.f32.partialorder %v1416, 0.0
        %vm1449 = vcmp.gt.f32.partialorder %v1417, 0.0
        %vm1450 = vcmp.gt.f32.partialorder %v1418, 0.0
        %vm1451 = vcmp.gt.f32.partialorder %v1419, 0.0
        %vm1452 = vcmp.gt.f32.partialorder %v1420, 0.0
        %vm1453 = vcmp.gt.f32.partialorder %v1421, 0.0
        %vm1454 = vcmp.gt.f32.partialorder %v1422, 0.0
        %vm1455 = vcmp.gt.f32.partialorder %v1423, 0.0
        %vm1456 = vcmp.gt.f32.partialorder %v1424, 0.0
        %vm1457 = vcmp.gt.f32.partialorder %v1425, 0.0
        %vm1458 = vcmp.gt.f32.partialorder %v1426, 0.0
        %vm1459 = vcmp.gt.f32.partialorder %v1427, 0.0
        %v1460 = vmul.f32 %v1396, 0.01
        %v1461 = vmul.f32 %v1397, 0.01
        %v1462 = vmul.f32 %v1398, 0.01
        %v1463 = vmul.f32 %v1399, 0.01
        %v1464 = vmul.f32 %v1400, 0.01
        %v1465 = vmul.f32 %v1401, 0.01
        %v1466 = vmul.f32 %v1402, 0.01
        %v1467 = vmul.f32 %v1403, 0.01
        %v1468 = vmul.f32 %v1404, 0.01
        %v1469 = vmul.f32 %v1405, 0.01
        %v1470 = vmul.f32 %v1406, 0.01
        %v1471 = vmul.f32 %v1407, 0.01
        %v1472 = vmul.f32 %v1408, 0.01
        %v1473 = vmul.f32 %v1409, 0.01
        %v1474 = vmul.f32 %v1410, 0.01
        %v1475 = vmul.f32 %v1411, 0.01
        %v1476 = vmul.f32 %v1412, 0.01
        %v1477 = vmul.f32 %v1413, 0.01
        %v1478 = vmul.f32 %v1414, 0.01
        %v1479 = vmul.f32 %v1415, 0.01
        %v1480 = vmul.f32 %v1416, 0.01
        %v1481 = vmul.f32 %v1417, 0.01
        %v1482 = vmul.f32 %v1418, 0.01
        %v1483 = vmul.f32 %v1419, 0.01
        %v1484 = vmul.f32 %v1420, 0.01
        %v1485 = vmul.f32 %v1421, 0.01
        %v1486 = vmul.f32 %v1422, 0.01
        %v1487 = vmul.f32 %v1423, 0.01
        %v1488 = vmul.f32 %v1424, 0.01
        %v1489 = vmul.f32 %v1425, 0.01
        %v1490 = vmul.f32 %v1426, 0.01
        %v1491 = vmul.f32 %v1427, 0.01
        %v1492 = vsel %vm1428, %v1396, %v1460
        %v1493 = vsel %vm1429, %v1397, %v1461
        %v1494 = vsel %vm1430, %v1398, %v1462
        %v1495 = vsel %vm1431, %v1399, %v1463
        %v1496 = vsel %vm1432, %v1400, %v1464
        %v1497 = vsel %vm1433, %v1401, %v1465
        %v1498 = vsel %vm1434, %v1402, %v1466
        %v1499 = vsel %vm1435, %v1403, %v1467
        %v1500 = vsel %vm1436, %v1404, %v1468
        %v1501 = vsel %vm1437, %v1405, %v1469
        %v1502 = vsel %vm1438, %v1406, %v1470
        %v1503 = vsel %vm1439, %v1407, %v1471
        %v1504 = vsel %vm1440, %v1408, %v1472
        %v1505 = vsel %vm1441, %v1409, %v1473
        %v1506 = vsel %vm1442, %v1410, %v1474
        %v1507 = vsel %vm1443, %v1411, %v1475
        %v1508 = vsel %vm1444, %v1412, %v1476
        %v1509 = vsel %vm1445, %v1413, %v1477
        %v1510 = vsel %vm1446, %v1414, %v1478
        %v1511 = vsel %vm1447, %v1415, %v1479
        %v1512 = vsel %vm1448, %v1416, %v1480
        %v1513 = vsel %vm1449, %v1417, %v1481
        %v1514 = vsel %vm1450, %v1418, %v1482
        %v1515 = vsel %vm1451, %v1419, %v1483
        %v1516 = vsel %vm1452, %v1420, %v1484
        %v1517 = vsel %vm1453, %v1421, %v1485
        %v1518 = vsel %vm1454, %v1422, %v1486
        %v1519 = vsel %vm1455, %v1423, %v1487
        %v1520 = vsel %vm1456, %v1424, %v1488
        %v1521 = vsel %vm1457, %v1425, %v1489
        %v1522 = vsel %vm1458, %v1426, %v1490
        %v1523 = vsel %vm1459, %v1427, %v1491
        %v1524 = vpack.c.bf16 %v1493, %v1492
        %v1525 = vpack.c.bf16 %v1495, %v1494
        %v1526 = vpack.c.bf16 %v1497, %v1496
        %v1527 = vpack.c.bf16 %v1499, %v1498
        %v1528 = vpack.c.bf16 %v1501, %v1500
        %v1529 = vpack.c.bf16 %v1503, %v1502
        %v1530 = vpack.c.bf16 %v1505, %v1504
        %v1531 = vpack.c.bf16 %v1507, %v1506
        %v1532 = vpack.c.bf16 %v1509, %v1508
        %v1533 = vpack.c.bf16 %v1511, %v1510
        %v1534 = vpack.c.bf16 %v1513, %v1512
        %v1535 = vpack.c.bf16 %v1515, %v1514
        %v1536 = vpack.c.bf16 %v1517, %v1516
        %v1537 = vpack.c.bf16 %v1519, %v1518
        %v1538 = vpack.c.bf16 %v1521, %v1520
        %v1539 = vpack.c.bf16 %v1523, %v1522
        %s1540 = scalar_lea.vmem %s5, 64
        %v1541 = vld [vmem:[%s1540] sm:$0xf]
        %v1542 = vld [vmem:[%s1540 + $0x4] sm:$0xf]
        %v1543 = vld [vmem:[%s1540 + $0x8] sm:$0xf]
        %v1544 = vld [vmem:[%s1540 + $0xc] sm:$0xf]
        %v1545 = vld [vmem:[%s1540 + $0x10] sm:$0xf]
        %v1546 = vld [vmem:[%s1540 + $0x14] sm:$0xf]
        %v1547 = vld [vmem:[%s1540 + $0x18] sm:$0xf]
        %v1548 = vld [vmem:[%s1540 + $0x1c] sm:$0xf]
        %v1549 = vld [vmem:[%s1540 + $0x20] sm:$0xf]
        %v1550 = vld [vmem:[%s1540 + $0x24] sm:$0xf]
        %v1551 = vld [vmem:[%s1540 + $0x28] sm:$0xf]
        %v1552 = vld [vmem:[%s1540 + $0x2c] sm:$0xf]
        %v1553 = vld [vmem:[%s1540 + $0x30] sm:$0xf]
        %v1554 = vld [vmem:[%s1540 + $0x34] sm:$0xf]
        %v1555 = vld [vmem:[%s1540 + $0x38] sm:$0xf]
        %v1556 = vld [vmem:[%s1540 + $0x3c] sm:$0xf]
        %v1573 = vunpack.c.l.b16 %v1541
        %v1574 = vunpack.c.l.b16 %v1542
        %v1575 = vunpack.c.l.b16 %v1543
        %v1576 = vunpack.c.l.b16 %v1544
        %v1577 = vunpack.c.l.b16 %v1545
        %v1578 = vunpack.c.l.b16 %v1546
        %v1579 = vunpack.c.l.b16 %v1547
        %v1580 = vunpack.c.l.b16 %v1548
        %v1581 = vunpack.c.l.b16 %v1549
        %v1582 = vunpack.c.l.b16 %v1550
        %v1583 = vunpack.c.l.b16 %v1551
        %v1584 = vunpack.c.l.b16 %v1552
        %v1585 = vunpack.c.l.b16 %v1553
        %v1586 = vunpack.c.l.b16 %v1554
        %v1587 = vunpack.c.l.b16 %v1555
        %v1588 = vunpack.c.l.b16 %v1556
        %v1589 = vpack.c.b16 %v1574, %v1573
        %v1590 = vpack.c.b16 %v1576, %v1575
        %v1591 = vpack.c.b16 %v1578, %v1577
        %v1592 = vpack.c.b16 %v1580, %v1579
        %v1593 = vpack.c.b16 %v1582, %v1581
        %v1594 = vpack.c.b16 %v1584, %v1583
        %v1595 = vpack.c.b16 %v1586, %v1585
        %v1596 = vpack.c.b16 %v1588, %v1587
        %1605 = vmatprep.subr.bf16.mxu0 0
        %1606 = vmatpush1.bf16.msra.mxu0 %v1589
        %1607 = vmatprep.subr.bf16.mxu0 0
        %1608 = vmatpush1.bf16.msra.mxu0 %v1590
        %1609 = vmatprep.subr.bf16.mxu0 0
        %1610 = vmatpush1.bf16.msra.mxu0 %v1591
        %1611 = vmatprep.subr.bf16.mxu0 0
        %1612 = vmatpush1.bf16.msra.mxu0 %v1592
        %1613 = vmatprep.subr.bf16.mxu0 0
        %1614 = vmatpush1.bf16.msra.mxu0 %v1593
        %1615 = vmatprep.subr.bf16.mxu0 0
        %1616 = vmatpush1.bf16.msra.mxu0 %v1594
        %1617 = vmatprep.subr.bf16.mxu0 0
        %1618 = vmatpush1.bf16.msra.mxu0 %v1595
        %1619 = vmatprep.subr.bf16.mxu0 0
        %1620 = vmatpush1.bf16.msra.mxu0 %v1596
        %1621 = vmatprep.subr.bf16.mxu0 0
        %1622 = vmatpush1.bf16.msra.mxu0 0
        %1623 = vmatprep.subr.bf16.mxu0 0
        %1624 = vmatpush1.bf16.msra.mxu0 0
        %1625 = vmatprep.subr.bf16.mxu0 0
        %1626 = vmatpush1.bf16.msra.mxu0 0
        %1627 = vmatprep.subr.bf16.mxu0 0
        %1628 = vmatpush1.bf16.msra.mxu0 0
        %1629 = vmatprep.subr.bf16.mxu0 0
        %1630 = vmatpush1.bf16.msra.mxu0 0
        %1631 = vmatprep.subr.bf16.mxu0 0
        %1632 = vmatpush1.bf16.msra.mxu0 0
        %1633 = vmatprep.subr.bf16.mxu0 0
        %1634 = vmatpush1.bf16.msra.mxu0 0
        %1635 = vmatprep.subr.bf16.mxu0 0
        %1636 = vmatpush1.bf16.msra.mxu0 0
        %1637 = vmatprep.mubr.bf16.mxu0 0
        %1638 = vmatmul.mubr.bf16.gmra.mrb[0].mxu0 %v1524
        %v1639 = vpop.f32.mrb[0].mxu0
        %v1640 = vadd.f32 0.0, %v1639
        %v1641 = vpop.f32.mrb[0].mxu0
        %v1642 = vpop.f32.mrb[0].mxu0
        %v1643 = vadd.f32 0.0, %v1642
        %v1644 = vpop.f32.mrb[0].mxu0
        %1645 = vmatprep.mubr.bf16.mxu0 0
        %1646 = vmatmul.mubr.bf16.gmra.mrb[0].mxu0 %v1525
        %v1647 = vpop.f32.mrb[0].mxu0
        %v1648 = vadd.f32 0.0, %v1647
        %v1649 = vpop.f32.mrb[0].mxu0
        %v1650 = vpop.f32.mrb[0].mxu0
        %v1651 = vadd.f32 0.0, %v1650
        %v1652 = vpop.f32.mrb[0].mxu0
        %1653 = vmatprep.mubr.bf16.mxu0 0
        %1654 = vmatmul.mubr.bf16.gmra.mrb[0].mxu0 %v1526
        %v1655 = vpop.f32.mrb[0].mxu0
        %v1656 = vadd.f32 0.0, %v1655
        %v1657 = vpop.f32.mrb[0].mxu0
        %v1658 = vpop.f32.mrb[0].mxu0
        %v1659 = vadd.f32 0.0, %v1658
        %v1660 = vpop.f32.mrb[0].mxu0
        %1661 = vmatprep.mubr.bf16.mxu0 0
        %1662 = vmatmul.mubr.bf16.gmra.mrb[0].mxu0 %v1527
        %v1663 = vpop.f32.mrb[0].mxu0
        %v1664 = vadd.f32 0.0, %v1663
        %v1665 = vpop.f32.mrb[0].mxu0
        %v1666 = vpop.f32.mrb[0].mxu0
        %v1667 = vadd.f32 0.0, %v1666
        %v1668 = vpop.f32.mrb[0].mxu0
        %1669 = vmatprep.mubr.bf16.mxu0 0
        %1670 = vmatmul.mubr.bf16.gmra.mrb[0].mxu0 %v1528
        %v1671 = vpop.f32.mrb[0].mxu0
        %v1672 = vadd.f32 0.0, %v1671
        %v1673 = vpop.f32.mrb[0].mxu0
        %v1674 = vpop.f32.mrb[0].mxu0
        %v1675 = vadd.f32 0.0, %v1674
        %v1676 = vpop.f32.mrb[0].mxu0
        %1677 = vmatprep.mubr.bf16.mxu0 0
        %1678 = vmatmul.mubr.bf16.gmra.mrb[0].mxu0 %v1529
        %v1679 = vpop.f32.mrb[0].mxu0
        %v1680 = vadd.f32 0.0, %v1679
        %v1681 = vpop.f32.mrb[0].mxu0
        %v1682 = vpop.f32.mrb[0].mxu0
        %v1683 = vadd.f32 0.0, %v1682
        %v1684 = vpop.f32.mrb[0].mxu0
        %1685 = vmatprep.mubr.bf16.mxu0 0
        %1686 = vmatmul.mubr.bf16.gmra.mrb[0].mxu0 %v1530
        %v1687 = vpop.f32.mrb[0].mxu0
        %v1688 = vadd.f32 0.0, %v1687
        %v1689 = vpop.f32.mrb[0].mxu0
        %v1690 = vpop.f32.mrb[0].mxu0
        %v1691 = vadd.f32 0.0, %v1690
        %v1692 = vpop.f32.mrb[0].mxu0
        %1693 = vmatprep.mubr.bf16.mxu0 0
        %1694 = vmatmul.mubr.bf16.gmra.mrb[0].mxu0 %v1531
        %v1695 = vpop.f32.mrb[0].mxu0
        %v1696 = vadd.f32 0.0, %v1695
        %v1697 = vpop.f32.mrb[0].mxu0
        %v1698 = vpop.f32.mrb[0].mxu0
        %v1699 = vadd.f32 0.0, %v1698
        %v1700 = vpop.f32.mrb[0].mxu0
        %1701 = vmatprep.mubr.bf16.mxu0 0
        %1702 = vmatmul.mubr.bf16.gmra.mrb[0].mxu0 %v1532
        %v1703 = vpop.f32.mrb[0].mxu0
        %v1704 = vadd.f32 0.0, %v1703
        %v1705 = vpop.f32.mrb[0].mxu0
        %v1706 = vpop.f32.mrb[0].mxu0
        %v1707 = vadd.f32 0.0, %v1706
        %v1708 = vpop.f32.mrb[0].mxu0
        %1709 = vmatprep.mubr.bf16.mxu0 0
        %1710 = vmatmul.mubr.bf16.gmra.mrb[0].mxu0 %v1533
        %v1711 = vpop.f32.mrb[0].mxu0
        %v1712 = vadd.f32 0.0, %v1711
        %v1713 = vpop.f32.mrb[0].mxu0
        %v1714 = vpop.f32.mrb[0].mxu0
        %v1715 = vadd.f32 0.0, %v1714
        %v1716 = vpop.f32.mrb[0].mxu0
        %1717 = vmatprep.mubr.bf16.mxu0 0
        %1718 = vmatmul.mubr.bf16.gmra.mrb[0].mxu0 %v1534
        %v1719 = vpop.f32.mrb[0].mxu0
        %v1720 = vadd.f32 0.0, %v1719
        %v1721 = vpop.f32.mrb[0].mxu0
        %v1722 = vpop.f32.mrb[0].mxu0
        %v1723 = vadd.f32 0.0, %v1722
        %v1724 = vpop.f32.mrb[0].mxu0
        %1725 = vmatprep.mubr.bf16.mxu0 0
        %1726 = vmatmul.mubr.bf16.gmra.mrb[0].mxu0 %v1535
        %v1727 = vpop.f32.mrb[0].mxu0
        %v1728 = vadd.f32 0.0, %v1727
        %v1729 = vpop.f32.mrb[0].mxu0
        %v1730 = vpop.f32.mrb[0].mxu0
        %v1731 = vadd.f32 0.0, %v1730
        %v1732 = vpop.f32.mrb[0].mxu0
        %1733 = vmatprep.mubr.bf16.mxu0 0
        %1734 = vmatmul.mubr.bf16.gmra.mrb[0].mxu0 %v1536
        %v1735 = vpop.f32.mrb[0].mxu0
        %v1736 = vadd.f32 0.0, %v1735
        %v1737 = vpop.f32.mrb[0].mxu0
        %v1738 = vpop.f32.mrb[0].mxu0
        %v1739 = vadd.f32 0.0, %v1738
        %v1740 = vpop.f32.mrb[0].mxu0
        %1741 = vmatprep.mubr.bf16.mxu0 0
        %1742 = vmatmul.mubr.bf16.gmra.mrb[0].mxu0 %v1537
        %v1743 = vpop.f32.mrb[0].mxu0
        %v1744 = vadd.f32 0.0, %v1743
        %v1745 = vpop.f32.mrb[0].mxu0
        %v1746 = vpop.f32.mrb[0].mxu0
        %v1747 = vadd.f32 0.0, %v1746
        %v1748 = vpop.f32.mrb[0].mxu0
        %1749 = vmatprep.mubr.bf16.mxu0 0
        %1750 = vmatmul.mubr.bf16.gmra.mrb[0].mxu0 %v1538
        %v1751 = vpop.f32.mrb[0].mxu0
        %v1752 = vadd.f32 0.0, %v1751
        %v1753 = vpop.f32.mrb[0].mxu0
        %v1754 = vpop.f32.mrb[0].mxu0
        %v1755 = vadd.f32 0.0, %v1754
        %v1756 = vpop.f32.mrb[0].mxu0
        %1757 = vmatprep.mubr.bf16.mxu0 0
        %1758 = vmatmul.mubr.bf16.gmra.mrb[0].mxu0 %v1539
        %v1759 = vpop.f32.mrb[0].mxu0
        %v1760 = vadd.f32 0.0, %v1759
        %v1761 = vpop.f32.mrb[0].mxu0
        %v1762 = vpop.f32.mrb[0].mxu0
        %v1763 = vadd.f32 0.0, %v1762
        %v1764 = vpop.f32.mrb[0].mxu0
        %1765 = vdwg.mxu0
        %v1766 = vadd.f32 %v1492, %v1640
        %v1767 = vadd.f32 %v1493, %v1643
        %v1768 = vadd.f32 %v1494, %v1648
        %v1769 = vadd.f32 %v1495, %v1651
        %v1770 = vadd.f32 %v1496, %v1656
        %v1771 = vadd.f32 %v1497, %v1659
        %v1772 = vadd.f32 %v1498, %v1664
        %v1773 = vadd.f32 %v1499, %v1667
        %v1774 = vadd.f32 %v1500, %v1672
        %v1775 = vadd.f32 %v1501, %v1675
        %v1776 = vadd.f32 %v1502, %v1680
        %v1777 = vadd.f32 %v1503, %v1683
        %v1778 = vadd.f32 %v1504, %v1688
        %v1779 = vadd.f32 %v1505, %v1691
        %v1780 = vadd.f32 %v1506, %v1696
        %v1781 = vadd.f32 %v1507, %v1699
        %v1782 = vadd.f32 %v1508, %v1704
        %v1783 = vadd.f32 %v1509, %v1707
        %v1784 = vadd.f32 %v1510, %v1712
        %v1785 = vadd.f32 %v1511, %v1715
        %v1786 = vadd.f32 %v1512, %v1720
        %v1787 = vadd.f32 %v1513, %v1723
        %v1788 = vadd.f32 %v1514, %v1728
        %v1789 = vadd.f32 %v1515, %v1731
        %v1790 = vadd.f32 %v1516, %v1736
        %v1791 = vadd.f32 %v1517, %v1739
        %v1792 = vadd.f32 %v1518, %v1744
        %v1793 = vadd.f32 %v1519, %v1747
        %v1794 = vadd.f32 %v1520, %v1752
        %v1795 = vadd.f32 %v1521, %v1755
        %v1796 = vadd.f32 %v1522, %v1760
        %v1797 = vadd.f32 %v1523, %v1763
        %s1798 = scalar_lea.vmem %s6, 1
        %v1799 = vld [vmem:[%s1798] sm:$0x1]
        %v1801 = vlaneseq
        %v1802 = vshrl.u32 %v1801, 7
        %v1803 = vsub.s32 0, %v1802
        %v1804 = vrot.slane %v1799, %v1803
        %v1806 = vadd.f32 %v1766, %v1804
        %v1807 = vadd.f32 %v1767, %v1804
        %v1808 = vadd.f32 %v1768, %v1804
        %v1809 = vadd.f32 %v1769, %v1804
        %v1810 = vadd.f32 %v1770, %v1804
        %v1811 = vadd.f32 %v1771, %v1804
        %v1812 = vadd.f32 %v1772, %v1804
        %v1813 = vadd.f32 %v1773, %v1804
        %v1814 = vadd.f32 %v1774, %v1804
        %v1815 = vadd.f32 %v1775, %v1804
        %v1816 = vadd.f32 %v1776, %v1804
        %v1817 = vadd.f32 %v1777, %v1804
        %v1818 = vadd.f32 %v1778, %v1804
        %v1819 = vadd.f32 %v1779, %v1804
        %v1820 = vadd.f32 %v1780, %v1804
        %v1821 = vadd.f32 %v1781, %v1804
        %v1822 = vadd.f32 %v1782, %v1804
        %v1823 = vadd.f32 %v1783, %v1804
        %v1824 = vadd.f32 %v1784, %v1804
        %v1825 = vadd.f32 %v1785, %v1804
        %v1826 = vadd.f32 %v1786, %v1804
        %v1827 = vadd.f32 %v1787, %v1804
        %v1828 = vadd.f32 %v1788, %v1804
        %v1829 = vadd.f32 %v1789, %v1804
        %v1830 = vadd.f32 %v1790, %v1804
        %v1831 = vadd.f32 %v1791, %v1804
        %v1832 = vadd.f32 %v1792, %v1804
        %v1833 = vadd.f32 %v1793, %v1804
        %v1834 = vadd.f32 %v1794, %v1804
        %v1835 = vadd.f32 %v1795, %v1804
        %v1836 = vadd.f32 %v1796, %v1804
        %v1837 = vadd.f32 %v1797, %v1804
        %vm1838 = vcmp.gt.f32.partialorder %v1806, 0.0
        %vm1839 = vcmp.gt.f32.partialorder %v1807, 0.0
        %vm1840 = vcmp.gt.f32.partialorder %v1808, 0.0
        %vm1841 = vcmp.gt.f32.partialorder %v1809, 0.0
        %vm1842 = vcmp.gt.f32.partialorder %v1810, 0.0
        %vm1843 = vcmp.gt.f32.partialorder %v1811, 0.0
        %vm1844 = vcmp.gt.f32.partialorder %v1812, 0.0
        %vm1845 = vcmp.gt.f32.partialorder %v1813, 0.0
        %vm1846 = vcmp.gt.f32.partialorder %v1814, 0.0
        %vm1847 = vcmp.gt.f32.partialorder %v1815, 0.0
        %vm1848 = vcmp.gt.f32.partialorder %v1816, 0.0
        %vm1849 = vcmp.gt.f32.partialorder %v1817, 0.0
        %vm1850 = vcmp.gt.f32.partialorder %v1818, 0.0
        %vm1851 = vcmp.gt.f32.partialorder %v1819, 0.0
        %vm1852 = vcmp.gt.f32.partialorder %v1820, 0.0
        %vm1853 = vcmp.gt.f32.partialorder %v1821, 0.0
        %vm1854 = vcmp.gt.f32.partialorder %v1822, 0.0
        %vm1855 = vcmp.gt.f32.partialorder %v1823, 0.0
        %vm1856 = vcmp.gt.f32.partialorder %v1824, 0.0
        %vm1857 = vcmp.gt.f32.partialorder %v1825, 0.0
        %vm1858 = vcmp.gt.f32.partialorder %v1826, 0.0
        %vm1859 = vcmp.gt.f32.partialorder %v1827, 0.0
        %vm1860 = vcmp.gt.f32.partialorder %v1828, 0.0
        %vm1861 = vcmp.gt.f32.partialorder %v1829, 0.0
        %vm1862 = vcmp.gt.f32.partialorder %v1830, 0.0
        %vm1863 = vcmp.gt.f32.partialorder %v1831, 0.0
        %vm1864 = vcmp.gt.f32.partialorder %v1832, 0.0
        %vm1865 = vcmp.gt.f32.partialorder %v1833, 0.0
        %vm1866 = vcmp.gt.f32.partialorder %v1834, 0.0
        %vm1867 = vcmp.gt.f32.partialorder %v1835, 0.0
        %vm1868 = vcmp.gt.f32.partialorder %v1836, 0.0
        %vm1869 = vcmp.gt.f32.partialorder %v1837, 0.0
        %v1870 = vmul.f32 %v1806, 0.01
        %v1871 = vmul.f32 %v1807, 0.01
        %v1872 = vmul.f32 %v1808, 0.01
        %v1873 = vmul.f32 %v1809, 0.01
        %v1874 = vmul.f32 %v1810, 0.01
        %v1875 = vmul.f32 %v1811, 0.01
        %v1876 = vmul.f32 %v1812, 0.01
        %v1877 = vmul.f32 %v1813, 0.01
        %v1878 = vmul.f32 %v1814, 0.01
        %v1879 = vmul.f32 %v1815, 0.01
        %v1880 = vmul.f32 %v1816, 0.01
        %v1881 = vmul.f32 %v1817, 0.01
        %v1882 = vmul.f32 %v1818, 0.01
        %v1883 = vmul.f32 %v1819, 0.01
        %v1884 = vmul.f32 %v1820, 0.01
        %v1885 = vmul.f32 %v1821, 0.01
        %v1886 = vmul.f32 %v1822, 0.01
        %v1887 = vmul.f32 %v1823, 0.01
        %v1888 = vmul.f32 %v1824, 0.01
        %v1889 = vmul.f32 %v1825, 0.01
        %v1890 = vmul.f32 %v1826, 0.01
        %v1891 = vmul.f32 %v1827, 0.01
        %v1892 = vmul.f32 %v1828, 0.01
        %v1893 = vmul.f32 %v1829, 0.01
        %v1894 = vmul.f32 %v1830, 0.01
        %v1895 = vmul.f32 %v1831, 0.01
        %v1896 = vmul.f32 %v1832, 0.01
        %v1897 = vmul.f32 %v1833, 0.01
        %v1898 = vmul.f32 %v1834, 0.01
        %v1899 = vmul.f32 %v1835, 0.01
        %v1900 = vmul.f32 %v1836, 0.01
        %v1901 = vmul.f32 %v1837, 0.01
        %v1902 = vsel %vm1838, %v1806, %v1870
        %v1903 = vsel %vm1839, %v1807, %v1871
        %v1904 = vsel %vm1840, %v1808, %v1872
        %v1905 = vsel %vm1841, %v1809, %v1873
        %v1906 = vsel %vm1842, %v1810, %v1874
        %v1907 = vsel %vm1843, %v1811, %v1875
        %v1908 = vsel %vm1844, %v1812, %v1876
        %v1909 = vsel %vm1845, %v1813, %v1877
        %v1910 = vsel %vm1846, %v1814, %v1878
        %v1911 = vsel %vm1847, %v1815, %v1879
        %v1912 = vsel %vm1848, %v1816, %v1880
        %v1913 = vsel %vm1849, %v1817, %v1881
        %v1914 = vsel %vm1850, %v1818, %v1882
        %v1915 = vsel %vm1851, %v1819, %v1883
        %v1916 = vsel %vm1852, %v1820, %v1884
        %v1917 = vsel %vm1853, %v1821, %v1885
        %v1918 = vsel %vm1854, %v1822, %v1886
        %v1919 = vsel %vm1855, %v1823, %v1887
        %v1920 = vsel %vm1856, %v1824, %v1888
        %v1921 = vsel %vm1857, %v1825, %v1889
        %v1922 = vsel %vm1858, %v1826, %v1890
        %v1923 = vsel %vm1859, %v1827, %v1891
        %v1924 = vsel %vm1860, %v1828, %v1892
        %v1925 = vsel %vm1861, %v1829, %v1893
        %v1926 = vsel %vm1862, %v1830, %v1894
        %v1927 = vsel %vm1863, %v1831, %v1895
        %v1928 = vsel %vm1864, %v1832, %v1896
        %v1929 = vsel %vm1865, %v1833, %v1897
        %v1930 = vsel %vm1866, %v1834, %v1898
        %v1931 = vsel %vm1867, %v1835, %v1899
        %v1932 = vsel %vm1868, %v1836, %v1900
        %v1933 = vsel %vm1869, %v1837, %v1901
        %v1934 = vpack.c.bf16 %v1903, %v1902
        %v1935 = vpack.c.bf16 %v1905, %v1904
        %v1936 = vpack.c.bf16 %v1907, %v1906
        %v1937 = vpack.c.bf16 %v1909, %v1908
        %v1938 = vpack.c.bf16 %v1911, %v1910
        %v1939 = vpack.c.bf16 %v1913, %v1912
        %v1940 = vpack.c.bf16 %v1915, %v1914
        %v1941 = vpack.c.bf16 %v1917, %v1916
        %v1942 = vpack.c.bf16 %v1919, %v1918
        %v1943 = vpack.c.bf16 %v1921, %v1920
        %v1944 = vpack.c.bf16 %v1923, %v1922
        %v1945 = vpack.c.bf16 %v1925, %v1924
        %v1946 = vpack.c.bf16 %v1927, %v1926
        %v1947 = vpack.c.bf16 %v1929, %v1928
        %v1948 = vpack.c.bf16 %v1931, %v1930
        %v1949 = vpack.c.bf16 %v1933, %v1932
        %s1950 = scalar_lea.vmem %s5, 128
        %v1951 = vld [vmem:[%s1950] sm:$0xf]
        %v1952 = vld [vmem:[%s1950 + $0x4] sm:$0xf]
        %v1953 = vld [vmem:[%s1950 + $0x8] sm:$0xf]
        %v1954 = vld [vmem:[%s1950 + $0xc] sm:$0xf]
        %v1955 = vld [vmem:[%s1950 + $0x10] sm:$0xf]
        %v1956 = vld [vmem:[%s1950 + $0x14] sm:$0xf]
        %v1957 = vld [vmem:[%s1950 + $0x18] sm:$0xf]
        %v1958 = vld [vmem:[%s1950 + $0x1c] sm:$0xf]
        %v1959 = vld [vmem:[%s1950 + $0x20] sm:$0xf]
        %v1960 = vld [vmem:[%s1950 + $0x24] sm:$0xf]
        %v1961 = vld [vmem:[%s1950 + $0x28] sm:$0xf]
        %v1962 = vld [vmem:[%s1950 + $0x2c] sm:$0xf]
        %v1963 = vld [vmem:[%s1950 + $0x30] sm:$0xf]
        %v1964 = vld [vmem:[%s1950 + $0x34] sm:$0xf]
        %v1965 = vld [vmem:[%s1950 + $0x38] sm:$0xf]
        %v1966 = vld [vmem:[%s1950 + $0x3c] sm:$0xf]
        %v1983 = vunpack.c.l.b16 %v1951
        %v1984 = vunpack.c.l.b16 %v1952
        %v1985 = vunpack.c.l.b16 %v1953
        %v1986 = vunpack.c.l.b16 %v1954
        %v1987 = vunpack.c.l.b16 %v1955
        %v1988 = vunpack.c.l.b16 %v1956
        %v1989 = vunpack.c.l.b16 %v1957
        %v1990 = vunpack.c.l.b16 %v1958
        %v1991 = vunpack.c.l.b16 %v1959
        %v1992 = vunpack.c.l.b16 %v1960
        %v1993 = vunpack.c.l.b16 %v1961
        %v1994 = vunpack.c.l.b16 %v1962
        %v1995 = vunpack.c.l.b16 %v1963
        %v1996 = vunpack.c.l.b16 %v1964
        %v1997 = vunpack.c.l.b16 %v1965
        %v1998 = vunpack.c.l.b16 %v1966
        %v1999 = vpack.c.b16 %v1984, %v1983
        %v2000 = vpack.c.b16 %v1986, %v1985
        %v2001 = vpack.c.b16 %v1988, %v1987
        %v2002 = vpack.c.b16 %v1990, %v1989
        %v2003 = vpack.c.b16 %v1992, %v1991
        %v2004 = vpack.c.b16 %v1994, %v1993
        %v2005 = vpack.c.b16 %v1996, %v1995
        %v2006 = vpack.c.b16 %v1998, %v1997
        %2015 = vmatprep.subr.bf16.mxu0 0
        %2016 = vmatpush1.bf16.msra.mxu0 %v1999
        %2017 = vmatprep.subr.bf16.mxu0 0
        %2018 = vmatpush1.bf16.msra.mxu0 %v2000
        %2019 = vmatprep.subr.bf16.mxu0 0
        %2020 = vmatpush1.bf16.msra.mxu0 %v2001
        %2021 = vmatprep.subr.bf16.mxu0 0
        %2022 = vmatpush1.bf16.msra.mxu0 %v2002
        %2023 = vmatprep.subr.bf16.mxu0 0
        %2024 = vmatpush1.bf16.msra.mxu0 %v2003
        %2025 = vmatprep.subr.bf16.mxu0 0
        %2026 = vmatpush1.bf16.msra.mxu0 %v2004
        %2027 = vmatprep.subr.bf16.mxu0 0
        %2028 = vmatpush1.bf16.msra.mxu0 %v2005
        %2029 = vmatprep.subr.bf16.mxu0 0
        %2030 = vmatpush1.bf16.msra.mxu0 %v2006
        %2031 = vmatprep.subr.bf16.mxu0 0
        %2032 = vmatpush1.bf16.msra.mxu0 0
        %2033 = vmatprep.subr.bf16.mxu0 0
        %2034 = vmatpush1.bf16.msra.mxu0 0
        %2035 = vmatprep.subr.bf16.mxu0 0
        %2036 = vmatpush1.bf16.msra.mxu0 0
        %2037 = vmatprep.subr.bf16.mxu0 0
        %2038 = vmatpush1.bf16.msra.mxu0 0
        %2039 = vmatprep.subr.bf16.mxu0 0
        %2040 = vmatpush1.bf16.msra.mxu0 0
        %2041 = vmatprep.subr.bf16.mxu0 0
        %2042 = vmatpush1.bf16.msra.mxu0 0
        %2043 = vmatprep.subr.bf16.mxu0 0
        %2044 = vmatpush1.bf16.msra.mxu0 0
        %2045 = vmatprep.subr.bf16.mxu0 0
        %2046 = vmatpush1.bf16.msra.mxu0 0
        %2047 = vmatprep.mubr.bf16.mxu0 0
        %2048 = vmatmul.mubr.bf16.gmra.mrb[0].mxu0 %v1934
        %v2049 = vpop.f32.mrb[0].mxu0
        %v2050 = vadd.f32 0.0, %v2049
        %v2051 = vpop.f32.mrb[0].mxu0
        %v2052 = vpop.f32.mrb[0].mxu0
        %v2053 = vadd.f32 0.0, %v2052
        %v2054 = vpop.f32.mrb[0].mxu0
        %2055 = vmatprep.mubr.bf16.mxu0 0
        %2056 = vmatmul.mubr.bf16.gmra.mrb[0].mxu0 %v1935
        %v2057 = vpop.f32.mrb[0].mxu0
        %v2058 = vadd.f32 0.0, %v2057
        %v2059 = vpop.f32.mrb[0].mxu0
        %v2060 = vpop.f32.mrb[0].mxu0
        %v2061 = vadd.f32 0.0, %v2060
        %v2062 = vpop.f32.mrb[0].mxu0
        %2063 = vmatprep.mubr.bf16.mxu0 0
        %2064 = vmatmul.mubr.bf16.gmra.mrb[0].mxu0 %v1936
        %v2065 = vpop.f32.mrb[0].mxu0
        %v2066 = vadd.f32 0.0, %v2065
        %v2067 = vpop.f32.mrb[0].mxu0
        %v2068 = vpop.f32.mrb[0].mxu0
        %v2069 = vadd.f32 0.0, %v2068
        %v2070 = vpop.f32.mrb[0].mxu0
        %2071 = vmatprep.mubr.bf16.mxu0 0
        %2072 = vmatmul.mubr.bf16.gmra.mrb[0].mxu0 %v1937
        %v2073 = vpop.f32.mrb[0].mxu0
        %v2074 = vadd.f32 0.0, %v2073
        %v2075 = vpop.f32.mrb[0].mxu0
        %v2076 = vpop.f32.mrb[0].mxu0
        %v2077 = vadd.f32 0.0, %v2076
        %v2078 = vpop.f32.mrb[0].mxu0
        %2079 = vmatprep.mubr.bf16.mxu0 0
        %2080 = vmatmul.mubr.bf16.gmra.mrb[0].mxu0 %v1938
        %v2081 = vpop.f32.mrb[0].mxu0
        %v2082 = vadd.f32 0.0, %v2081
        %v2083 = vpop.f32.mrb[0].mxu0
        %v2084 = vpop.f32.mrb[0].mxu0
        %v2085 = vadd.f32 0.0, %v2084
        %v2086 = vpop.f32.mrb[0].mxu0
        %2087 = vmatprep.mubr.bf16.mxu0 0
        %2088 = vmatmul.mubr.bf16.gmra.mrb[0].mxu0 %v1939
        %v2089 = vpop.f32.mrb[0].mxu0
        %v2090 = vadd.f32 0.0, %v2089
        %v2091 = vpop.f32.mrb[0].mxu0
        %v2092 = vpop.f32.mrb[0].mxu0
        %v2093 = vadd.f32 0.0, %v2092
        %v2094 = vpop.f32.mrb[0].mxu0
        %2095 = vmatprep.mubr.bf16.mxu0 0
        %2096 = vmatmul.mubr.bf16.gmra.mrb[0].mxu0 %v1940
        %v2097 = vpop.f32.mrb[0].mxu0
        %v2098 = vadd.f32 0.0, %v2097
        %v2099 = vpop.f32.mrb[0].mxu0
        %v2100 = vpop.f32.mrb[0].mxu0
        %v2101 = vadd.f32 0.0, %v2100
        %v2102 = vpop.f32.mrb[0].mxu0
        %2103 = vmatprep.mubr.bf16.mxu0 0
        %2104 = vmatmul.mubr.bf16.gmra.mrb[0].mxu0 %v1941
        %v2105 = vpop.f32.mrb[0].mxu0
        %v2106 = vadd.f32 0.0, %v2105
        %v2107 = vpop.f32.mrb[0].mxu0
        %v2108 = vpop.f32.mrb[0].mxu0
        %v2109 = vadd.f32 0.0, %v2108
        %v2110 = vpop.f32.mrb[0].mxu0
        %2111 = vmatprep.mubr.bf16.mxu0 0
        %2112 = vmatmul.mubr.bf16.gmra.mrb[0].mxu0 %v1942
        %v2113 = vpop.f32.mrb[0].mxu0
        %v2114 = vadd.f32 0.0, %v2113
        %v2115 = vpop.f32.mrb[0].mxu0
        %v2116 = vpop.f32.mrb[0].mxu0
        %v2117 = vadd.f32 0.0, %v2116
        %v2118 = vpop.f32.mrb[0].mxu0
        %2119 = vmatprep.mubr.bf16.mxu0 0
        %2120 = vmatmul.mubr.bf16.gmra.mrb[0].mxu0 %v1943
        %v2121 = vpop.f32.mrb[0].mxu0
        %v2122 = vadd.f32 0.0, %v2121
        %v2123 = vpop.f32.mrb[0].mxu0
        %v2124 = vpop.f32.mrb[0].mxu0
        %v2125 = vadd.f32 0.0, %v2124
        %v2126 = vpop.f32.mrb[0].mxu0
        %2127 = vmatprep.mubr.bf16.mxu0 0
        %2128 = vmatmul.mubr.bf16.gmra.mrb[0].mxu0 %v1944
        %v2129 = vpop.f32.mrb[0].mxu0
        %v2130 = vadd.f32 0.0, %v2129
        %v2131 = vpop.f32.mrb[0].mxu0
        %v2132 = vpop.f32.mrb[0].mxu0
        %v2133 = vadd.f32 0.0, %v2132
        %v2134 = vpop.f32.mrb[0].mxu0
        %2135 = vmatprep.mubr.bf16.mxu0 0
        %2136 = vmatmul.mubr.bf16.gmra.mrb[0].mxu0 %v1945
        %v2137 = vpop.f32.mrb[0].mxu0
        %v2138 = vadd.f32 0.0, %v2137
        %v2139 = vpop.f32.mrb[0].mxu0
        %v2140 = vpop.f32.mrb[0].mxu0
        %v2141 = vadd.f32 0.0, %v2140
        %v2142 = vpop.f32.mrb[0].mxu0
        %2143 = vmatprep.mubr.bf16.mxu0 0
        %2144 = vmatmul.mubr.bf16.gmra.mrb[0].mxu0 %v1946
        %v2145 = vpop.f32.mrb[0].mxu0
        %v2146 = vadd.f32 0.0, %v2145
        %v2147 = vpop.f32.mrb[0].mxu0
        %v2148 = vpop.f32.mrb[0].mxu0
        %v2149 = vadd.f32 0.0, %v2148
        %v2150 = vpop.f32.mrb[0].mxu0
        %2151 = vmatprep.mubr.bf16.mxu0 0
        %2152 = vmatmul.mubr.bf16.gmra.mrb[0].mxu0 %v1947
        %v2153 = vpop.f32.mrb[0].mxu0
        %v2154 = vadd.f32 0.0, %v2153
        %v2155 = vpop.f32.mrb[0].mxu0
        %v2156 = vpop.f32.mrb[0].mxu0
        %v2157 = vadd.f32 0.0, %v2156
        %v2158 = vpop.f32.mrb[0].mxu0
        %2159 = vmatprep.mubr.bf16.mxu0 0
        %2160 = vmatmul.mubr.bf16.gmra.mrb[0].mxu0 %v1948
        %v2161 = vpop.f32.mrb[0].mxu0
        %v2162 = vadd.f32 0.0, %v2161
        %v2163 = vpop.f32.mrb[0].mxu0
        %v2164 = vpop.f32.mrb[0].mxu0
        %v2165 = vadd.f32 0.0, %v2164
        %v2166 = vpop.f32.mrb[0].mxu0
        %2167 = vmatprep.mubr.bf16.mxu0 0
        %2168 = vmatmul.mubr.bf16.gmra.mrb[0].mxu0 %v1949
        %v2169 = vpop.f32.mrb[0].mxu0
        %v2170 = vadd.f32 0.0, %v2169
        %v2171 = vpop.f32.mrb[0].mxu0
        %v2172 = vpop.f32.mrb[0].mxu0
        %v2173 = vadd.f32 0.0, %v2172
        %v2174 = vpop.f32.mrb[0].mxu0
        %2175 = vdwg.mxu0
        %v2176 = vadd.f32 %v1902, %v2050
        %v2177 = vadd.f32 %v1903, %v2053
        %v2178 = vadd.f32 %v1904, %v2058
        %v2179 = vadd.f32 %v1905, %v2061
        %v2180 = vadd.f32 %v1906, %v2066
        %v2181 = vadd.f32 %v1907, %v2069
        %v2182 = vadd.f32 %v1908, %v2074
        %v2183 = vadd.f32 %v1909, %v2077
        %v2184 = vadd.f32 %v1910, %v2082
        %v2185 = vadd.f32 %v1911, %v2085
        %v2186 = vadd.f32 %v1912, %v2090
        %v2187 = vadd.f32 %v1913, %v2093
        %v2188 = vadd.f32 %v1914, %v2098
        %v2189 = vadd.f32 %v1915, %v2101
        %v2190 = vadd.f32 %v1916, %v2106
        %v2191 = vadd.f32 %v1917, %v2109
        %v2192 = vadd.f32 %v1918, %v2114
        %v2193 = vadd.f32 %v1919, %v2117
        %v2194 = vadd.f32 %v1920, %v2122
        %v2195 = vadd.f32 %v1921, %v2125
        %v2196 = vadd.f32 %v1922, %v2130
        %v2197 = vadd.f32 %v1923, %v2133
        %v2198 = vadd.f32 %v1924, %v2138
        %v2199 = vadd.f32 %v1925, %v2141
        %v2200 = vadd.f32 %v1926, %v2146
        %v2201 = vadd.f32 %v1927, %v2149
        %v2202 = vadd.f32 %v1928, %v2154
        %v2203 = vadd.f32 %v1929, %v2157
        %v2204 = vadd.f32 %v1930, %v2162
        %v2205 = vadd.f32 %v1931, %v2165
        %v2206 = vadd.f32 %v1932, %v2170
        %v2207 = vadd.f32 %v1933, %v2173
        %s2208 = scalar_lea.vmem %s6, 2
        %v2209 = vld [vmem:[%s2208] sm:$0x1]
        %v2211 = vlaneseq
        %v2212 = vshrl.u32 %v2211, 7
        %v2213 = vsub.s32 0, %v2212
        %v2214 = vrot.slane %v2209, %v2213
        %v2216 = vadd.f32 %v2176, %v2214
        %v2217 = vadd.f32 %v2177, %v2214
        %v2218 = vadd.f32 %v2178, %v2214
        %v2219 = vadd.f32 %v2179, %v2214
        %v2220 = vadd.f32 %v2180, %v2214
        %v2221 = vadd.f32 %v2181, %v2214
        %v2222 = vadd.f32 %v2182, %v2214
        %v2223 = vadd.f32 %v2183, %v2214
        %v2224 = vadd.f32 %v2184, %v2214
        %v2225 = vadd.f32 %v2185, %v2214
        %v2226 = vadd.f32 %v2186, %v2214
        %v2227 = vadd.f32 %v2187, %v2214
        %v2228 = vadd.f32 %v2188, %v2214
        %v2229 = vadd.f32 %v2189, %v2214
        %v2230 = vadd.f32 %v2190, %v2214
        %v2231 = vadd.f32 %v2191, %v2214
        %v2232 = vadd.f32 %v2192, %v2214
        %v2233 = vadd.f32 %v2193, %v2214
        %v2234 = vadd.f32 %v2194, %v2214
        %v2235 = vadd.f32 %v2195, %v2214
        %v2236 = vadd.f32 %v2196, %v2214
        %v2237 = vadd.f32 %v2197, %v2214
        %v2238 = vadd.f32 %v2198, %v2214
        %v2239 = vadd.f32 %v2199, %v2214
        %v2240 = vadd.f32 %v2200, %v2214
        %v2241 = vadd.f32 %v2201, %v2214
        %v2242 = vadd.f32 %v2202, %v2214
        %v2243 = vadd.f32 %v2203, %v2214
        %v2244 = vadd.f32 %v2204, %v2214
        %v2245 = vadd.f32 %v2205, %v2214
        %v2246 = vadd.f32 %v2206, %v2214
        %v2247 = vadd.f32 %v2207, %v2214
        %vm2248 = vcmp.gt.f32.partialorder %v2216, 0.0
        %vm2249 = vcmp.gt.f32.partialorder %v2217, 0.0
        %vm2250 = vcmp.gt.f32.partialorder %v2218, 0.0
        %vm2251 = vcmp.gt.f32.partialorder %v2219, 0.0
        %vm2252 = vcmp.gt.f32.partialorder %v2220, 0.0
        %vm2253 = vcmp.gt.f32.partialorder %v2221, 0.0
        %vm2254 = vcmp.gt.f32.partialorder %v2222, 0.0
        %vm2255 = vcmp.gt.f32.partialorder %v2223, 0.0
        %vm2256 = vcmp.gt.f32.partialorder %v2224, 0.0
        %vm2257 = vcmp.gt.f32.partialorder %v2225, 0.0
        %vm2258 = vcmp.gt.f32.partialorder %v2226, 0.0
        %vm2259 = vcmp.gt.f32.partialorder %v2227, 0.0
        %vm2260 = vcmp.gt.f32.partialorder %v2228, 0.0
        %vm2261 = vcmp.gt.f32.partialorder %v2229, 0.0
        %vm2262 = vcmp.gt.f32.partialorder %v2230, 0.0
        %vm2263 = vcmp.gt.f32.partialorder %v2231, 0.0
        %vm2264 = vcmp.gt.f32.partialorder %v2232, 0.0
        %vm2265 = vcmp.gt.f32.partialorder %v2233, 0.0
        %vm2266 = vcmp.gt.f32.partialorder %v2234, 0.0
        %vm2267 = vcmp.gt.f32.partialorder %v2235, 0.0
        %vm2268 = vcmp.gt.f32.partialorder %v2236, 0.0
        %vm2269 = vcmp.gt.f32.partialorder %v2237, 0.0
        %vm2270 = vcmp.gt.f32.partialorder %v2238, 0.0
        %vm2271 = vcmp.gt.f32.partialorder %v2239, 0.0
        %vm2272 = vcmp.gt.f32.partialorder %v2240, 0.0
        %vm2273 = vcmp.gt.f32.partialorder %v2241, 0.0
        %vm2274 = vcmp.gt.f32.partialorder %v2242, 0.0
        %vm2275 = vcmp.gt.f32.partialorder %v2243, 0.0
        %vm2276 = vcmp.gt.f32.partialorder %v2244, 0.0
        %vm2277 = vcmp.gt.f32.partialorder %v2245, 0.0
        %vm2278 = vcmp.gt.f32.partialorder %v2246, 0.0
        %vm2279 = vcmp.gt.f32.partialorder %v2247, 0.0
        %v2280 = vmul.f32 %v2216, 0.01
        %v2281 = vmul.f32 %v2217, 0.01
        %v2282 = vmul.f32 %v2218, 0.01
        %v2283 = vmul.f32 %v2219, 0.01
        %v2284 = vmul.f32 %v2220, 0.01
        %v2285 = vmul.f32 %v2221, 0.01
        %v2286 = vmul.f32 %v2222, 0.01
        %v2287 = vmul.f32 %v2223, 0.01
        %v2288 = vmul.f32 %v2224, 0.01
        %v2289 = vmul.f32 %v2225, 0.01
        %v2290 = vmul.f32 %v2226, 0.01
        %v2291 = vmul.f32 %v2227, 0.01
        %v2292 = vmul.f32 %v2228, 0.01
        %v2293 = vmul.f32 %v2229, 0.01
        %v2294 = vmul.f32 %v2230, 0.01
        %v2295 = vmul.f32 %v2231, 0.01
        %v2296 = vmul.f32 %v2232, 0.01
        %v2297 = vmul.f32 %v2233, 0.01
        %v2298 = vmul.f32 %v2234, 0.01
        %v2299 = vmul.f32 %v2235, 0.01
        %v2300 = vmul.f32 %v2236, 0.01
        %v2301 = vmul.f32 %v2237, 0.01
        %v2302 = vmul.f32 %v2238, 0.01
        %v2303 = vmul.f32 %v2239, 0.01
        %v2304 = vmul.f32 %v2240, 0.01
        %v2305 = vmul.f32 %v2241, 0.01
        %v2306 = vmul.f32 %v2242, 0.01
        %v2307 = vmul.f32 %v2243, 0.01
        %v2308 = vmul.f32 %v2244, 0.01
        %v2309 = vmul.f32 %v2245, 0.01
        %v2310 = vmul.f32 %v2246, 0.01
        %v2311 = vmul.f32 %v2247, 0.01
        %v2312 = vsel %vm2248, %v2216, %v2280
        %v2313 = vsel %vm2249, %v2217, %v2281
        %v2314 = vsel %vm2250, %v2218, %v2282
        %v2315 = vsel %vm2251, %v2219, %v2283
        %v2316 = vsel %vm2252, %v2220, %v2284
        %v2317 = vsel %vm2253, %v2221, %v2285
        %v2318 = vsel %vm2254, %v2222, %v2286
        %v2319 = vsel %vm2255, %v2223, %v2287
        %v2320 = vsel %vm2256, %v2224, %v2288
        %v2321 = vsel %vm2257, %v2225, %v2289
        %v2322 = vsel %vm2258, %v2226, %v2290
        %v2323 = vsel %vm2259, %v2227, %v2291
        %v2324 = vsel %vm2260, %v2228, %v2292
        %v2325 = vsel %vm2261, %v2229, %v2293
        %v2326 = vsel %vm2262, %v2230, %v2294
        %v2327 = vsel %vm2263, %v2231, %v2295
        %v2328 = vsel %vm2264, %v2232, %v2296
        %v2329 = vsel %vm2265, %v2233, %v2297
        %v2330 = vsel %vm2266, %v2234, %v2298
        %v2331 = vsel %vm2267, %v2235, %v2299
        %v2332 = vsel %vm2268, %v2236, %v2300
        %v2333 = vsel %vm2269, %v2237, %v2301
        %v2334 = vsel %vm2270, %v2238, %v2302
        %v2335 = vsel %vm2271, %v2239, %v2303
        %v2336 = vsel %vm2272, %v2240, %v2304
        %v2337 = vsel %vm2273, %v2241, %v2305
        %v2338 = vsel %vm2274, %v2242, %v2306
        %v2339 = vsel %vm2275, %v2243, %v2307
        %v2340 = vsel %vm2276, %v2244, %v2308
        %v2341 = vsel %vm2277, %v2245, %v2309
        %v2342 = vsel %vm2278, %v2246, %v2310
        %v2343 = vsel %vm2279, %v2247, %v2311
        %v2344 = vpack.c.bf16 %v2313, %v2312
        %v2345 = vpack.c.bf16 %v2315, %v2314
        %v2346 = vpack.c.bf16 %v2317, %v2316
        %v2347 = vpack.c.bf16 %v2319, %v2318
        %v2348 = vpack.c.bf16 %v2321, %v2320
        %v2349 = vpack.c.bf16 %v2323, %v2322
        %v2350 = vpack.c.bf16 %v2325, %v2324
        %v2351 = vpack.c.bf16 %v2327, %v2326
        %v2352 = vpack.c.bf16 %v2329, %v2328
        %v2353 = vpack.c.bf16 %v2331, %v2330
        %v2354 = vpack.c.bf16 %v2333, %v2332
        %v2355 = vpack.c.bf16 %v2335, %v2334
        %v2356 = vpack.c.bf16 %v2337, %v2336
        %v2357 = vpack.c.bf16 %v2339, %v2338
        %v2358 = vpack.c.bf16 %v2341, %v2340
        %v2359 = vpack.c.bf16 %v2343, %v2342
        %s2360 = scalar_lea.vmem %s5, 192
        %v2361 = vld [vmem:[%s2360] sm:$0xf]
        %v2362 = vld [vmem:[%s2360 + $0x4] sm:$0xf]
        %v2363 = vld [vmem:[%s2360 + $0x8] sm:$0xf]
        %v2364 = vld [vmem:[%s2360 + $0xc] sm:$0xf]
        %v2365 = vld [vmem:[%s2360 + $0x10] sm:$0xf]
        %v2366 = vld [vmem:[%s2360 + $0x14] sm:$0xf]
        %v2367 = vld [vmem:[%s2360 + $0x18] sm:$0xf]
        %v2368 = vld [vmem:[%s2360 + $0x1c] sm:$0xf]
        %v2369 = vld [vmem:[%s2360 + $0x20] sm:$0xf]
        %v2370 = vld [vmem:[%s2360 + $0x24] sm:$0xf]
        %v2371 = vld [vmem:[%s2360 + $0x28] sm:$0xf]
        %v2372 = vld [vmem:[%s2360 + $0x2c] sm:$0xf]
        %v2373 = vld [vmem:[%s2360 + $0x30] sm:$0xf]
        %v2374 = vld [vmem:[%s2360 + $0x34] sm:$0xf]
        %v2375 = vld [vmem:[%s2360 + $0x38] sm:$0xf]
        %v2376 = vld [vmem:[%s2360 + $0x3c] sm:$0xf]
        %v2393 = vunpack.c.l.b16 %v2361
        %v2394 = vunpack.c.l.b16 %v2362
        %v2395 = vunpack.c.l.b16 %v2363
        %v2396 = vunpack.c.l.b16 %v2364
        %v2397 = vunpack.c.l.b16 %v2365
        %v2398 = vunpack.c.l.b16 %v2366
        %v2399 = vunpack.c.l.b16 %v2367
        %v2400 = vunpack.c.l.b16 %v2368
        %v2401 = vunpack.c.l.b16 %v2369
        %v2402 = vunpack.c.l.b16 %v2370
        %v2403 = vunpack.c.l.b16 %v2371
        %v2404 = vunpack.c.l.b16 %v2372
        %v2405 = vunpack.c.l.b16 %v2373
        %v2406 = vunpack.c.l.b16 %v2374
        %v2407 = vunpack.c.l.b16 %v2375
        %v2408 = vunpack.c.l.b16 %v2376
        %v2409 = vpack.c.b16 %v2394, %v2393
        %v2410 = vpack.c.b16 %v2396, %v2395
        %v2411 = vpack.c.b16 %v2398, %v2397
        %v2412 = vpack.c.b16 %v2400, %v2399
        %v2413 = vpack.c.b16 %v2402, %v2401
        %v2414 = vpack.c.b16 %v2404, %v2403
        %v2415 = vpack.c.b16 %v2406, %v2405
        %v2416 = vpack.c.b16 %v2408, %v2407
        %2425 = vmatprep.subr.bf16.mxu0 0
        %2426 = vmatpush1.bf16.msra.mxu0 %v2409
        %2427 = vmatprep.subr.bf16.mxu0 0
        %2428 = vmatpush1.bf16.msra.mxu0 %v2410
        %2429 = vmatprep.subr.bf16.mxu0 0
        %2430 = vmatpush1.bf16.msra.mxu0 %v2411
        %2431 = vmatprep.subr.bf16.mxu0 0
        %2432 = vmatpush1.bf16.msra.mxu0 %v2412
        %2433 = vmatprep.subr.bf16.mxu0 0
        %2434 = vmatpush1.bf16.msra.mxu0 %v2413
        %2435 = vmatprep.subr.bf16.mxu0 0
        %2436 = vmatpush1.bf16.msra.mxu0 %v2414
        %2437 = vmatprep.subr.bf16.mxu0 0
        %2438 = vmatpush1.bf16.msra.mxu0 %v2415
        %2439 = vmatprep.subr.bf16.mxu0 0
        %2440 = vmatpush1.bf16.msra.mxu0 %v2416
        %2441 = vmatprep.subr.bf16.mxu0 0
        %2442 = vmatpush1.bf16.msra.mxu0 0
        %2443 = vmatprep.subr.bf16.mxu0 0
        %2444 = vmatpush1.bf16.msra.mxu0 0
        %2445 = vmatprep.subr.bf16.mxu0 0
        %2446 = vmatpush1.bf16.msra.mxu0 0
        %2447 = vmatprep.subr.bf16.mxu0 0
        %2448 = vmatpush1.bf16.msra.mxu0 0
        %2449 = vmatprep.subr.bf16.mxu0 0
        %2450 = vmatpush1.bf16.msra.mxu0 0
        %2451 = vmatprep.subr.bf16.mxu0 0
        %2452 = vmatpush1.bf16.msra.mxu0 0
        %2453 = vmatprep.subr.bf16.mxu0 0
        %2454 = vmatpush1.bf16.msra.mxu0 0
        %2455 = vmatprep.subr.bf16.mxu0 0
        %2456 = vmatpush1.bf16.msra.mxu0 0
        %2457 = vmatprep.mubr.bf16.mxu0 0
        %2458 = vmatmul.mubr.bf16.gmra.mrb[0].mxu0 %v2344
        %v2459 = vpop.f32.mrb[0].mxu0
        %v2460 = vadd.f32 0.0, %v2459
        %v2461 = vpop.f32.mrb[0].mxu0
        %v2462 = vpop.f32.mrb[0].mxu0
        %v2463 = vadd.f32 0.0, %v2462
        %v2464 = vpop.f32.mrb[0].mxu0
        %2465 = vmatprep.mubr.bf16.mxu0 0
        %2466 = vmatmul.mubr.bf16.gmra.mrb[0].mxu0 %v2345
        %v2467 = vpop.f32.mrb[0].mxu0
        %v2468 = vadd.f32 0.0, %v2467
        %v2469 = vpop.f32.mrb[0].mxu0
        %v2470 = vpop.f32.mrb[0].mxu0
        %v2471 = vadd.f32 0.0, %v2470
        %v2472 = vpop.f32.mrb[0].mxu0
        %2473 = vmatprep.mubr.bf16.mxu0 0
        %2474 = vmatmul.mubr.bf16.gmra.mrb[0].mxu0 %v2346
        %v2475 = vpop.f32.mrb[0].mxu0
        %v2476 = vadd.f32 0.0, %v2475
        %v2477 = vpop.f32.mrb[0].mxu0
        %v2478 = vpop.f32.mrb[0].mxu0
        %v2479 = vadd.f32 0.0, %v2478
        %v2480 = vpop.f32.mrb[0].mxu0
        %2481 = vmatprep.mubr.bf16.mxu0 0
        %2482 = vmatmul.mubr.bf16.gmra.mrb[0].mxu0 %v2347
        %v2483 = vpop.f32.mrb[0].mxu0
        %v2484 = vadd.f32 0.0, %v2483
        %v2485 = vpop.f32.mrb[0].mxu0
        %v2486 = vpop.f32.mrb[0].mxu0
        %v2487 = vadd.f32 0.0, %v2486
        %v2488 = vpop.f32.mrb[0].mxu0
        %2489 = vmatprep.mubr.bf16.mxu0 0
        %2490 = vmatmul.mubr.bf16.gmra.mrb[0].mxu0 %v2348
        %v2491 = vpop.f32.mrb[0].mxu0
        %v2492 = vadd.f32 0.0, %v2491
        %v2493 = vpop.f32.mrb[0].mxu0
        %v2494 = vpop.f32.mrb[0].mxu0
        %v2495 = vadd.f32 0.0, %v2494
        %v2496 = vpop.f32.mrb[0].mxu0
        %2497 = vmatprep.mubr.bf16.mxu0 0
        %2498 = vmatmul.mubr.bf16.gmra.mrb[0].mxu0 %v2349
        %v2499 = vpop.f32.mrb[0].mxu0
        %v2500 = vadd.f32 0.0, %v2499
        %v2501 = vpop.f32.mrb[0].mxu0
        %v2502 = vpop.f32.mrb[0].mxu0
        %v2503 = vadd.f32 0.0, %v2502
        %v2504 = vpop.f32.mrb[0].mxu0
        %2505 = vmatprep.mubr.bf16.mxu0 0
        %2506 = vmatmul.mubr.bf16.gmra.mrb[0].mxu0 %v2350
        %v2507 = vpop.f32.mrb[0].mxu0
        %v2508 = vadd.f32 0.0, %v2507
        %v2509 = vpop.f32.mrb[0].mxu0
        %v2510 = vpop.f32.mrb[0].mxu0
        %v2511 = vadd.f32 0.0, %v2510
        %v2512 = vpop.f32.mrb[0].mxu0
        %2513 = vmatprep.mubr.bf16.mxu0 0
        %2514 = vmatmul.mubr.bf16.gmra.mrb[0].mxu0 %v2351
        %v2515 = vpop.f32.mrb[0].mxu0
        %v2516 = vadd.f32 0.0, %v2515
        %v2517 = vpop.f32.mrb[0].mxu0
        %v2518 = vpop.f32.mrb[0].mxu0
        %v2519 = vadd.f32 0.0, %v2518
        %v2520 = vpop.f32.mrb[0].mxu0
        %2521 = vmatprep.mubr.bf16.mxu0 0
        %2522 = vmatmul.mubr.bf16.gmra.mrb[0].mxu0 %v2352
        %v2523 = vpop.f32.mrb[0].mxu0
        %v2524 = vadd.f32 0.0, %v2523
        %v2525 = vpop.f32.mrb[0].mxu0
        %v2526 = vpop.f32.mrb[0].mxu0
        %v2527 = vadd.f32 0.0, %v2526
        %v2528 = vpop.f32.mrb[0].mxu0
        %2529 = vmatprep.mubr.bf16.mxu0 0
        %2530 = vmatmul.mubr.bf16.gmra.mrb[0].mxu0 %v2353
        %v2531 = vpop.f32.mrb[0].mxu0
        %v2532 = vadd.f32 0.0, %v2531
        %v2533 = vpop.f32.mrb[0].mxu0
        %v2534 = vpop.f32.mrb[0].mxu0
        %v2535 = vadd.f32 0.0, %v2534
        %v2536 = vpop.f32.mrb[0].mxu0
        %2537 = vmatprep.mubr.bf16.mxu0 0
        %2538 = vmatmul.mubr.bf16.gmra.mrb[0].mxu0 %v2354
        %v2539 = vpop.f32.mrb[0].mxu0
        %v2540 = vadd.f32 0.0, %v2539
        %v2541 = vpop.f32.mrb[0].mxu0
        %v2542 = vpop.f32.mrb[0].mxu0
        %v2543 = vadd.f32 0.0, %v2542
        %v2544 = vpop.f32.mrb[0].mxu0
        %2545 = vmatprep.mubr.bf16.mxu0 0
        %2546 = vmatmul.mubr.bf16.gmra.mrb[0].mxu0 %v2355
        %v2547 = vpop.f32.mrb[0].mxu0
        %v2548 = vadd.f32 0.0, %v2547
        %v2549 = vpop.f32.mrb[0].mxu0
        %v2550 = vpop.f32.mrb[0].mxu0
        %v2551 = vadd.f32 0.0, %v2550
        %v2552 = vpop.f32.mrb[0].mxu0
        %2553 = vmatprep.mubr.bf16.mxu0 0
        %2554 = vmatmul.mubr.bf16.gmra.mrb[0].mxu0 %v2356
        %v2555 = vpop.f32.mrb[0].mxu0
        %v2556 = vadd.f32 0.0, %v2555
        %v2557 = vpop.f32.mrb[0].mxu0
        %v2558 = vpop.f32.mrb[0].mxu0
        %v2559 = vadd.f32 0.0, %v2558
        %v2560 = vpop.f32.mrb[0].mxu0
        %2561 = vmatprep.mubr.bf16.mxu0 0
        %2562 = vmatmul.mubr.bf16.gmra.mrb[0].mxu0 %v2357
        %v2563 = vpop.f32.mrb[0].mxu0
        %v2564 = vadd.f32 0.0, %v2563
        %v2565 = vpop.f32.mrb[0].mxu0
        %v2566 = vpop.f32.mrb[0].mxu0
        %v2567 = vadd.f32 0.0, %v2566
        %v2568 = vpop.f32.mrb[0].mxu0
        %2569 = vmatprep.mubr.bf16.mxu0 0
        %2570 = vmatmul.mubr.bf16.gmra.mrb[0].mxu0 %v2358
        %v2571 = vpop.f32.mrb[0].mxu0
        %v2572 = vadd.f32 0.0, %v2571
        %v2573 = vpop.f32.mrb[0].mxu0
        %v2574 = vpop.f32.mrb[0].mxu0
        %v2575 = vadd.f32 0.0, %v2574
        %v2576 = vpop.f32.mrb[0].mxu0
        %2577 = vmatprep.mubr.bf16.mxu0 0
        %2578 = vmatmul.mubr.bf16.gmra.mrb[0].mxu0 %v2359
        %v2579 = vpop.f32.mrb[0].mxu0
        %v2580 = vadd.f32 0.0, %v2579
        %v2581 = vpop.f32.mrb[0].mxu0
        %v2582 = vpop.f32.mrb[0].mxu0
        %v2583 = vadd.f32 0.0, %v2582
        %v2584 = vpop.f32.mrb[0].mxu0
        %2585 = vdwg.mxu0
        %v2586 = vadd.f32 %v2312, %v2460
        %v2587 = vadd.f32 %v2313, %v2463
        %v2588 = vadd.f32 %v2314, %v2468
        %v2589 = vadd.f32 %v2315, %v2471
        %v2590 = vadd.f32 %v2316, %v2476
        %v2591 = vadd.f32 %v2317, %v2479
        %v2592 = vadd.f32 %v2318, %v2484
        %v2593 = vadd.f32 %v2319, %v2487
        %v2594 = vadd.f32 %v2320, %v2492
        %v2595 = vadd.f32 %v2321, %v2495
        %v2596 = vadd.f32 %v2322, %v2500
        %v2597 = vadd.f32 %v2323, %v2503
        %v2598 = vadd.f32 %v2324, %v2508
        %v2599 = vadd.f32 %v2325, %v2511
        %v2600 = vadd.f32 %v2326, %v2516
        %v2601 = vadd.f32 %v2327, %v2519
        %v2602 = vadd.f32 %v2328, %v2524
        %v2603 = vadd.f32 %v2329, %v2527
        %v2604 = vadd.f32 %v2330, %v2532
        %v2605 = vadd.f32 %v2331, %v2535
        %v2606 = vadd.f32 %v2332, %v2540
        %v2607 = vadd.f32 %v2333, %v2543
        %v2608 = vadd.f32 %v2334, %v2548
        %v2609 = vadd.f32 %v2335, %v2551
        %v2610 = vadd.f32 %v2336, %v2556
        %v2611 = vadd.f32 %v2337, %v2559
        %v2612 = vadd.f32 %v2338, %v2564
        %v2613 = vadd.f32 %v2339, %v2567
        %v2614 = vadd.f32 %v2340, %v2572
        %v2615 = vadd.f32 %v2341, %v2575
        %v2616 = vadd.f32 %v2342, %v2580
        %v2617 = vadd.f32 %v2343, %v2583
        %s2618 = scalar_lea.vmem %s6, 3
        %v2619 = vld [vmem:[%s2618] sm:$0x1]
        %v2621 = vlaneseq
        %v2622 = vshrl.u32 %v2621, 7
        %v2623 = vsub.s32 0, %v2622
        %v2624 = vrot.slane %v2619, %v2623
        %v2626 = vadd.f32 %v2586, %v2624
        %v2627 = vadd.f32 %v2587, %v2624
        %v2628 = vadd.f32 %v2588, %v2624
        %v2629 = vadd.f32 %v2589, %v2624
        %v2630 = vadd.f32 %v2590, %v2624
        %v2631 = vadd.f32 %v2591, %v2624
        %v2632 = vadd.f32 %v2592, %v2624
        %v2633 = vadd.f32 %v2593, %v2624
        %v2634 = vadd.f32 %v2594, %v2624
        %v2635 = vadd.f32 %v2595, %v2624
        %v2636 = vadd.f32 %v2596, %v2624
        %v2637 = vadd.f32 %v2597, %v2624
        %v2638 = vadd.f32 %v2598, %v2624
        %v2639 = vadd.f32 %v2599, %v2624
        %v2640 = vadd.f32 %v2600, %v2624
        %v2641 = vadd.f32 %v2601, %v2624
        %v2642 = vadd.f32 %v2602, %v2624
        %v2643 = vadd.f32 %v2603, %v2624
        %v2644 = vadd.f32 %v2604, %v2624
        %v2645 = vadd.f32 %v2605, %v2624
        %v2646 = vadd.f32 %v2606, %v2624
        %v2647 = vadd.f32 %v2607, %v2624
        %v2648 = vadd.f32 %v2608, %v2624
        %v2649 = vadd.f32 %v2609, %v2624
        %v2650 = vadd.f32 %v2610, %v2624
        %v2651 = vadd.f32 %v2611, %v2624
        %v2652 = vadd.f32 %v2612, %v2624
        %v2653 = vadd.f32 %v2613, %v2624
        %v2654 = vadd.f32 %v2614, %v2624
        %v2655 = vadd.f32 %v2615, %v2624
        %v2656 = vadd.f32 %v2616, %v2624
        %v2657 = vadd.f32 %v2617, %v2624
        %vm2658 = vcmp.gt.f32.partialorder %v2626, 0.0
        %vm2659 = vcmp.gt.f32.partialorder %v2627, 0.0
        %vm2660 = vcmp.gt.f32.partialorder %v2628, 0.0
        %vm2661 = vcmp.gt.f32.partialorder %v2629, 0.0
        %vm2662 = vcmp.gt.f32.partialorder %v2630, 0.0
        %vm2663 = vcmp.gt.f32.partialorder %v2631, 0.0
        %vm2664 = vcmp.gt.f32.partialorder %v2632, 0.0
        %vm2665 = vcmp.gt.f32.partialorder %v2633, 0.0
        %vm2666 = vcmp.gt.f32.partialorder %v2634, 0.0
        %vm2667 = vcmp.gt.f32.partialorder %v2635, 0.0
        %vm2668 = vcmp.gt.f32.partialorder %v2636, 0.0
        %vm2669 = vcmp.gt.f32.partialorder %v2637, 0.0
        %vm2670 = vcmp.gt.f32.partialorder %v2638, 0.0
        %vm2671 = vcmp.gt.f32.partialorder %v2639, 0.0
        %vm2672 = vcmp.gt.f32.partialorder %v2640, 0.0
        %vm2673 = vcmp.gt.f32.partialorder %v2641, 0.0
        %vm2674 = vcmp.gt.f32.partialorder %v2642, 0.0
        %vm2675 = vcmp.gt.f32.partialorder %v2643, 0.0
        %vm2676 = vcmp.gt.f32.partialorder %v2644, 0.0
        %vm2677 = vcmp.gt.f32.partialorder %v2645, 0.0
        %vm2678 = vcmp.gt.f32.partialorder %v2646, 0.0
        %vm2679 = vcmp.gt.f32.partialorder %v2647, 0.0
        %vm2680 = vcmp.gt.f32.partialorder %v2648, 0.0
        %vm2681 = vcmp.gt.f32.partialorder %v2649, 0.0
        %vm2682 = vcmp.gt.f32.partialorder %v2650, 0.0
        %vm2683 = vcmp.gt.f32.partialorder %v2651, 0.0
        %vm2684 = vcmp.gt.f32.partialorder %v2652, 0.0
        %vm2685 = vcmp.gt.f32.partialorder %v2653, 0.0
        %vm2686 = vcmp.gt.f32.partialorder %v2654, 0.0
        %vm2687 = vcmp.gt.f32.partialorder %v2655, 0.0
        %vm2688 = vcmp.gt.f32.partialorder %v2656, 0.0
        %vm2689 = vcmp.gt.f32.partialorder %v2657, 0.0
        %v2690 = vmul.f32 %v2626, 0.01
        %v2691 = vmul.f32 %v2627, 0.01
        %v2692 = vmul.f32 %v2628, 0.01
        %v2693 = vmul.f32 %v2629, 0.01
        %v2694 = vmul.f32 %v2630, 0.01
        %v2695 = vmul.f32 %v2631, 0.01
        %v2696 = vmul.f32 %v2632, 0.01
        %v2697 = vmul.f32 %v2633, 0.01
        %v2698 = vmul.f32 %v2634, 0.01
        %v2699 = vmul.f32 %v2635, 0.01
        %v2700 = vmul.f32 %v2636, 0.01
        %v2701 = vmul.f32 %v2637, 0.01
        %v2702 = vmul.f32 %v2638, 0.01
        %v2703 = vmul.f32 %v2639, 0.01
        %v2704 = vmul.f32 %v2640, 0.01
        %v2705 = vmul.f32 %v2641, 0.01
        %v2706 = vmul.f32 %v2642, 0.01
        %v2707 = vmul.f32 %v2643, 0.01
        %v2708 = vmul.f32 %v2644, 0.01
        %v2709 = vmul.f32 %v2645, 0.01
        %v2710 = vmul.f32 %v2646, 0.01
        %v2711 = vmul.f32 %v2647, 0.01
        %v2712 = vmul.f32 %v2648, 0.01
        %v2713 = vmul.f32 %v2649, 0.01
        %v2714 = vmul.f32 %v2650, 0.01
        %v2715 = vmul.f32 %v2651, 0.01
        %v2716 = vmul.f32 %v2652, 0.01
        %v2717 = vmul.f32 %v2653, 0.01
        %v2718 = vmul.f32 %v2654, 0.01
        %v2719 = vmul.f32 %v2655, 0.01
        %v2720 = vmul.f32 %v2656, 0.01
        %v2721 = vmul.f32 %v2657, 0.01
        %v2722 = vsel %vm2658, %v2626, %v2690
        %v2723 = vsel %vm2659, %v2627, %v2691
        %v2724 = vsel %vm2660, %v2628, %v2692
        %v2725 = vsel %vm2661, %v2629, %v2693
        %v2726 = vsel %vm2662, %v2630, %v2694
        %v2727 = vsel %vm2663, %v2631, %v2695
        %v2728 = vsel %vm2664, %v2632, %v2696
        %v2729 = vsel %vm2665, %v2633, %v2697
        %v2730 = vsel %vm2666, %v2634, %v2698
        %v2731 = vsel %vm2667, %v2635, %v2699
        %v2732 = vsel %vm2668, %v2636, %v2700
        %v2733 = vsel %vm2669, %v2637, %v2701
        %v2734 = vsel %vm2670, %v2638, %v2702
        %v2735 = vsel %vm2671, %v2639, %v2703
        %v2736 = vsel %vm2672, %v2640, %v2704
        %v2737 = vsel %vm2673, %v2641, %v2705
        %v2738 = vsel %vm2674, %v2642, %v2706
        %v2739 = vsel %vm2675, %v2643, %v2707
        %v2740 = vsel %vm2676, %v2644, %v2708
        %v2741 = vsel %vm2677, %v2645, %v2709
        %v2742 = vsel %vm2678, %v2646, %v2710
        %v2743 = vsel %vm2679, %v2647, %v2711
        %v2744 = vsel %vm2680, %v2648, %v2712
        %v2745 = vsel %vm2681, %v2649, %v2713
        %v2746 = vsel %vm2682, %v2650, %v2714
        %v2747 = vsel %vm2683, %v2651, %v2715
        %v2748 = vsel %vm2684, %v2652, %v2716
        %v2749 = vsel %vm2685, %v2653, %v2717
        %v2750 = vsel %vm2686, %v2654, %v2718
        %v2751 = vsel %vm2687, %v2655, %v2719
        %v2752 = vsel %vm2688, %v2656, %v2720
        %v2753 = vsel %vm2689, %v2657, %v2721
        %v2754 = vadd.f32 %v1084, %v2722
        %v2755 = vadd.f32 %v1085, %v2723
        %v2756 = vadd.f32 %v1086, %v2724
        %v2757 = vadd.f32 %v1087, %v2725
        %v2758 = vadd.f32 %v1088, %v2726
        %v2759 = vadd.f32 %v1089, %v2727
        %v2760 = vadd.f32 %v1090, %v2728
        %v2761 = vadd.f32 %v1091, %v2729
        %v2762 = vadd.f32 %v1092, %v2730
        %v2763 = vadd.f32 %v1093, %v2731
        %v2764 = vadd.f32 %v1094, %v2732
        %v2765 = vadd.f32 %v1095, %v2733
        %v2766 = vadd.f32 %v1096, %v2734
        %v2767 = vadd.f32 %v1097, %v2735
        %v2768 = vadd.f32 %v1098, %v2736
        %v2769 = vadd.f32 %v1099, %v2737
        %v2770 = vadd.f32 %v1100, %v2738
        %v2771 = vadd.f32 %v1101, %v2739
        %v2772 = vadd.f32 %v1102, %v2740
        %v2773 = vadd.f32 %v1103, %v2741
        %v2774 = vadd.f32 %v1104, %v2742
        %v2775 = vadd.f32 %v1105, %v2743
        %v2776 = vadd.f32 %v1106, %v2744
        %v2777 = vadd.f32 %v1107, %v2745
        %v2778 = vadd.f32 %v1108, %v2746
        %v2779 = vadd.f32 %v1109, %v2747
        %v2780 = vadd.f32 %v1110, %v2748
        %v2781 = vadd.f32 %v1111, %v2749
        %v2782 = vadd.f32 %v1112, %v2750
        %v2783 = vadd.f32 %v1113, %v2751
        %v2784 = vadd.f32 %v1114, %v2752
        %v2785 = vadd.f32 %v1115, %v2753
        %v2786 = vpack.c.bf16 %v2755, %v2754
        %v2787 = vpack.c.bf16 %v2757, %v2756
        %v2788 = vpack.c.bf16 %v2759, %v2758
        %v2789 = vpack.c.bf16 %v2761, %v2760
        %v2790 = vpack.c.bf16 %v2763, %v2762
        %v2791 = vpack.c.bf16 %v2765, %v2764
        %v2792 = vpack.c.bf16 %v2767, %v2766
        %v2793 = vpack.c.bf16 %v2769, %v2768
        %v2794 = vpack.c.bf16 %v2771, %v2770
        %v2795 = vpack.c.bf16 %v2773, %v2772
        %v2796 = vpack.c.bf16 %v2775, %v2774
        %v2797 = vpack.c.bf16 %v2777, %v2776
        %v2798 = vpack.c.bf16 %v2779, %v2778
        %v2799 = vpack.c.bf16 %v2781, %v2780
        %v2800 = vpack.c.bf16 %v2783, %v2782
        %v2801 = vpack.c.bf16 %v2785, %v2784
        %v2802 = vld [vmem:[%s7] sm:$0xf]
        %v2803 = vld [vmem:[%s7 + $0x4] sm:$0xf]
        %v2804 = vld [vmem:[%s7 + $0x8] sm:$0xf]
        %v2805 = vld [vmem:[%s7 + $0xc] sm:$0xf]
        %v2806 = vld [vmem:[%s7 + $0x10] sm:$0xf]
        %v2807 = vld [vmem:[%s7 + $0x14] sm:$0xf]
        %v2808 = vld [vmem:[%s7 + $0x18] sm:$0xf]
        %v2809 = vld [vmem:[%s7 + $0x1c] sm:$0xf]
        %v2810 = vld [vmem:[%s7 + $0x20] sm:$0xf]
        %v2811 = vld [vmem:[%s7 + $0x24] sm:$0xf]
        %v2812 = vld [vmem:[%s7 + $0x28] sm:$0xf]
        %v2813 = vld [vmem:[%s7 + $0x2c] sm:$0xf]
        %v2814 = vld [vmem:[%s7 + $0x30] sm:$0xf]
        %v2815 = vld [vmem:[%s7 + $0x34] sm:$0xf]
        %v2816 = vld [vmem:[%s7 + $0x38] sm:$0xf]
        %v2817 = vld [vmem:[%s7 + $0x3c] sm:$0xf]
        %v2818 = vld [vmem:[%s8] sm:$0x1]
        %v2820 = vlaneseq
        %v2821 = vshrl.u32 %v2820, 7
        %v2822 = vsub.s32 0, %v2821
        %v2823 = vrot.slane %v2818, %v2822
        %v2841 = vunpack.c.l.b16 %v2802
        %v2842 = vunpack.c.l.b16 %v2803
        %v2843 = vunpack.c.l.b16 %v2804
        %v2844 = vunpack.c.l.b16 %v2805
        %v2845 = vunpack.c.l.b16 %v2806
        %v2846 = vunpack.c.l.b16 %v2807
        %v2847 = vunpack.c.l.b16 %v2808
        %v2848 = vunpack.c.l.b16 %v2809
        %v2849 = vunpack.c.l.b16 %v2810
        %v2850 = vunpack.c.l.b16 %v2811
        %v2851 = vunpack.c.l.b16 %v2812
        %v2852 = vunpack.c.l.b16 %v2813
        %v2853 = vunpack.c.l.b16 %v2814
        %v2854 = vunpack.c.l.b16 %v2815
        %v2855 = vunpack.c.l.b16 %v2816
        %v2856 = vunpack.c.l.b16 %v2817
        %v2857 = vpack.c.b16 %v2842, %v2841
        %v2858 = vpack.c.b16 %v2844, %v2843
        %v2859 = vpack.c.b16 %v2846, %v2845
        %v2860 = vpack.c.b16 %v2848, %v2847
        %v2861 = vpack.c.b16 %v2850, %v2849
        %v2862 = vpack.c.b16 %v2852, %v2851
        %v2863 = vpack.c.b16 %v2854, %v2853
        %v2864 = vpack.c.b16 %v2856, %v2855
        %2873 = vmatprep.subr.bf16.mxu0 0
        %2874 = vmatpush1.bf16.msra.mxu0 %v2857
        %2875 = vmatprep.subr.bf16.mxu0 0
        %2876 = vmatpush1.bf16.msra.mxu0 %v2858
        %2877 = vmatprep.subr.bf16.mxu0 0
        %2878 = vmatpush1.bf16.msra.mxu0 %v2859
        %2879 = vmatprep.subr.bf16.mxu0 0
        %2880 = vmatpush1.bf16.msra.mxu0 %v2860
        %2881 = vmatprep.subr.bf16.mxu0 0
        %2882 = vmatpush1.bf16.msra.mxu0 %v2861
        %2883 = vmatprep.subr.bf16.mxu0 0
        %2884 = vmatpush1.bf16.msra.mxu0 %v2862
        %2885 = vmatprep.subr.bf16.mxu0 0
        %2886 = vmatpush1.bf16.msra.mxu0 %v2863
        %2887 = vmatprep.subr.bf16.mxu0 0
        %2888 = vmatpush1.bf16.msra.mxu0 %v2864
        %2889 = vmatprep.subr.bf16.mxu0 0
        %2890 = vmatpush1.bf16.msra.mxu0 0
        %2891 = vmatprep.subr.bf16.mxu0 0
        %2892 = vmatpush1.bf16.msra.mxu0 0
        %2893 = vmatprep.subr.bf16.mxu0 0
        %2894 = vmatpush1.bf16.msra.mxu0 0
        %2895 = vmatprep.subr.bf16.mxu0 0
        %2896 = vmatpush1.bf16.msra.mxu0 0
        %2897 = vmatprep.subr.bf16.mxu0 0
        %2898 = vmatpush1.bf16.msra.mxu0 0
        %2899 = vmatprep.subr.bf16.mxu0 0
        %2900 = vmatpush1.bf16.msra.mxu0 0
        %2901 = vmatprep.subr.bf16.mxu0 0
        %2902 = vmatpush1.bf16.msra.mxu0 0
        %2903 = vmatprep.subr.bf16.mxu0 0
        %2904 = vmatpush1.bf16.msra.mxu0 0
        %2905 = vmatprep.mubr.bf16.mxu0 0
        %2906 = vmatmul.mubr.bf16.gmra.mrb[0].mxu0 %v2786
        %v2907 = vpop.f32.mrb[0].mxu0
        %v2908 = vadd.f32 %v2823, %v2907
        %v2909 = vpop.f32.mrb[0].mxu0
        %v2910 = vpop.f32.mrb[0].mxu0
        %v2911 = vadd.f32 %v2823, %v2910
        %v2912 = vpop.f32.mrb[0].mxu0
        %2913 = vmatprep.mubr.bf16.mxu0 0
        %2914 = vmatmul.mubr.bf16.gmra.mrb[0].mxu0 %v2787
        %v2915 = vpop.f32.mrb[0].mxu0
        %v2916 = vadd.f32 %v2823, %v2915
        %v2917 = vpop.f32.mrb[0].mxu0
        %v2918 = vpop.f32.mrb[0].mxu0
        %v2919 = vadd.f32 %v2823, %v2918
        %v2920 = vpop.f32.mrb[0].mxu0
        %2921 = vmatprep.mubr.bf16.mxu0 0
        %2922 = vmatmul.mubr.bf16.gmra.mrb[0].mxu0 %v2788
        %v2923 = vpop.f32.mrb[0].mxu0
        %v2924 = vadd.f32 %v2823, %v2923
        %v2925 = vpop.f32.mrb[0].mxu0
        %v2926 = vpop.f32.mrb[0].mxu0
        %v2927 = vadd.f32 %v2823, %v2926
        %v2928 = vpop.f32.mrb[0].mxu0
        %2929 = vmatprep.mubr.bf16.mxu0 0
        %2930 = vmatmul.mubr.bf16.gmra.mrb[0].mxu0 %v2789
        %v2931 = vpop.f32.mrb[0].mxu0
        %v2932 = vadd.f32 %v2823, %v2931
        %v2933 = vpop.f32.mrb[0].mxu0
        %v2934 = vpop.f32.mrb[0].mxu0
        %v2935 = vadd.f32 %v2823, %v2934
        %v2936 = vpop.f32.mrb[0].mxu0
        %2937 = vmatprep.mubr.bf16.mxu0 0
        %2938 = vmatmul.mubr.bf16.gmra.mrb[0].mxu0 %v2790
        %v2939 = vpop.f32.mrb[0].mxu0
        %v2940 = vadd.f32 %v2823, %v2939
        %v2941 = vpop.f32.mrb[0].mxu0
        %v2942 = vpop.f32.mrb[0].mxu0
        %v2943 = vadd.f32 %v2823, %v2942
        %v2944 = vpop.f32.mrb[0].mxu0
        %2945 = vmatprep.mubr.bf16.mxu0 0
        %2946 = vmatmul.mubr.bf16.gmra.mrb[0].mxu0 %v2791
        %v2947 = vpop.f32.mrb[0].mxu0
        %v2948 = vadd.f32 %v2823, %v2947
        %v2949 = vpop.f32.mrb[0].mxu0
        %v2950 = vpop.f32.mrb[0].mxu0
        %v2951 = vadd.f32 %v2823, %v2950
        %v2952 = vpop.f32.mrb[0].mxu0
        %2953 = vmatprep.mubr.bf16.mxu0 0
        %2954 = vmatmul.mubr.bf16.gmra.mrb[0].mxu0 %v2792
        %v2955 = vpop.f32.mrb[0].mxu0
        %v2956 = vadd.f32 %v2823, %v2955
        %v2957 = vpop.f32.mrb[0].mxu0
        %v2958 = vpop.f32.mrb[0].mxu0
        %v2959 = vadd.f32 %v2823, %v2958
        %v2960 = vpop.f32.mrb[0].mxu0
        %2961 = vmatprep.mubr.bf16.mxu0 0
        %2962 = vmatmul.mubr.bf16.gmra.mrb[0].mxu0 %v2793
        %v2963 = vpop.f32.mrb[0].mxu0
        %v2964 = vadd.f32 %v2823, %v2963
        %v2965 = vpop.f32.mrb[0].mxu0
        %v2966 = vpop.f32.mrb[0].mxu0
        %v2967 = vadd.f32 %v2823, %v2966
        %v2968 = vpop.f32.mrb[0].mxu0
        %2969 = vmatprep.mubr.bf16.mxu0 0
        %2970 = vmatmul.mubr.bf16.gmra.mrb[0].mxu0 %v2794
        %v2971 = vpop.f32.mrb[0].mxu0
        %v2972 = vadd.f32 %v2823, %v2971
        %v2973 = vpop.f32.mrb[0].mxu0
        %v2974 = vpop.f32.mrb[0].mxu0
        %v2975 = vadd.f32 %v2823, %v2974
        %v2976 = vpop.f32.mrb[0].mxu0
        %2977 = vmatprep.mubr.bf16.mxu0 0
        %2978 = vmatmul.mubr.bf16.gmra.mrb[0].mxu0 %v2795
        %v2979 = vpop.f32.mrb[0].mxu0
        %v2980 = vadd.f32 %v2823, %v2979
        %v2981 = vpop.f32.mrb[0].mxu0
        %v2982 = vpop.f32.mrb[0].mxu0
        %v2983 = vadd.f32 %v2823, %v2982
        %v2984 = vpop.f32.mrb[0].mxu0
        %2985 = vmatprep.mubr.bf16.mxu0 0
        %2986 = vmatmul.mubr.bf16.gmra.mrb[0].mxu0 %v2796
        %v2987 = vpop.f32.mrb[0].mxu0
        %v2988 = vadd.f32 %v2823, %v2987
        %v2989 = vpop.f32.mrb[0].mxu0
        %v2990 = vpop.f32.mrb[0].mxu0
        %v2991 = vadd.f32 %v2823, %v2990
        %v2992 = vpop.f32.mrb[0].mxu0
        %2993 = vmatprep.mubr.bf16.mxu0 0
        %2994 = vmatmul.mubr.bf16.gmra.mrb[0].mxu0 %v2797
        %v2995 = vpop.f32.mrb[0].mxu0
        %v2996 = vadd.f32 %v2823, %v2995
        %v2997 = vpop.f32.mrb[0].mxu0
        %v2998 = vpop.f32.mrb[0].mxu0
        %v2999 = vadd.f32 %v2823, %v2998
        %v3000 = vpop.f32.mrb[0].mxu0
        %3001 = vmatprep.mubr.bf16.mxu0 0
        %3002 = vmatmul.mubr.bf16.gmra.mrb[0].mxu0 %v2798
        %v3003 = vpop.f32.mrb[0].mxu0
        %v3004 = vadd.f32 %v2823, %v3003
        %v3005 = vpop.f32.mrb[0].mxu0
        %v3006 = vpop.f32.mrb[0].mxu0
        %v3007 = vadd.f32 %v2823, %v3006
        %v3008 = vpop.f32.mrb[0].mxu0
        %3009 = vmatprep.mubr.bf16.mxu0 0
        %3010 = vmatmul.mubr.bf16.gmra.mrb[0].mxu0 %v2799
        %v3011 = vpop.f32.mrb[0].mxu0
        %v3012 = vadd.f32 %v2823, %v3011
        %v3013 = vpop.f32.mrb[0].mxu0
        %v3014 = vpop.f32.mrb[0].mxu0
        %v3015 = vadd.f32 %v2823, %v3014
        %v3016 = vpop.f32.mrb[0].mxu0
        %3017 = vmatprep.mubr.bf16.mxu0 0
        %3018 = vmatmul.mubr.bf16.gmra.mrb[0].mxu0 %v2800
        %v3019 = vpop.f32.mrb[0].mxu0
        %v3020 = vadd.f32 %v2823, %v3019
        %v3021 = vpop.f32.mrb[0].mxu0
        %v3022 = vpop.f32.mrb[0].mxu0
        %v3023 = vadd.f32 %v2823, %v3022
        %v3024 = vpop.f32.mrb[0].mxu0
        %3025 = vmatprep.mubr.bf16.mxu0 0
        %3026 = vmatmul.mubr.bf16.gmra.mrb[0].mxu0 %v2801
        %v3027 = vpop.f32.mrb[0].mxu0
        %v3028 = vadd.f32 %v2823, %v3027
        %v3029 = vpop.f32.mrb[0].mxu0
        %v3030 = vpop.f32.mrb[0].mxu0
        %v3031 = vadd.f32 %v2823, %v3030
        %v3032 = vpop.f32.mrb[0].mxu0
        %3033 = vdwg.mxu0
        %vm3034 = vcmp.gt.f32.partialorder %v2908, 0.0
        %vm3035 = vcmp.gt.f32.partialorder %v2911, 0.0
        %vm3036 = vcmp.gt.f32.partialorder %v2916, 0.0
        %vm3037 = vcmp.gt.f32.partialorder %v2919, 0.0
        %vm3038 = vcmp.gt.f32.partialorder %v2924, 0.0
        %vm3039 = vcmp.gt.f32.partialorder %v2927, 0.0
        %vm3040 = vcmp.gt.f32.partialorder %v2932, 0.0
        %vm3041 = vcmp.gt.f32.partialorder %v2935, 0.0
        %vm3042 = vcmp.gt.f32.partialorder %v2940, 0.0
        %vm3043 = vcmp.gt.f32.partialorder %v2943, 0.0
        %vm3044 = vcmp.gt.f32.partialorder %v2948, 0.0
        %vm3045 = vcmp.gt.f32.partialorder %v2951, 0.0
        %vm3046 = vcmp.gt.f32.partialorder %v2956, 0.0
        %vm3047 = vcmp.gt.f32.partialorder %v2959, 0.0
        %vm3048 = vcmp.gt.f32.partialorder %v2964, 0.0
        %vm3049 = vcmp.gt.f32.partialorder %v2967, 0.0
        %vm3050 = vcmp.gt.f32.partialorder %v2972, 0.0
        %vm3051 = vcmp.gt.f32.partialorder %v2975, 0.0
        %vm3052 = vcmp.gt.f32.partialorder %v2980, 0.0
        %vm3053 = vcmp.gt.f32.partialorder %v2983, 0.0
        %vm3054 = vcmp.gt.f32.partialorder %v2988, 0.0
        %vm3055 = vcmp.gt.f32.partialorder %v2991, 0.0
        %vm3056 = vcmp.gt.f32.partialorder %v2996, 0.0
        %vm3057 = vcmp.gt.f32.partialorder %v2999, 0.0
        %vm3058 = vcmp.gt.f32.partialorder %v3004, 0.0
        %vm3059 = vcmp.gt.f32.partialorder %v3007, 0.0
        %vm3060 = vcmp.gt.f32.partialorder %v3012, 0.0
        %vm3061 = vcmp.gt.f32.partialorder %v3015, 0.0
        %vm3062 = vcmp.gt.f32.partialorder %v3020, 0.0
        %vm3063 = vcmp.gt.f32.partialorder %v3023, 0.0
        %vm3064 = vcmp.gt.f32.partialorder %v3028, 0.0
        %vm3065 = vcmp.gt.f32.partialorder %v3031, 0.0
        %v3066 = vmul.f32 %v2908, 0.01
        %v3067 = vmul.f32 %v2911, 0.01
        %v3068 = vmul.f32 %v2916, 0.01
        %v3069 = vmul.f32 %v2919, 0.01
        %v3070 = vmul.f32 %v2924, 0.01
        %v3071 = vmul.f32 %v2927, 0.01
        %v3072 = vmul.f32 %v2932, 0.01
        %v3073 = vmul.f32 %v2935, 0.01
        %v3074 = vmul.f32 %v2940, 0.01
        %v3075 = vmul.f32 %v2943, 0.01
        %v3076 = vmul.f32 %v2948, 0.01
        %v3077 = vmul.f32 %v2951, 0.01
        %v3078 = vmul.f32 %v2956, 0.01
        %v3079 = vmul.f32 %v2959, 0.01
        %v3080 = vmul.f32 %v2964, 0.01
        %v3081 = vmul.f32 %v2967, 0.01
        %v3082 = vmul.f32 %v2972, 0.01
        %v3083 = vmul.f32 %v2975, 0.01
        %v3084 = vmul.f32 %v2980, 0.01
        %v3085 = vmul.f32 %v2983, 0.01
        %v3086 = vmul.f32 %v2988, 0.01
        %v3087 = vmul.f32 %v2991, 0.01
        %v3088 = vmul.f32 %v2996, 0.01
        %v3089 = vmul.f32 %v2999, 0.01
        %v3090 = vmul.f32 %v3004, 0.01
        %v3091 = vmul.f32 %v3007, 0.01
        %v3092 = vmul.f32 %v3012, 0.01
        %v3093 = vmul.f32 %v3015, 0.01
        %v3094 = vmul.f32 %v3020, 0.01
        %v3095 = vmul.f32 %v3023, 0.01
        %v3096 = vmul.f32 %v3028, 0.01
        %v3097 = vmul.f32 %v3031, 0.01
        %v3098 = vsel %vm3034, %v2908, %v3066
        %v3099 = vsel %vm3035, %v2911, %v3067
        %v3100 = vsel %vm3036, %v2916, %v3068
        %v3101 = vsel %vm3037, %v2919, %v3069
        %v3102 = vsel %vm3038, %v2924, %v3070
        %v3103 = vsel %vm3039, %v2927, %v3071
        %v3104 = vsel %vm3040, %v2932, %v3072
        %v3105 = vsel %vm3041, %v2935, %v3073
        %v3106 = vsel %vm3042, %v2940, %v3074
        %v3107 = vsel %vm3043, %v2943, %v3075
        %v3108 = vsel %vm3044, %v2948, %v3076
        %v3109 = vsel %vm3045, %v2951, %v3077
        %v3110 = vsel %vm3046, %v2956, %v3078
        %v3111 = vsel %vm3047, %v2959, %v3079
        %v3112 = vsel %vm3048, %v2964, %v3080
        %v3113 = vsel %vm3049, %v2967, %v3081
        %v3114 = vsel %vm3050, %v2972, %v3082
        %v3115 = vsel %vm3051, %v2975, %v3083
        %v3116 = vsel %vm3052, %v2980, %v3084
        %v3117 = vsel %vm3053, %v2983, %v3085
        %v3118 = vsel %vm3054, %v2988, %v3086
        %v3119 = vsel %vm3055, %v2991, %v3087
        %v3120 = vsel %vm3056, %v2996, %v3088
        %v3121 = vsel %vm3057, %v2999, %v3089
        %v3122 = vsel %vm3058, %v3004, %v3090
        %v3123 = vsel %vm3059, %v3007, %v3091
        %v3124 = vsel %vm3060, %v3012, %v3092
        %v3125 = vsel %vm3061, %v3015, %v3093
        %v3126 = vsel %vm3062, %v3020, %v3094
        %v3127 = vsel %vm3063, %v3023, %v3095
        %v3128 = vsel %vm3064, %v3028, %v3096
        %v3129 = vsel %vm3065, %v3031, %v3097
        %v3130 = vpack.c.bf16 %v3099, %v3098
        %v3131 = vpack.c.bf16 %v3101, %v3100
        %v3132 = vpack.c.bf16 %v3103, %v3102
        %v3133 = vpack.c.bf16 %v3105, %v3104
        %v3134 = vpack.c.bf16 %v3107, %v3106
        %v3135 = vpack.c.bf16 %v3109, %v3108
        %v3136 = vpack.c.bf16 %v3111, %v3110
        %v3137 = vpack.c.bf16 %v3113, %v3112
        %v3138 = vpack.c.bf16 %v3115, %v3114
        %v3139 = vpack.c.bf16 %v3117, %v3116
        %v3140 = vpack.c.bf16 %v3119, %v3118
        %v3141 = vpack.c.bf16 %v3121, %v3120
        %v3142 = vpack.c.bf16 %v3123, %v3122
        %v3143 = vpack.c.bf16 %v3125, %v3124
        %v3144 = vpack.c.bf16 %v3127, %v3126
        %v3145 = vpack.c.bf16 %v3129, %v3128
        %v3146 = vld [vmem:[%s9] sm:$0xf]
        %v3147 = vld [vmem:[%s9 + $0x4] sm:$0xf]
        %v3148 = vld [vmem:[%s9 + $0x8] sm:$0xf]
        %v3149 = vld [vmem:[%s9 + $0xc] sm:$0xf]
        %v3150 = vld [vmem:[%s9 + $0x10] sm:$0xf]
        %v3151 = vld [vmem:[%s9 + $0x14] sm:$0xf]
        %v3152 = vld [vmem:[%s9 + $0x18] sm:$0xf]
        %v3153 = vld [vmem:[%s9 + $0x1c] sm:$0xf]
        %v3154 = vld [vmem:[%s10] sm:$0x1]
        %v3156 = vlaneseq
        %v3157 = vshrl.u32 %v3156, 7
        %v3158 = vsub.s32 0, %v3157
        %v3159 = vrot.slane %v3154, %v3158
        %v3169 = vunpack.c.l.b16 %v3146
        %v3170 = vunpack.c.l.b16 %v3147
        %v3171 = vunpack.c.l.b16 %v3148
        %v3172 = vunpack.c.l.b16 %v3149
        %v3173 = vunpack.c.l.b16 %v3150
        %v3174 = vunpack.c.l.b16 %v3151
        %v3175 = vunpack.c.l.b16 %v3152
        %v3176 = vunpack.c.l.b16 %v3153
        %v3177 = vpack.c.b16 %v3170, %v3169
        %v3178 = vpack.c.b16 %v3172, %v3171
        %v3179 = vpack.c.b16 %v3174, %v3173
        %v3180 = vpack.c.b16 %v3176, %v3175
        %v3186 = vsel %vm810, %v3130, 0
        %v3189 = vsel %vm810, %v3131, 0
        %v3192 = vsel %vm810, %v3132, 0
        %v3195 = vsel %vm810, %v3133, 0
        %v3198 = vsel %vm810, %v3134, 0
        %v3201 = vsel %vm810, %v3135, 0
        %v3204 = vsel %vm810, %v3136, 0
        %v3207 = vsel %vm810, %v3137, 0
        %v3210 = vsel %vm810, %v3138, 0
        %v3213 = vsel %vm810, %v3139, 0
        %v3216 = vsel %vm810, %v3140, 0
        %v3219 = vsel %vm810, %v3141, 0
        %v3222 = vsel %vm810, %v3142, 0
        %v3225 = vsel %vm810, %v3143, 0
        %v3228 = vsel %vm810, %v3144, 0
        %v3231 = vsel %vm810, %v3145, 0
        %3233 = vmatprep.subr.bf16.mxu0 0
        %3234 = vmatpush1.bf16.msra.mxu0 %v3177
        %3235 = vmatprep.subr.bf16.mxu0 0
        %3236 = vmatpush1.bf16.msra.mxu0 %v3178
        %3237 = vmatprep.subr.bf16.mxu0 0
        %3238 = vmatpush1.bf16.msra.mxu0 %v3179
        %3239 = vmatprep.subr.bf16.mxu0 0
        %3240 = vmatpush1.bf16.msra.mxu0 %v3180
        %3241 = vmatprep.subr.bf16.mxu0 0
        %3242 = vmatpush1.bf16.msra.mxu0 0
        %3243 = vmatprep.subr.bf16.mxu0 0
        %3244 = vmatpush1.bf16.msra.mxu0 0
        %3245 = vmatprep.subr.bf16.mxu0 0
        %3246 = vmatpush1.bf16.msra.mxu0 0
        %3247 = vmatprep.subr.bf16.mxu0 0
        %3248 = vmatpush1.bf16.msra.mxu0 0
        %3249 = vmatprep.subr.bf16.mxu0 0
        %3250 = vmatpush1.bf16.msra.mxu0 0
        %3251 = vmatprep.subr.bf16.mxu0 0
        %3252 = vmatpush1.bf16.msra.mxu0 0
        %3253 = vmatprep.subr.bf16.mxu0 0
        %3254 = vmatpush1.bf16.msra.mxu0 0
        %3255 = vmatprep.subr.bf16.mxu0 0
        %3256 = vmatpush1.bf16.msra.mxu0 0
        %3257 = vmatprep.subr.bf16.mxu0 0
        %3258 = vmatpush1.bf16.msra.mxu0 0
        %3259 = vmatprep.subr.bf16.mxu0 0
        %3260 = vmatpush1.bf16.msra.mxu0 0
        %3261 = vmatprep.subr.bf16.mxu0 0
        %3262 = vmatpush1.bf16.msra.mxu0 0
        %3263 = vmatprep.subr.bf16.mxu0 0
        %3264 = vmatpush1.bf16.msra.mxu0 0
        %3265 = vmatprep.mubr.bf16.mxu0 0
        %3266 = vmatmul.mubr.bf16.gmra.mrb[0].mxu0 %v3186
        %v3267 = vpop.f32.mrb[0].mxu0
        %v3268 = vadd.f32 %v3159, %v3267
        %v3269 = vpop.f32.mrb[0].mxu0
        %v3270 = vpop.f32.mrb[0].mxu0
        %v3271 = vadd.f32 %v3159, %v3270
        %v3272 = vpop.f32.mrb[0].mxu0
        %3273 = vmatprep.mubr.bf16.mxu0 0
        %3274 = vmatmul.mubr.bf16.gmra.mrb[0].mxu0 %v3189
        %v3275 = vpop.f32.mrb[0].mxu0
        %v3276 = vadd.f32 %v3159, %v3275
        %v3277 = vpop.f32.mrb[0].mxu0
        %v3278 = vpop.f32.mrb[0].mxu0
        %v3279 = vadd.f32 %v3159, %v3278
        %v3280 = vpop.f32.mrb[0].mxu0
        %3281 = vmatprep.mubr.bf16.mxu0 0
        %3282 = vmatmul.mubr.bf16.gmra.mrb[0].mxu0 %v3192
        %v3283 = vpop.f32.mrb[0].mxu0
        %v3284 = vadd.f32 %v3159, %v3283
        %v3285 = vpop.f32.mrb[0].mxu0
        %v3286 = vpop.f32.mrb[0].mxu0
        %v3287 = vadd.f32 %v3159, %v3286
        %v3288 = vpop.f32.mrb[0].mxu0
        %3289 = vmatprep.mubr.bf16.mxu0 0
        %3290 = vmatmul.mubr.bf16.gmra.mrb[0].mxu0 %v3195
        %v3291 = vpop.f32.mrb[0].mxu0
        %v3292 = vadd.f32 %v3159, %v3291
        %v3293 = vpop.f32.mrb[0].mxu0
        %v3294 = vpop.f32.mrb[0].mxu0
        %v3295 = vadd.f32 %v3159, %v3294
        %v3296 = vpop.f32.mrb[0].mxu0
        %3297 = vmatprep.mubr.bf16.mxu0 0
        %3298 = vmatmul.mubr.bf16.gmra.mrb[0].mxu0 %v3198
        %v3299 = vpop.f32.mrb[0].mxu0
        %v3300 = vadd.f32 %v3159, %v3299
        %v3301 = vpop.f32.mrb[0].mxu0
        %v3302 = vpop.f32.mrb[0].mxu0
        %v3303 = vadd.f32 %v3159, %v3302
        %v3304 = vpop.f32.mrb[0].mxu0
        %3305 = vmatprep.mubr.bf16.mxu0 0
        %3306 = vmatmul.mubr.bf16.gmra.mrb[0].mxu0 %v3201
        %v3307 = vpop.f32.mrb[0].mxu0
        %v3308 = vadd.f32 %v3159, %v3307
        %v3309 = vpop.f32.mrb[0].mxu0
        %v3310 = vpop.f32.mrb[0].mxu0
        %v3311 = vadd.f32 %v3159, %v3310
        %v3312 = vpop.f32.mrb[0].mxu0
        %3313 = vmatprep.mubr.bf16.mxu0 0
        %3314 = vmatmul.mubr.bf16.gmra.mrb[0].mxu0 %v3204
        %v3315 = vpop.f32.mrb[0].mxu0
        %v3316 = vadd.f32 %v3159, %v3315
        %v3317 = vpop.f32.mrb[0].mxu0
        %v3318 = vpop.f32.mrb[0].mxu0
        %v3319 = vadd.f32 %v3159, %v3318
        %v3320 = vpop.f32.mrb[0].mxu0
        %3321 = vmatprep.mubr.bf16.mxu0 0
        %3322 = vmatmul.mubr.bf16.gmra.mrb[0].mxu0 %v3207
        %v3323 = vpop.f32.mrb[0].mxu0
        %v3324 = vadd.f32 %v3159, %v3323
        %v3325 = vpop.f32.mrb[0].mxu0
        %v3326 = vpop.f32.mrb[0].mxu0
        %v3327 = vadd.f32 %v3159, %v3326
        %v3328 = vpop.f32.mrb[0].mxu0
        %3329 = vmatprep.mubr.bf16.mxu0 0
        %3330 = vmatmul.mubr.bf16.gmra.mrb[0].mxu0 %v3210
        %v3331 = vpop.f32.mrb[0].mxu0
        %v3332 = vadd.f32 %v3159, %v3331
        %v3333 = vpop.f32.mrb[0].mxu0
        %v3334 = vpop.f32.mrb[0].mxu0
        %v3335 = vadd.f32 %v3159, %v3334
        %v3336 = vpop.f32.mrb[0].mxu0
        %3337 = vmatprep.mubr.bf16.mxu0 0
        %3338 = vmatmul.mubr.bf16.gmra.mrb[0].mxu0 %v3213
        %v3339 = vpop.f32.mrb[0].mxu0
        %v3340 = vadd.f32 %v3159, %v3339
        %v3341 = vpop.f32.mrb[0].mxu0
        %v3342 = vpop.f32.mrb[0].mxu0
        %v3343 = vadd.f32 %v3159, %v3342
        %v3344 = vpop.f32.mrb[0].mxu0
        %3345 = vmatprep.mubr.bf16.mxu0 0
        %3346 = vmatmul.mubr.bf16.gmra.mrb[0].mxu0 %v3216
        %v3347 = vpop.f32.mrb[0].mxu0
        %v3348 = vadd.f32 %v3159, %v3347
        %v3349 = vpop.f32.mrb[0].mxu0
        %v3350 = vpop.f32.mrb[0].mxu0
        %v3351 = vadd.f32 %v3159, %v3350
        %v3352 = vpop.f32.mrb[0].mxu0
        %3353 = vmatprep.mubr.bf16.mxu0 0
        %3354 = vmatmul.mubr.bf16.gmra.mrb[0].mxu0 %v3219
        %v3355 = vpop.f32.mrb[0].mxu0
        %v3356 = vadd.f32 %v3159, %v3355
        %v3357 = vpop.f32.mrb[0].mxu0
        %v3358 = vpop.f32.mrb[0].mxu0
        %v3359 = vadd.f32 %v3159, %v3358
        %v3360 = vpop.f32.mrb[0].mxu0
        %3361 = vmatprep.mubr.bf16.mxu0 0
        %3362 = vmatmul.mubr.bf16.gmra.mrb[0].mxu0 %v3222
        %v3363 = vpop.f32.mrb[0].mxu0
        %v3364 = vadd.f32 %v3159, %v3363
        %v3365 = vpop.f32.mrb[0].mxu0
        %v3366 = vpop.f32.mrb[0].mxu0
        %v3367 = vadd.f32 %v3159, %v3366
        %v3368 = vpop.f32.mrb[0].mxu0
        %3369 = vmatprep.mubr.bf16.mxu0 0
        %3370 = vmatmul.mubr.bf16.gmra.mrb[0].mxu0 %v3225
        %v3371 = vpop.f32.mrb[0].mxu0
        %v3372 = vadd.f32 %v3159, %v3371
        %v3373 = vpop.f32.mrb[0].mxu0
        %v3374 = vpop.f32.mrb[0].mxu0
        %v3375 = vadd.f32 %v3159, %v3374
        %v3376 = vpop.f32.mrb[0].mxu0
        %3377 = vmatprep.mubr.bf16.mxu0 0
        %3378 = vmatmul.mubr.bf16.gmra.mrb[0].mxu0 %v3228
        %v3379 = vpop.f32.mrb[0].mxu0
        %v3380 = vadd.f32 %v3159, %v3379
        %v3381 = vpop.f32.mrb[0].mxu0
        %v3382 = vpop.f32.mrb[0].mxu0
        %v3383 = vadd.f32 %v3159, %v3382
        %v3384 = vpop.f32.mrb[0].mxu0
        %3385 = vmatprep.mubr.bf16.mxu0 0
        %3386 = vmatmul.mubr.bf16.gmra.mrb[0].mxu0 %v3231
        %v3387 = vpop.f32.mrb[0].mxu0
        %v3388 = vadd.f32 %v3159, %v3387
        %v3389 = vpop.f32.mrb[0].mxu0
        %v3390 = vpop.f32.mrb[0].mxu0
        %v3391 = vadd.f32 %v3159, %v3390
        %v3392 = vpop.f32.mrb[0].mxu0
        %3393 = vdwg.mxu0
        %vm3394 = vcmp.gt.f32.partialorder %v3268, 0.0
        %vm3395 = vcmp.gt.f32.partialorder %v3271, 0.0
        %vm3396 = vcmp.gt.f32.partialorder %v3276, 0.0
        %vm3397 = vcmp.gt.f32.partialorder %v3279, 0.0
        %vm3398 = vcmp.gt.f32.partialorder %v3284, 0.0
        %vm3399 = vcmp.gt.f32.partialorder %v3287, 0.0
        %vm3400 = vcmp.gt.f32.partialorder %v3292, 0.0
        %vm3401 = vcmp.gt.f32.partialorder %v3295, 0.0
        %vm3402 = vcmp.gt.f32.partialorder %v3300, 0.0
        %vm3403 = vcmp.gt.f32.partialorder %v3303, 0.0
        %vm3404 = vcmp.gt.f32.partialorder %v3308, 0.0
        %vm3405 = vcmp.gt.f32.partialorder %v3311, 0.0
        %vm3406 = vcmp.gt.f32.partialorder %v3316, 0.0
        %vm3407 = vcmp.gt.f32.partialorder %v3319, 0.0
        %vm3408 = vcmp.gt.f32.partialorder %v3324, 0.0
        %vm3409 = vcmp.gt.f32.partialorder %v3327, 0.0
        %vm3410 = vcmp.gt.f32.partialorder %v3332, 0.0
        %vm3411 = vcmp.gt.f32.partialorder %v3335, 0.0
        %vm3412 = vcmp.gt.f32.partialorder %v3340, 0.0
        %vm3413 = vcmp.gt.f32.partialorder %v3343, 0.0
        %vm3414 = vcmp.gt.f32.partialorder %v3348, 0.0
        %vm3415 = vcmp.gt.f32.partialorder %v3351, 0.0
        %vm3416 = vcmp.gt.f32.partialorder %v3356, 0.0
        %vm3417 = vcmp.gt.f32.partialorder %v3359, 0.0
        %vm3418 = vcmp.gt.f32.partialorder %v3364, 0.0
        %vm3419 = vcmp.gt.f32.partialorder %v3367, 0.0
        %vm3420 = vcmp.gt.f32.partialorder %v3372, 0.0
        %vm3421 = vcmp.gt.f32.partialorder %v3375, 0.0
        %vm3422 = vcmp.gt.f32.partialorder %v3380, 0.0
        %vm3423 = vcmp.gt.f32.partialorder %v3383, 0.0
        %vm3424 = vcmp.gt.f32.partialorder %v3388, 0.0
        %vm3425 = vcmp.gt.f32.partialorder %v3391, 0.0
        %v3426 = vmul.f32 %v3268, 0.01
        %v3427 = vmul.f32 %v3271, 0.01
        %v3428 = vmul.f32 %v3276, 0.01
        %v3429 = vmul.f32 %v3279, 0.01
        %v3430 = vmul.f32 %v3284, 0.01
        %v3431 = vmul.f32 %v3287, 0.01
        %v3432 = vmul.f32 %v3292, 0.01
        %v3433 = vmul.f32 %v3295, 0.01
        %v3434 = vmul.f32 %v3300, 0.01
        %v3435 = vmul.f32 %v3303, 0.01
        %v3436 = vmul.f32 %v3308, 0.01
        %v3437 = vmul.f32 %v3311, 0.01
        %v3438 = vmul.f32 %v3316, 0.01
        %v3439 = vmul.f32 %v3319, 0.01
        %v3440 = vmul.f32 %v3324, 0.01
        %v3441 = vmul.f32 %v3327, 0.01
        %v3442 = vmul.f32 %v3332, 0.01
        %v3443 = vmul.f32 %v3335, 0.01
        %v3444 = vmul.f32 %v3340, 0.01
        %v3445 = vmul.f32 %v3343, 0.01
        %v3446 = vmul.f32 %v3348, 0.01
        %v3447 = vmul.f32 %v3351, 0.01
        %v3448 = vmul.f32 %v3356, 0.01
        %v3449 = vmul.f32 %v3359, 0.01
        %v3450 = vmul.f32 %v3364, 0.01
        %v3451 = vmul.f32 %v3367, 0.01
        %v3452 = vmul.f32 %v3372, 0.01
        %v3453 = vmul.f32 %v3375, 0.01
        %v3454 = vmul.f32 %v3380, 0.01
        %v3455 = vmul.f32 %v3383, 0.01
        %v3456 = vmul.f32 %v3388, 0.01
        %v3457 = vmul.f32 %v3391, 0.01
        %v3458 = vsel %vm3394, %v3268, %v3426
        %v3459 = vsel %vm3395, %v3271, %v3427
        %v3460 = vsel %vm3396, %v3276, %v3428
        %v3461 = vsel %vm3397, %v3279, %v3429
        %v3462 = vsel %vm3398, %v3284, %v3430
        %v3463 = vsel %vm3399, %v3287, %v3431
        %v3464 = vsel %vm3400, %v3292, %v3432
        %v3465 = vsel %vm3401, %v3295, %v3433
        %v3466 = vsel %vm3402, %v3300, %v3434
        %v3467 = vsel %vm3403, %v3303, %v3435
        %v3468 = vsel %vm3404, %v3308, %v3436
        %v3469 = vsel %vm3405, %v3311, %v3437
        %v3470 = vsel %vm3406, %v3316, %v3438
        %v3471 = vsel %vm3407, %v3319, %v3439
        %v3472 = vsel %vm3408, %v3324, %v3440
        %v3473 = vsel %vm3409, %v3327, %v3441
        %v3474 = vsel %vm3410, %v3332, %v3442
        %v3475 = vsel %vm3411, %v3335, %v3443
        %v3476 = vsel %vm3412, %v3340, %v3444
        %v3477 = vsel %vm3413, %v3343, %v3445
        %v3478 = vsel %vm3414, %v3348, %v3446
        %v3479 = vsel %vm3415, %v3351, %v3447
        %v3480 = vsel %vm3416, %v3356, %v3448
        %v3481 = vsel %vm3417, %v3359, %v3449
        %v3482 = vsel %vm3418, %v3364, %v3450
        %v3483 = vsel %vm3419, %v3367, %v3451
        %v3484 = vsel %vm3420, %v3372, %v3452
        %v3485 = vsel %vm3421, %v3375, %v3453
        %v3486 = vsel %vm3422, %v3380, %v3454
        %v3487 = vsel %vm3423, %v3383, %v3455
        %v3488 = vsel %vm3424, %v3388, %v3456
        %v3489 = vsel %vm3425, %v3391, %v3457
        %3490 = vst [vmem:[%s380] sm:$0xff] %v3458
        %3491 = vst [vmem:[%s380 + $0x8] sm:$0xff] %v3459
        %3492 = vst [vmem:[%s380 + $0x10] sm:$0xff] %v3460
        %3493 = vst [vmem:[%s380 + $0x18] sm:$0xff] %v3461
        %3494 = vst [vmem:[%s380 + $0x20] sm:$0xff] %v3462
        %3495 = vst [vmem:[%s380 + $0x28] sm:$0xff] %v3463
        %3496 = vst [vmem:[%s380 + $0x30] sm:$0xff] %v3464
        %3497 = vst [vmem:[%s380 + $0x38] sm:$0xff] %v3465
        %3498 = vst [vmem:[%s380 + $0x40] sm:$0xff] %v3466
        %3499 = vst [vmem:[%s380 + $0x48] sm:$0xff] %v3467
        %3500 = vst [vmem:[%s380 + $0x50] sm:$0xff] %v3468
        %3501 = vst [vmem:[%s380 + $0x58] sm:$0xff] %v3469
        %3502 = vst [vmem:[%s380 + $0x60] sm:$0xff] %v3470
        %3503 = vst [vmem:[%s380 + $0x68] sm:$0xff] %v3471
        %3504 = vst [vmem:[%s380 + $0x70] sm:$0xff] %v3472
        %3505 = vst [vmem:[%s380 + $0x78] sm:$0xff] %v3473
        %3506 = vst [vmem:[%s380 + $0x80] sm:$0xff] %v3474
        %3507 = vst [vmem:[%s380 + $0x88] sm:$0xff] %v3475
        %3508 = vst [vmem:[%s380 + $0x90] sm:$0xff] %v3476
        %3509 = vst [vmem:[%s380 + $0x98] sm:$0xff] %v3477
        %3510 = vst [vmem:[%s380 + $0xa0] sm:$0xff] %v3478
        %3511 = vst [vmem:[%s380 + $0xa8] sm:$0xff] %v3479
        %3512 = vst [vmem:[%s380 + $0xb0] sm:$0xff] %v3480
        %3513 = vst [vmem:[%s380 + $0xb8] sm:$0xff] %v3481
        %3514 = vst [vmem:[%s380 + $0xc0] sm:$0xff] %v3482
        %3515 = vst [vmem:[%s380 + $0xc8] sm:$0xff] %v3483
        %3516 = vst [vmem:[%s380 + $0xd0] sm:$0xff] %v3484
        %3517 = vst [vmem:[%s380 + $0xd8] sm:$0xff] %v3485
        %3518 = vst [vmem:[%s380 + $0xe0] sm:$0xff] %v3486
        %3519 = vst [vmem:[%s380 + $0xe8] sm:$0xff] %v3487
        %3520 = vst [vmem:[%s380 + $0xf0] sm:$0xff] %v3488
        %3521 = vst [vmem:[%s380 + $0xf8] sm:$0xff] %v3489
        %s3522 = sand.u32 %s269, 1
        %s3523 = scalar_lea.sflag [#allocation3], %s3522
        %s3524 = sand.u32 %s269, 1
        %s3525 = smul.addr %s3524, 256
        %s3526 = scalar_lea.vmem [#allocation2], %s3525
        // Predicated region
        $region65: #{tpu_custom_call.1} parent=63 // pred_check
          %p3527 = pneg %p279
        $region66: #{tpu_custom_call.1} parent=63 // pred_check_branch
          %3529 = sbr.rel (%p3527) target = $region68
        $region67: #{tpu_custom_call.1} parent=63 // pred_region
          %s3530 = smul.u32 32, %s25
          %s3532 = ssub.s32 4096, 4096
          %3533 = vsyncadd %s3523, %s3532
          %s3534 = smul.addr %s3530, 128
          %s3535 = scalar_lea.hbm %s11, %s3534
          %s3536 = sshll.u32 %s3526, 4
          %s3537 = int_to_ptr.vmem [resolvable:$true] %s3536
          %3542 = dma.vmem_to_hbm [thread:$0]  %s3537, 4096, %s3535, %s3523, 128, 128, 8
        $region68: #{tpu_custom_call.1} parent=63 // pred_fallthru
          _
      $region64: #{tpu_custom_call.1} parent=5 // pred_fallthru
        _
      %p3543 = scmp.le.s32.totalorder 2, %s20
      // Predicated region
      $region69: #{tpu_custom_call.1} parent=5 // pred_check
        %p3544 = pneg %p3543
      $region70: #{tpu_custom_call.1} parent=5 // pred_check_branch
        %3546 = sbr.rel (%p3544) target = $region72
      $region71: #{tpu_custom_call.1} parent=5 // pred_region
        %s3547 = ssub.s32 %s20, 2
        // Predicated region
        $region73: #{tpu_custom_call.1} parent=71 // pred_check
          %p3548 = pneg %p285
        $region74: #{tpu_custom_call.1} parent=71 // pred_check_branch
          %3550 = sbr.rel (%p3548) target = $region76
        $region75: #{tpu_custom_call.1} parent=71 // pred_region
          %s3551 = sand.u32 %s270, 1
          %s3552 = scalar_lea.sflag [#allocation3], %s3551
          %s3553 = sand.u32 %s270, 1
          %s3554 = smul.addr %s3553, 256
          %s3555 = scalar_lea.vmem [#allocation2], %s3554
          %3556 = dma.done %s3552, 4096
        $region76: #{tpu_custom_call.1} parent=71 // pred_fallthru
          _
      $region72: #{tpu_custom_call.1} parent=5 // pred_fallthru
        _
    $region6: #{tpu_custom_call.1} parent=1 // loop_footer
      %s24 = sadd.s32 1, %s20
    $region7: #{tpu_custom_call.1} parent=1 // loop_footer_branch
      %19 = sbr.rel target = $region3
    $region8: #{tpu_custom_call.1} parent=1 // loop_exit
      _
    %3557 = vsyncpa [#allocation3], 1
    %s3558 = scalar_lea.sflag [#allocation3], 1
    %3559 = vsyncpa %s3558, 1

</llo_original>
